<compile_context>
chip_gen: v6e
topology: v6e:2x2x1
jax: 0.10.0
libtpu: 0.0.40
codegen_flags: <defaults>
</compile_context>

<pallas_src>
import functools

import jax
import jax.numpy as jnp
from jax.experimental import pallas as pl
from jax.experimental.pallas import tpu as pltpu


# --------------------------------------------------------------------------------------
# Kernel 1: PixelSetAggregationEncoder, gridded over (t, b) token tiles.
# --------------------------------------------------------------------------------------
def psae_kernel(xp_t_ref, xc_ref,
                w1t_ref, b1t_ref, w2t_ref, b2t_ref, wkvt_ref, bkvt_ref,
                w1_ref, b1_ref, w2_ref, b2_ref, wq_ref, bq_ref,
                feat_ref, *, hw):
    f32, bf16 = jnp.float32, jnp.bfloat16

    def dot(a, b):
        # bf16 operands (MXU native on v5e/v6e/v7x), f32 accumulation.
        return jnp.dot(a.astype(bf16), b.astype(bf16), preferred_element_type=f32)

    # ---- pixel path: lane-dense layout (features on sublanes, pixels on lanes) -------
    xp_t = xp_t_ref[...]                                                 # (c, TP)
    h1_t = jnp.maximum(dot(w1t_ref[...], xp_t) + b1t_ref[...], 0.0)      # (32, TP)
    f64_t = jnp.maximum(dot(w2t_ref[...], h1_t) + b2t_ref[...], 0.0)     # (64, TP)
    # Fused key/value projection: single (80, 64) @ (64, TP) matmul, then sublane slices.
    kv_t = jnp.maximum(dot(wkvt_ref[...], f64_t) + bkvt_ref[...], 0.0)   # (80, TP)
    k_t = kv_t[0:16, :]                                                  # (16, TP)
    v_t = kv_t[16:80, :]                                                 # (64, TP)

    # ---- centre-pixel / query path (tokens on sublanes) ------------------------------
    # TODO(synk): centre features are recomputed from the raw centre pixels (1/hw of the
    # pixel work) instead of being gathered from f64_t with an hw-strided lane slice.
    xc = xc_ref[...]                                                     # (TN, c)
    c64 = jnp.maximum(dot(jnp.maximum(dot(xc, w1_ref[...]) + b1_ref[...], 0.0),
                          w2_ref[...]) + b2_ref[...], 0.0)               # (TN, 64)
    q = jnp.maximum(dot(c64, wq_ref[...]) + bq_ref[...], 0.0)            # (TN, 16)

    # ---- block-diagonal pixel-set attention: per-token group softmax -----------------
    tn = q.shape[0]
    tp = k_t.shape[1]
    scores = dot(q, k_t)                                                 # (TN, TP)
    pix = jax.lax.broadcasted_iota(jnp.int32, (tn, tp), 1)
    lo = jax.lax.broadcasted_iota(jnp.int32, (tn, 1), 0) * hw            # group start / token
    in_group = (pix >= lo) & (pix < lo + hw)
    # TODO(synk): reference computes this softmax in fp16; kept in f32 here.
    masked = jnp.where(in_group, scores, -1e30)
    m = jnp.max(masked, axis=1, keepdims=True)
    e = jnp.exp(masked - m)                                              # exactly 0 off-group
    w_sm = e * pl.reciprocal(jnp.sum(e, axis=1, keepdims=True), approx=True)

    # Weighted sum (TN, TP) x (TP, 64), expressed against the lane-dense v_t (64, TP).
    wv = jax.lax.dot_general(w_sm.astype(bf16), v_t.astype(bf16),
                             (((1,), (1,)), ((), ())),
                             preferred_element_type=f32)                 # (TN, 64)
    feat_ref[...] = c64 + wv


# --------------------------------------------------------------------------------------
# Kernel 2: bidirectional multi-layer LSTM + attention-pooling head + final FC.
# --------------------------------------------------------------------------------------
def lstm_head_kernel(x_ref, *refs, seq_len, batch, hidden, num_layers):
    f32, bf16 = jnp.float32, jnp.bfloat16
    T, Bp, H = seq_len, batch, hidden
    H2, H3, H4, H8 = 2 * H, 3 * H, 4 * H, 8 * H

    def dot(a, b):
        return jnp.dot(a.astype(bf16), b.astype(bf16), preferred_element_type=f32)

    it = iter(refs)
    layers = [(next(it), next(it), next(it)) for _ in range(num_layers)]
    wa_ref, ba_ref, wf_ref, bf_ref = next(it), next(it), next(it), next(it)
    pred_ref = next(it)
    gx_ref = next(it)                                     # (T*Bp, 8H) gate-projection scratch
    bufs = ((next(it), next(it)), (next(it), next(it)))   # 2 x (out_fwd, out_bwd), (T*Bp, H)

    # TODO(synk): nn.LSTM inter-layer dropout (p=0.2, train-mode only) not implemented.
    for layer in range(num_layers):
        wih_ref, whh_ref, bias_ref = layers[layer]
        out_f_ref, out_b_ref = bufs[layer % 2]

        if layer == 0:
            x_all = x_ref[...]                                           # (T*Bp, 64)
        else:
            pf_ref, pb_ref = bufs[(layer - 1) % 2]
            x_all = jnp.concatenate([pf_ref[...], pb_ref[...]], axis=1)  # (T*Bp, 2H)

        # One wide fwd+bwd input-projection matmul for the whole layer (K=Din, N=8H),
        # independent of the recurrence; staged in VMEM scratch.
        gx_ref[...] = dot(x_all, wih_ref[...]) + bias_ref[...]           # (T*Bp, 8H)

        whh = whh_ref[...].astype(bf16)                   # (2H, 8H) block-diagonal, cast once

        def step(s, carry):
            h_f, c_f, h_b, c_b = carry
            tb = T - 1 - s
            row_f = pl.multiple_of(s * Bp, 8)
            row_b = pl.multiple_of(tb * Bp, 8)
            # Fused fwd+bwd recurrent matmul: (Bp, 2H) @ (2H, 8H).
            gh = jnp.dot(jnp.concatenate([h_f, h_b], axis=1).astype(bf16), whh,
                         preferred_element_type=f32)                     # (Bp, 8H)
            gx_f = gx_ref[pl.ds(row_f, Bp), :]
            gx_b = gx_ref[pl.ds(row_b, Bp), :]
            gates_f = gh[:, 0:H4] + gx_f[:, 0:H4]
            gates_b = gh[:, H4:H8] + gx_b[:, H4:H8]
            # Packed gate order (i, f, o, g): one sigmoid slice + one tanh slice per dir.
            sf = jax.nn.sigmoid(gates_f[:, 0:H3])
            sb = jax.nn.sigmoid(gates_b[:, 0:H3])
            gf = jnp.tanh(gates_f[:, H3:H4])
            gb = jnp.tanh(gates_b[:, H3:H4])
            c_f = sf[:, H:H2] * c_f + sf[:, 0:H] * gf
            c_b = sb[:, H:H2] * c_b + sb[:, 0:H] * gb
            h_f = sf[:, H2:H3] * jnp.tanh(c_f)
            h_b = sb[:, H2:H3] * jnp.tanh(c_b)
            out_f_ref[pl.ds(row_f, Bp), :] = h_f
            out_b_ref[pl.ds(row_b, Bp), :] = h_b
            return h_f, c_f, h_b, c_b

        zero = jnp.zeros((Bp, H), f32)
        jax.lax.fori_loop(0, T, step, (zero, zero, zero, zero))

    # ---- attention-pooling head + final FC (single wide logits matmul) ---------------
    out_f_ref, out_b_ref = bufs[(num_layers - 1) % 2]
    slab = jnp.concatenate([out_f_ref[...], out_b_ref[...]], axis=1)     # (T*Bp, 2H)
    logits = jnp.maximum(dot(slab, wa_ref[...]) + ba_ref[...], 0.0)      # (T*Bp, 1)
    logits3 = logits.reshape(T, Bp, 1)                                   # aligned (Bp = 8)
    m = jnp.max(logits3, axis=0, keepdims=True)
    e = jnp.exp(logits3 - m)
    wgt = e / jnp.sum(e, axis=0, keepdims=True)                          # softmax over time
    ctx = jnp.sum(wgt * slab.reshape(T, Bp, H2), axis=0)                 # (Bp, 2H)
    pred_ref[...] = dot(ctx, wf_ref[...]) + bf_ref[...]                  # (Bp, C)


# ===================================== wrappers ======================================
def _pick_token_tile(n_tok):
    # 128-token tiles keep the per-tile (TILE_N, TILE_N*hw) score block at a few MB and
    # make the lane-dense pixel-slab block width a multiple of 128.  Fall back to a
    # single full block when the token count does not divide evenly (e.g. tiny demos).
    if n_tok % 128 == 0:
        return 128
    return n_tok


def psae_fused(xp_t, xc, p, hw):
    c, n_pix = xp_t.shape
    n_tok = xc.shape[0]
    assert n_pix == n_tok * hw
    tile_n = _pick_token_tile(n_tok)
    tile_np = tile_n * hw

    weights = (p['w1t'], p['b1t'], p['w2t'], p['b2t'], p['wkvt'], p['bkvt'],
               p['w1'], p['b1'], p['w2'], p['b2'], p['wq'], p['bq'])
    w_specs = [pl.BlockSpec(w.shape, lambda i: (0, 0)) for w in weights]

    return pl.pallas_call(
        functools.partial(psae_kernel, hw=hw),
        out_shape=jax.ShapeDtypeStruct((n_tok, 64), jnp.float32),
        grid=(n_tok // tile_n,),
        in_specs=[pl.BlockSpec((c, tile_np), lambda i: (0, i)),      # lane-dense pixel slab
                  pl.BlockSpec((tile_n, c), lambda i: (i, 0))] + w_specs,
        out_specs=pl.BlockSpec((tile_n, 64), lambda i: (i, 0)),
        compiler_params=pltpu.CompilerParams(
            dimension_semantics=("parallel",),                       # megacore on v7x
            vmem_limit_bytes=48 * 1024 * 1024),
    )(xp_t, xc, *weights)


def lstm_head_fused(feat_flat, p, seq_len, batch):
    T, B = seq_len, batch
    H = p['lstm'][0][1].shape[0] // 2
    num_layers = len(p['lstm'])
    C = p['wf'].shape[1]
    # Pad batch to one full sublane tile: the recurrence / attention head are per-batch-
    # row independent, and Bp = 8 makes every scratch slice and reshape (8,128)-aligned.
    Bp = ((B + 7) // 8) * 8
    x3 = feat_flat.reshape(T, B, 64)
    if Bp != B:
        x3 = jnp.pad(x3, ((0, 0), (0, Bp - B), (0, 0)))
    x_flat = x3.reshape(T * Bp, 64)

    flat_w = []
    for (wih_p, whh_p, bias_p) in p['lstm']:
        flat_w += [wih_p, whh_p, bias_p]

    pred = pl.pallas_call(
        functools.partial(lstm_head_kernel, seq_len=T, batch=Bp, hidden=H,
                          num_layers=num_layers),
        out_shape=jax.ShapeDtypeStruct((Bp, C), jnp.float32),
        scratch_shapes=[pltpu.VMEM((T * Bp, 8 * H), jnp.float32),    # fwd+bwd gate proj
                        pltpu.VMEM((T * Bp, H), jnp.float32),        # layer outs fwd (ping)
                        pltpu.VMEM((T * Bp, H), jnp.float32),        # layer outs bwd (ping)
                        pltpu.VMEM((T * Bp, H), jnp.float32),        # layer outs fwd (pong)
                        pltpu.VMEM((T * Bp, H), jnp.float32)],       # layer outs bwd (pong)
        compiler_params=pltpu.CompilerParams(vmem_limit_bytes=32 * 1024 * 1024),
    )(x_flat, *flat_w, p['wa'], p['ba'], p['wf'], p['bf'])
    return pred[:B]


@jax.jit
def pstin_forward(x, params):
    b, t, c, h, w = x.shape
    hw = h * w
    # Pixel slab, huge axis on lanes: (c, NP) with NP = t*b*h*w, tokens (t, b)-major and
    # each token's hw pixels contiguous along the lane axis.
    xp_t = jnp.transpose(x, (2, 1, 0, 3, 4)).reshape(c, t * b * hw)
    # Centre-pixel rows (reference hard-codes spatial index (2, 2)), token (t, b)-major.
    xc = jnp.transpose(x[:, :, :, 2, 2], (1, 0, 2)).reshape(t * b, c)

    feat_flat = psae_fused(xp_t, xc, params, hw)          # (t*b, 64)
    pred = lstm_head_fused(feat_flat, params, t, b)       # (b, num_classes)
    feat = feat_flat.reshape(t, b, 64).transpose(1, 0, 2)  # (b, t, 64)
    return {'prediction': pred, 'feat': feat}


# ===================================== params ========================================
def init_params(key, in_channels, hidden_size, num_layers, num_classes):
    keys = iter(jax.random.split(key, 128))
    f32 = jnp.float32

    def lin(kin, kout):
        return (0.1 * jax.random.normal(next(keys), (kin, kout), f32),
                0.1 * jax.random.normal(next(keys), (1, kout), f32))

    p = {}
    # PSAE weights (standard orientation for the centre/query path).
    w1, b1 = lin(in_channels, 32)
    w2, b2 = lin(32, 64)
    wq, bq = lin(64, 16)
    wk, bk = lin(64, 16)
    wv, bv = lin(64, 64)
    p.update(w1=w1, b1=b1, w2=w2, b2=b2, wq=wq, bq=bq)
    # Lane-dense (transposed) copies for the pixel path + fused K/V projection weight.
    p['w1t'], p['b1t'] = w1.T, b1.T
    p['w2t'], p['b2t'] = w2.T, b2.T
    p['wkvt'] = jnp.concatenate([wk.T, wv.T], axis=0)                 # (80, 64)
    p['bkvt'] = jnp.concatenate([bk.T, bv.T], axis=0)                 # (80, 1)

    H = hidden_size

    def pack_dir(wih, whh, bias):
        # PyTorch gate column order (i, f, g, o) -> kernel order (i, f, o, g).
        def ro(m):
            return jnp.concatenate(
                [m[:, 0:H], m[:, H:2 * H], m[:, 3 * H:4 * H], m[:, 2 * H:3 * H]], axis=1)
        return ro(wih), ro(whh), ro(bias)

    p['lstm'] = []
    for layer in range(num_layers):
        D = 64 if layer == 0 else 2 * H
        dirs = []
        for _ in range(2):                                            # fwd, bwd
            wih = 0.1 * jax.random.normal(next(keys), (D, 4 * H), f32)
            whh = 0.1 * jax.random.normal(next(keys), (H, 4 * H), f32)
            bih = 0.1 * jax.random.normal(next(keys), (4 * H,), f32)
            bhh = 0.1 * jax.random.normal(next(keys), (4 * H,), f32)
            dirs.append(pack_dir(wih, whh, (bih + bhh).reshape(1, 4 * H)))
        (wih_f, whh_f, b_f), (wih_b, whh_b, b_b) = dirs
        wih_p = jnp.concatenate([wih_f, wih_b], axis=1)               # (D, 8H)
        z = jnp.zeros((H, 4 * H), f32)
        whh_p = jnp.concatenate([jnp.concatenate([whh_f, z], axis=1),
                                 jnp.concatenate([z, whh_b], axis=1)], axis=0)  # (2H, 8H)
        bias_p = jnp.concatenate([b_f, b_b], axis=1)                  # (1, 8H)
        p['lstm'].append((wih_p, whh_p, bias_p))

    p['wa'], p['ba'] = lin(2 * H, 1)                                  # attention head
    p['wf'], p['bf'] = lin(2 * H, num_classes)                        # final FC
    return p


if __name__ == "__main__":
    B, T, C_IN, HH, WW = 2, 8, 4, 5, 5          # x: (b, t, c, h, w); reference uses pixel (2,2)
    HIDDEN, LAYERS, NCLASSES = 32, 2, 10

    key = jax.random.PRNGKey(0)
    kx, kp = jax.random.split(key)
    x = jax.random.normal(kx, (B, T, C_IN, HH, WW), jnp.float32)
    params = init_params(kp, C_IN, HIDDEN, LAYERS, NCLASSES)

    out = pstin_forward(x, params)
    jax.block_until_ready(out)
    assert out['prediction'].shape == (B, NCLASSES)
    assert out['feat'].shape == (B, T, 64)
    print("KERNEL_OK")
</pallas_src>

<mosaic_0001>
module attributes {stable_mosaic.version = 11 : i64} {
  func.func @lstm_head_kernel(%arg0: memref<64x64xf32, #tpu.memory_space<vmem>>, %arg1: memref<64x256xf32, #tpu.memory_space<vmem>>, %arg2: memref<64x256xf32, #tpu.memory_space<vmem>>, %arg3: memref<1x256xf32, #tpu.memory_space<vmem>>, %arg4: memref<64x256xf32, #tpu.memory_space<vmem>>, %arg5: memref<64x256xf32, #tpu.memory_space<vmem>>, %arg6: memref<1x256xf32, #tpu.memory_space<vmem>>, %arg7: memref<64x1xf32, #tpu.memory_space<vmem>>, %arg8: memref<1x1xf32, #tpu.memory_space<vmem>>, %arg9: memref<64x10xf32, #tpu.memory_space<vmem>>, %arg10: memref<1x10xf32, #tpu.memory_space<vmem>>, %arg11: memref<8x10xf32, #tpu.memory_space<vmem>>, %arg12: memref<64x256xf32, #tpu.memory_space<vmem>>, %arg13: memref<64x32xf32, #tpu.memory_space<vmem>>, %arg14: memref<64x32xf32, #tpu.memory_space<vmem>>, %arg15: memref<64x32xf32, #tpu.memory_space<vmem>>, %arg16: memref<64x32xf32, #tpu.memory_space<vmem>>) attributes {dimension_semantics = [], scalar_prefetch = 0 : i64, scratch_operands = 5 : i64, tpu.core_type = #tpu.core_type<tc>} {
    %c0 = arith.constant 0 : index
    %c0_0 = arith.constant 0 : index
    %0 = vector.load %arg0[%c0, %c0_0] : memref<64x64xf32, #tpu.memory_space<vmem>>, vector<64x64xf32>
    %c0_1 = arith.constant 0 : index
    %c0_2 = arith.constant 0 : index
    %1 = vector.load %arg1[%c0_1, %c0_2] : memref<64x256xf32, #tpu.memory_space<vmem>>, vector<64x256xf32>
    %2 = arith.truncf %0 : vector<64x64xf32> to vector<64x64xbf16>
    %3 = arith.truncf %1 : vector<64x256xf32> to vector<64x256xbf16>
    %cst = arith.constant dense<0.000000e+00> : vector<64x256xf32>
    %4 = tpu.matmul %2, %3, %cst {dimension_numbers = #tpu.dot_dimension_numbers<[1], [0], [0], [1], [0, 0, 1, 1], [], []>} : vector<64x64xbf16>, vector<64x256xbf16>, vector<64x256xf32> -> vector<64x256xf32>
    %c0_3 = arith.constant 0 : index
    %c0_4 = arith.constant 0 : index
    %5 = vector.load %arg3[%c0_3, %c0_4] : memref<1x256xf32, #tpu.memory_space<vmem>>, vector<1x256xf32>
    %6 = vector.broadcast %5 : vector<1x256xf32> to vector<64x256xf32>
    %7 = arith.addf %4, %6 : vector<64x256xf32>
    %c0_5 = arith.constant 0 : index
    %c0_6 = arith.constant 0 : index
    %8 = vector.load %arg12[%c0_5, %c0_6] : memref<64x256xf32, #tpu.memory_space<vmem>>, vector<64x256xf32>
    tpu.vector_store %arg12[%c0_5, %c0_6], %7 {strides = array<i32>} : memref<64x256xf32, #tpu.memory_space<vmem>>, vector<64x256xf32>,
    %c0_7 = arith.constant 0 : index
    %c0_8 = arith.constant 0 : index
    %9 = vector.load %arg2[%c0_7, %c0_8] : memref<64x256xf32, #tpu.memory_space<vmem>>, vector<64x256xf32>
    %10 = arith.truncf %9 : vector<64x256xf32> to vector<64x256xbf16>
    %cst_9 = arith.constant 0.000000e+00 : f32
    %11 = vector.broadcast %cst_9 : f32 to vector<8x32xf32>
    %c0_i32 = arith.constant 0 : i32
    %c8_i32 = arith.constant 8 : i32
    %12 = arith.addi %c0_i32, %c8_i32 : i32
    %c1_i32 = arith.constant 1 : i32
    %13:4 = scf.for %arg17 = %c0_i32 to %12 step %c1_i32 iter_args(%arg18 = %11, %arg19 = %11, %arg20 = %11, %arg21 = %11) -> (vector<8x32xf32>, vector<8x32xf32>, vector<8x32xf32>, vector<8x32xf32>)  : i32 {
      %c7_i32 = arith.constant 7 : i32
      %64 = arith.subi %c7_i32, %arg17 : i32
      %c8_i32_49 = arith.constant 8 : i32
      %65 = arith.muli %arg17, %c8_i32_49 : i32
      %66 = tpu.assume_multiple %65, 8 : i32
      %c8_i32_50 = arith.constant 8 : i32
      %67 = arith.muli %64, %c8_i32_50 : i32
      %68 = tpu.assume_multiple %67, 8 : i32
      %69 = tpu.concatenate %arg18, %arg20 in 1 : vector<8x32xf32>, vector<8x32xf32> -> vector<8x64xf32>
      %70 = arith.truncf %69 : vector<8x64xf32> to vector<8x64xbf16>
      %cst_51 = arith.constant dense<0.000000e+00> : vector<8x256xf32>
      %71 = tpu.matmul %70, %10, %cst_51 {dimension_numbers = #tpu.dot_dimension_numbers<[1], [0], [0], [1], [0, 0, 1, 1], [], []>} : vector<8x64xbf16>, vector<64x256xbf16>, vector<8x256xf32> -> vector<8x256xf32>
      %72 = arith.index_cast %66 : i32 to index
      %c0_52 = arith.constant 0 : index
      %73 = vector.load %arg12[%72, %c0_52] : memref<64x256xf32, #tpu.memory_space<vmem>>, vector<8x256xf32>
      %74 = arith.index_cast %68 : i32 to index
      %c0_53 = arith.constant 0 : index
      %75 = vector.load %arg12[%74, %c0_53] : memref<64x256xf32, #tpu.memory_space<vmem>>, vector<8x256xf32>
      %76 = vector.extract_strided_slice %71 {offsets = [0, 0], sizes = [8, 128], strides = [1, 1]} : vector<8x256xf32> to vector<8x128xf32>
      %77 = vector.extract_strided_slice %73 {offsets = [0, 0], sizes = [8, 128], strides = [1, 1]} : vector<8x256xf32> to vector<8x128xf32>
      %78 = arith.addf %76, %77 : vector<8x128xf32>
      %79 = vector.extract_strided_slice %71 {offsets = [0, 128], sizes = [8, 128], strides = [1, 1]} : vector<8x256xf32> to vector<8x128xf32>
      %80 = vector.extract_strided_slice %75 {offsets = [0, 128], sizes = [8, 128], strides = [1, 1]} : vector<8x256xf32> to vector<8x128xf32>
      %81 = arith.addf %79, %80 : vector<8x128xf32>
      %82 = vector.extract_strided_slice %78 {offsets = [0, 0], sizes = [8, 96], strides = [1, 1]} : vector<8x128xf32> to vector<8x96xf32>
      %83 = arith.negf %82 : vector<8x96xf32>
      %84 = math.exp %83 : vector<8x96xf32>
      %cst_54 = arith.constant 1.000000e+00 : f32
      %85 = vector.broadcast %cst_54 : f32 to vector<8x96xf32>
      %86 = arith.addf %85, %84 : vector<8x96xf32>
      %87 = arith.divf %85, %86 : vector<8x96xf32>
      %88 = vector.extract_strided_slice %81 {offsets = [0, 0], sizes = [8, 96], strides = [1, 1]} : vector<8x128xf32> to vector<8x96xf32>
      %89 = arith.negf %88 : vector<8x96xf32>
      %90 = math.exp %89 : vector<8x96xf32>
      %cst_55 = arith.constant 1.000000e+00 : f32
      %91 = vector.broadcast %cst_55 : f32 to vector<8x96xf32>
      %92 = arith.addf %91, %90 : vector<8x96xf32>
      %93 = arith.divf %91, %92 : vector<8x96xf32>
      %94 = vector.extract_strided_slice %78 {offsets = [0, 96], sizes = [8, 32], strides = [1, 1]} : vector<8x128xf32> to vector<8x32xf32>
      %95 = math.tanh %94 : vector<8x32xf32>
      %96 = vector.extract_strided_slice %81 {offsets = [0, 96], sizes = [8, 32], strides = [1, 1]} : vector<8x128xf32> to vector<8x32xf32>
      %97 = math.tanh %96 : vector<8x32xf32>
      %98 = vector.extract_strided_slice %87 {offsets = [0, 32], sizes = [8, 32], strides = [1, 1]} : vector<8x96xf32> to vector<8x32xf32>
      %99 = arith.mulf %98, %arg19 : vector<8x32xf32>
      %100 = vector.extract_strided_slice %87 {offsets = [0, 0], sizes = [8, 32], strides = [1, 1]} : vector<8x96xf32> to vector<8x32xf32>
      %101 = arith.mulf %100, %95 : vector<8x32xf32>
      %102 = arith.addf %99, %101 : vector<8x32xf32>
      %103 = vector.extract_strided_slice %93 {offsets = [0, 32], sizes = [8, 32], strides = [1, 1]} : vector<8x96xf32> to vector<8x32xf32>
      %104 = arith.mulf %103, %arg21 : vector<8x32xf32>
      %105 = vector.extract_strided_slice %93 {offsets = [0, 0], sizes = [8, 32], strides = [1, 1]} : vector<8x96xf32> to vector<8x32xf32>
      %106 = arith.mulf %105, %97 : vector<8x32xf32>
      %107 = arith.addf %104, %106 : vector<8x32xf32>
      %108 = vector.extract_strided_slice %87 {offsets = [0, 64], sizes = [8, 32], strides = [1, 1]} : vector<8x96xf32> to vector<8x32xf32>
      %109 = math.tanh %102 : vector<8x32xf32>
      %110 = arith.mulf %108, %109 : vector<8x32xf32>
      %111 = vector.extract_strided_slice %93 {offsets = [0, 64], sizes = [8, 32], strides = [1, 1]} : vector<8x96xf32> to vector<8x32xf32>
      %112 = math.tanh %107 : vector<8x32xf32>
      %113 = arith.mulf %111, %112 : vector<8x32xf32>
      %114 = arith.index_cast %66 : i32 to index
      %c0_56 = arith.constant 0 : index
      %115 = vector.load %arg13[%114, %c0_56] : memref<64x32xf32, #tpu.memory_space<vmem>>, vector<8x32xf32>
      tpu.vector_store %arg13[%114, %c0_56], %110 {strides = array<i32>} : memref<64x32xf32, #tpu.memory_space<vmem>>, vector<8x32xf32>,
      %116 = arith.index_cast %68 : i32 to index
      %c0_57 = arith.constant 0 : index
      %117 = vector.load %arg14[%116, %c0_57] : memref<64x32xf32, #tpu.memory_space<vmem>>, vector<8x32xf32>
      tpu.vector_store %arg14[%116, %c0_57], %113 {strides = array<i32>} : memref<64x32xf32, #tpu.memory_space<vmem>>, vector<8x32xf32>,
      scf.yield %110, %102, %113, %107 : vector<8x32xf32>, vector<8x32xf32>, vector<8x32xf32>, vector<8x32xf32>
    }
    %c8_i32_10 = arith.constant 8 : i32
    %c0_11 = arith.constant 0 : index
    %c0_12 = arith.constant 0 : index
    %14 = vector.load %arg13[%c0_11, %c0_12] : memref<64x32xf32, #tpu.memory_space<vmem>>, vector<64x32xf32>
    %c0_13 = arith.constant 0 : index
    %c0_14 = arith.constant 0 : index
    %15 = vector.load %arg14[%c0_13, %c0_14] : memref<64x32xf32, #tpu.memory_space<vmem>>, vector<64x32xf32>
    %16 = tpu.concatenate %14, %15 in 1 : vector<64x32xf32>, vector<64x32xf32> -> vector<64x64xf32>
    %c0_15 = arith.constant 0 : index
    %c0_16 = arith.constant 0 : index
    %17 = vector.load %arg4[%c0_15, %c0_16] : memref<64x256xf32, #tpu.memory_space<vmem>>, vector<64x256xf32>
    %18 = arith.truncf %16 : vector<64x64xf32> to vector<64x64xbf16>
    %19 = arith.truncf %17 : vector<64x256xf32> to vector<64x256xbf16>
    %cst_17 = arith.constant dense<0.000000e+00> : vector<64x256xf32>
    %20 = tpu.matmul %18, %19, %cst_17 {dimension_numbers = #tpu.dot_dimension_numbers<[1], [0], [0], [1], [0, 0, 1, 1], [], []>} : vector<64x64xbf16>, vector<64x256xbf16>, vector<64x256xf32> -> vector<64x256xf32>
    %c0_18 = arith.constant 0 : index
    %c0_19 = arith.constant 0 : index
    %21 = vector.load %arg6[%c0_18, %c0_19] : memref<1x256xf32, #tpu.memory_space<vmem>>, vector<1x256xf32>
    %22 = vector.broadcast %21 : vector<1x256xf32> to vector<64x256xf32>
    %23 = arith.addf %20, %22 : vector<64x256xf32>
    %c0_20 = arith.constant 0 : index
    %c0_21 = arith.constant 0 : index
    %24 = vector.load %arg12[%c0_20, %c0_21] : memref<64x256xf32, #tpu.memory_space<vmem>>, vector<64x256xf32>
    tpu.vector_store %arg12[%c0_20, %c0_21], %23 {strides = array<i32>} : memref<64x256xf32, #tpu.memory_space<vmem>>, vector<64x256xf32>,
    %c0_22 = arith.constant 0 : index
    %c0_23 = arith.constant 0 : index
    %25 = vector.load %arg5[%c0_22, %c0_23] : memref<64x256xf32, #tpu.memory_space<vmem>>, vector<64x256xf32>
    %26 = arith.truncf %25 : vector<64x256xf32> to vector<64x256xbf16>
    %cst_24 = arith.constant 0.000000e+00 : f32
    %27 = vector.broadcast %cst_24 : f32 to vector<8x32xf32>
    %c0_i32_25 = arith.constant 0 : i32
    %c8_i32_26 = arith.constant 8 : i32
    %28 = arith.addi %c0_i32_25, %c8_i32_26 : i32
    %c1_i32_27 = arith.constant 1 : i32
    %29:4 = scf.for %arg17 = %c0_i32_25 to %28 step %c1_i32_27 iter_args(%arg18 = %27, %arg19 = %27, %arg20 = %27, %arg21 = %27) -> (vector<8x32xf32>, vector<8x32xf32>, vector<8x32xf32>, vector<8x32xf32>)  : i32 {
      %c7_i32 = arith.constant 7 : i32
      %64 = arith.subi %c7_i32, %arg17 : i32
      %c8_i32_49 = arith.constant 8 : i32
      %65 = arith.muli %arg17, %c8_i32_49 : i32
      %66 = tpu.assume_multiple %65, 8 : i32
      %c8_i32_50 = arith.constant 8 : i32
      %67 = arith.muli %64, %c8_i32_50 : i32
      %68 = tpu.assume_multiple %67, 8 : i32
      %69 = tpu.concatenate %arg18, %arg20 in 1 : vector<8x32xf32>, vector<8x32xf32> -> vector<8x64xf32>
      %70 = arith.truncf %69 : vector<8x64xf32> to vector<8x64xbf16>
      %cst_51 = arith.constant dense<0.000000e+00> : vector<8x256xf32>
      %71 = tpu.matmul %70, %26, %cst_51 {dimension_numbers = #tpu.dot_dimension_numbers<[1], [0], [0], [1], [0, 0, 1, 1], [], []>} : vector<8x64xbf16>, vector<64x256xbf16>, vector<8x256xf32> -> vector<8x256xf32>
      %72 = arith.index_cast %66 : i32 to index
      %c0_52 = arith.constant 0 : index
      %73 = vector.load %arg12[%72, %c0_52] : memref<64x256xf32, #tpu.memory_space<vmem>>, vector<8x256xf32>
      %74 = arith.index_cast %68 : i32 to index
      %c0_53 = arith.constant 0 : index
      %75 = vector.load %arg12[%74, %c0_53] : memref<64x256xf32, #tpu.memory_space<vmem>>, vector<8x256xf32>
      %76 = vector.extract_strided_slice %71 {offsets = [0, 0], sizes = [8, 128], strides = [1, 1]} : vector<8x256xf32> to vector<8x128xf32>
      %77 = vector.extract_strided_slice %73 {offsets = [0, 0], sizes = [8, 128], strides = [1, 1]} : vector<8x256xf32> to vector<8x128xf32>
      %78 = arith.addf %76, %77 : vector<8x128xf32>
      %79 = vector.extract_strided_slice %71 {offsets = [0, 128], sizes = [8, 128], strides = [1, 1]} : vector<8x256xf32> to vector<8x128xf32>
      %80 = vector.extract_strided_slice %75 {offsets = [0, 128], sizes = [8, 128], strides = [1, 1]} : vector<8x256xf32> to vector<8x128xf32>
      %81 = arith.addf %79, %80 : vector<8x128xf32>
      %82 = vector.extract_strided_slice %78 {offsets = [0, 0], sizes = [8, 96], strides = [1, 1]} : vector<8x128xf32> to vector<8x96xf32>
      %83 = arith.negf %82 : vector<8x96xf32>
      %84 = math.exp %83 : vector<8x96xf32>
      %cst_54 = arith.constant 1.000000e+00 : f32
      %85 = vector.broadcast %cst_54 : f32 to vector<8x96xf32>
      %86 = arith.addf %85, %84 : vector<8x96xf32>
      %87 = arith.divf %85, %86 : vector<8x96xf32>
      %88 = vector.extract_strided_slice %81 {offsets = [0, 0], sizes = [8, 96], strides = [1, 1]} : vector<8x128xf32> to vector<8x96xf32>
      %89 = arith.negf %88 : vector<8x96xf32>
      %90 = math.exp %89 : vector<8x96xf32>
      %cst_55 = arith.constant 1.000000e+00 : f32
      %91 = vector.broadcast %cst_55 : f32 to vector<8x96xf32>
      %92 = arith.addf %91, %90 : vector<8x96xf32>
      %93 = arith.divf %91, %92 : vector<8x96xf32>
      %94 = vector.extract_strided_slice %78 {offsets = [0, 96], sizes = [8, 32], strides = [1, 1]} : vector<8x128xf32> to vector<8x32xf32>
      %95 = math.tanh %94 : vector<8x32xf32>
      %96 = vector.extract_strided_slice %81 {offsets = [0, 96], sizes = [8, 32], strides = [1, 1]} : vector<8x128xf32> to vector<8x32xf32>
      %97 = math.tanh %96 : vector<8x32xf32>
      %98 = vector.extract_strided_slice %87 {offsets = [0, 32], sizes = [8, 32], strides = [1, 1]} : vector<8x96xf32> to vector<8x32xf32>
      %99 = arith.mulf %98, %arg19 : vector<8x32xf32>
      %100 = vector.extract_strided_slice %87 {offsets = [0, 0], sizes = [8, 32], strides = [1, 1]} : vector<8x96xf32> to vector<8x32xf32>
      %101 = arith.mulf %100, %95 : vector<8x32xf32>
      %102 = arith.addf %99, %101 : vector<8x32xf32>
      %103 = vector.extract_strided_slice %93 {offsets = [0, 32], sizes = [8, 32], strides = [1, 1]} : vector<8x96xf32> to vector<8x32xf32>
      %104 = arith.mulf %103, %arg21 : vector<8x32xf32>
      %105 = vector.extract_strided_slice %93 {offsets = [0, 0], sizes = [8, 32], strides = [1, 1]} : vector<8x96xf32> to vector<8x32xf32>
      %106 = arith.mulf %105, %97 : vector<8x32xf32>
      %107 = arith.addf %104, %106 : vector<8x32xf32>
      %108 = vector.extract_strided_slice %87 {offsets = [0, 64], sizes = [8, 32], strides = [1, 1]} : vector<8x96xf32> to vector<8x32xf32>
      %109 = math.tanh %102 : vector<8x32xf32>
      %110 = arith.mulf %108, %109 : vector<8x32xf32>
      %111 = vector.extract_strided_slice %93 {offsets = [0, 64], sizes = [8, 32], strides = [1, 1]} : vector<8x96xf32> to vector<8x32xf32>
      %112 = math.tanh %107 : vector<8x32xf32>
      %113 = arith.mulf %111, %112 : vector<8x32xf32>
      %114 = arith.index_cast %66 : i32 to index
      %c0_56 = arith.constant 0 : index
      %115 = vector.load %arg15[%114, %c0_56] : memref<64x32xf32, #tpu.memory_space<vmem>>, vector<8x32xf32>
      tpu.vector_store %arg15[%114, %c0_56], %110 {strides = array<i32>} : memref<64x32xf32, #tpu.memory_space<vmem>>, vector<8x32xf32>,
      %116 = arith.index_cast %68 : i32 to index
      %c0_57 = arith.constant 0 : index
      %117 = vector.load %arg16[%116, %c0_57] : memref<64x32xf32, #tpu.memory_space<vmem>>, vector<8x32xf32>
      tpu.vector_store %arg16[%116, %c0_57], %113 {strides = array<i32>} : memref<64x32xf32, #tpu.memory_space<vmem>>, vector<8x32xf32>,
      scf.yield %110, %102, %113, %107 : vector<8x32xf32>, vector<8x32xf32>, vector<8x32xf32>, vector<8x32xf32>
    }
    %c8_i32_28 = arith.constant 8 : i32
    %c0_29 = arith.constant 0 : index
    %c0_30 = arith.constant 0 : index
    %30 = vector.load %arg15[%c0_29, %c0_30] : memref<64x32xf32, #tpu.memory_space<vmem>>, vector<64x32xf32>
    %c0_31 = arith.constant 0 : index
    %c0_32 = arith.constant 0 : index
    %31 = vector.load %arg16[%c0_31, %c0_32] : memref<64x32xf32, #tpu.memory_space<vmem>>, vector<64x32xf32>
    %32 = tpu.concatenate %30, %31 in 1 : vector<64x32xf32>, vector<64x32xf32> -> vector<64x64xf32>
    %c0_33 = arith.constant 0 : index
    %c0_34 = arith.constant 0 : index
    %33 = vector.load %arg7[%c0_33, %c0_34] : memref<64x1xf32, #tpu.memory_space<vmem>>, vector<64x1xf32>
    %34 = arith.truncf %32 : vector<64x64xf32> to vector<64x64xbf16>
    %35 = arith.truncf %33 : vector<64x1xf32> to vector<64x1xbf16>
    %cst_35 = arith.constant dense<0.000000e+00> : vector<64x1xf32>
    %36 = tpu.matmul %34, %35, %cst_35 {dimension_numbers = #tpu.dot_dimension_numbers<[1], [0], [0], [1], [0, 0, 1, 1], [], []>} : vector<64x64xbf16>, vector<64x1xbf16>, vector<64x1xf32> -> vector<64x1xf32>
    %c0_36 = arith.constant 0 : index
    %c0_37 = arith.constant 0 : index
    %37 = vector.load %arg8[%c0_36, %c0_37] : memref<1x1xf32, #tpu.memory_space<vmem>>, vector<1x1xf32>
    %38 = vector.broadcast %37 : vector<1x1xf32> to vector<64x1xf32>
    %39 = arith.addf %36, %38 : vector<64x1xf32>
    %cst_38 = arith.constant 0.000000e+00 : f32
    %40 = vector.broadcast %cst_38 : f32 to vector<64x1xf32>
    %41 = arith.maximumf %39, %40 : vector<64x1xf32>
    %42 = vector.shape_cast %41 : vector<64x1xf32> to vector<8x8x1xf32>
    %cst_39 = arith.constant dense<0xFF800000> : vector<8x1xf32>
    %43 = vector.multi_reduction <maximumf>, %42, %cst_39 [0] : vector<8x8x1xf32> to vector<8x1xf32>
    %44 = vector.shape_cast %43 : vector<8x1xf32> to vector<1x8x1xf32>
    %45 = vector.broadcast %44 : vector<1x8x1xf32> to vector<8x8x1xf32>
    %46 = arith.subf %42, %45 : vector<8x8x1xf32>
    %47 = math.exp %46 : vector<8x8x1xf32>
    %cst_40 = arith.constant dense<0.000000e+00> : vector<8x1xf32>
    %48 = vector.multi_reduction <add>, %47, %cst_40 [0] : vector<8x8x1xf32> to vector<8x1xf32>
    %49 = vector.shape_cast %48 : vector<8x1xf32> to vector<1x8x1xf32>
    %50 = vector.broadcast %49 : vector<1x8x1xf32> to vector<8x8x1xf32>
    %51 = arith.divf %47, %50 : vector<8x8x1xf32>
    %52 = vector.shape_cast %32 : vector<64x64xf32> to vector<8x8x64xf32>
    %53 = vector.broadcast %51 : vector<8x8x1xf32> to vector<8x8x64xf32>
    %54 = arith.mulf %53, %52 : vector<8x8x64xf32>
    %cst_41 = arith.constant dense<0.000000e+00> : vector<8x64xf32>
    %55 = vector.multi_reduction <add>, %54, %cst_41 [0] : vector<8x8x64xf32> to vector<8x64xf32>
    %c0_42 = arith.constant 0 : index
    %c0_43 = arith.constant 0 : index
    %56 = vector.load %arg9[%c0_42, %c0_43] : memref<64x10xf32, #tpu.memory_space<vmem>>, vector<64x10xf32>
    %57 = arith.truncf %55 : vector<8x64xf32> to vector<8x64xbf16>
    %58 = arith.truncf %56 : vector<64x10xf32> to vector<64x10xbf16>
    %cst_44 = arith.constant dense<0.000000e+00> : vector<8x10xf32>
    %59 = tpu.matmul %57, %58, %cst_44 {dimension_numbers = #tpu.dot_dimension_numbers<[1], [0], [0], [1], [0, 0, 1, 1], [], []>} : vector<8x64xbf16>, vector<64x10xbf16>, vector<8x10xf32> -> vector<8x10xf32>
    %c0_45 = arith.constant 0 : index
    %c0_46 = arith.constant 0 : index
    %60 = vector.load %arg10[%c0_45, %c0_46] : memref<1x10xf32, #tpu.memory_space<vmem>>, vector<1x10xf32>
    %61 = vector.broadcast %60 : vector<1x10xf32> to vector<8x10xf32>
    %62 = arith.addf %59, %61 : vector<8x10xf32>
    %c0_47 = arith.constant 0 : index
    %c0_48 = arith.constant 0 : index
    %63 = vector.load %arg11[%c0_47, %c0_48] : memref<8x10xf32, #tpu.memory_space<vmem>>, vector<8x10xf32>
    tpu.vector_store %arg11[%c0_47, %c0_48], %62 {strides = array<i32>} : memref<8x10xf32, #tpu.memory_space<vmem>>, vector<8x10xf32>,
    return
  }
}

module attributes {stable_mosaic.version = 11 : i64} {
  func.func @psae_kernel(%arg0: i32, %arg1: memref<4x400xf32, #tpu.memory_space<vmem>>, %arg2: memref<16x4xf32, #tpu.memory_space<vmem>>, %arg3: memref<32x4xf32, #tpu.memory_space<vmem>>, %arg4: memref<32x1xf32, #tpu.memory_space<vmem>>, %arg5: memref<64x32xf32, #tpu.memory_space<vmem>>, %arg6: memref<64x1xf32, #tpu.memory_space<vmem>>, %arg7: memref<80x64xf32, #tpu.memory_space<vmem>>, %arg8: memref<80x1xf32, #tpu.memory_space<vmem>>, %arg9: memref<4x32xf32, #tpu.memory_space<vmem>>, %arg10: memref<1x32xf32, #tpu.memory_space<vmem>>, %arg11: memref<32x64xf32, #tpu.memory_space<vmem>>, %arg12: memref<1x64xf32, #tpu.memory_space<vmem>>, %arg13: memref<64x16xf32, #tpu.memory_space<vmem>>, %arg14: memref<1x16xf32, #tpu.memory_space<vmem>>, %arg15: memref<16x64xf32, #tpu.memory_space<vmem>>) attributes {dimension_semantics = [#tpu.dimension_semantics<parallel>], iteration_bounds = array<i64: 1>, scalar_prefetch = 0 : i64, scratch_operands = 0 : i64, tpu.core_type = #tpu.core_type<tc>, window_params = [{transform_indices = @transform_0, window_bounds = array<i64: 4, 400>}, {transform_indices = @transform_1, window_bounds = array<i64: 16, 4>}, {pipeline_mode = #tpu.pipeline_mode<synchronous>, transform_indices = @transform_2, window_bounds = array<i64: 32, 4>}, {pipeline_mode = #tpu.pipeline_mode<synchronous>, transform_indices = @transform_3, window_bounds = array<i64: 32, 1>}, {pipeline_mode = #tpu.pipeline_mode<synchronous>, transform_indices = @transform_4, window_bounds = array<i64: 64, 32>}, {pipeline_mode = #tpu.pipeline_mode<synchronous>, transform_indices = @transform_5, window_bounds = array<i64: 64, 1>}, {pipeline_mode = #tpu.pipeline_mode<synchronous>, transform_indices = @transform_6, window_bounds = array<i64: 80, 64>}, {pipeline_mode = #tpu.pipeline_mode<synchronous>, transform_indices = @transform_7, window_bounds = array<i64: 80, 1>}, {pipeline_mode = #tpu.pipeline_mode<synchronous>, transform_indices = @transform_8, window_bounds = array<i64: 4, 32>}, {pipeline_mode = #tpu.pipeline_mode<synchronous>, transform_indices = @transform_9, window_bounds = array<i64: 1, 32>}, {pipeline_mode = #tpu.pipeline_mode<synchronous>, transform_indices = @transform_10, window_bounds = array<i64: 32, 64>}, {pipeline_mode = #tpu.pipeline_mode<synchronous>, transform_indices = @transform_11, window_bounds = array<i64: 1, 64>}, {pipeline_mode = #tpu.pipeline_mode<synchronous>, transform_indices = @transform_12, window_bounds = array<i64: 64, 16>}, {pipeline_mode = #tpu.pipeline_mode<synchronous>, transform_indices = @transform_13, window_bounds = array<i64: 1, 16>}, {transform_indices = @transform_14, window_bounds = array<i64: 16, 64>}]} {
    %c0 = arith.constant 0 : index
    %c0_0 = arith.constant 0 : index
    %0 = vector.load %arg1[%c0, %c0_0] : memref<4x400xf32, #tpu.memory_space<vmem>>, vector<4x400xf32>
    %c0_1 = arith.constant 0 : index
    %c0_2 = arith.constant 0 : index
    %1 = vector.load %arg3[%c0_1, %c0_2] : memref<32x4xf32, #tpu.memory_space<vmem>>, vector<32x4xf32>
    %2 = arith.truncf %1 : vector<32x4xf32> to vector<32x4xbf16>
    %3 = arith.truncf %0 : vector<4x400xf32> to vector<4x400xbf16>
    %cst = arith.constant dense<0.000000e+00> : vector<32x400xf32>
    %4 = tpu.matmul %2, %3, %cst {dimension_numbers = #tpu.dot_dimension_numbers<[1], [0], [0], [1], [0, 0, 1, 1], [], []>} : vector<32x4xbf16>, vector<4x400xbf16>, vector<32x400xf32> -> vector<32x400xf32>
    %c0_3 = arith.constant 0 : index
    %c0_4 = arith.constant 0 : index
    %5 = vector.load %arg4[%c0_3, %c0_4] : memref<32x1xf32, #tpu.memory_space<vmem>>, vector<32x1xf32>
    %6 = vector.broadcast %5 : vector<32x1xf32> to vector<32x400xf32>
    %7 = arith.addf %4, %6 : vector<32x400xf32>
    %cst_5 = arith.constant 0.000000e+00 : f32
    %8 = vector.broadcast %cst_5 : f32 to vector<32x400xf32>
    %9 = arith.maximumf %7, %8 : vector<32x400xf32>
    %c0_6 = arith.constant 0 : index
    %c0_7 = arith.constant 0 : index
    %10 = vector.load %arg5[%c0_6, %c0_7] : memref<64x32xf32, #tpu.memory_space<vmem>>, vector<64x32xf32>
    %11 = arith.truncf %10 : vector<64x32xf32> to vector<64x32xbf16>
    %12 = arith.truncf %9 : vector<32x400xf32> to vector<32x400xbf16>
    %cst_8 = arith.constant dense<0.000000e+00> : vector<64x400xf32>
    %13 = tpu.matmul %11, %12, %cst_8 {dimension_numbers = #tpu.dot_dimension_numbers<[1], [0], [0], [1], [0, 0, 1, 1], [], []>} : vector<64x32xbf16>, vector<32x400xbf16>, vector<64x400xf32> -> vector<64x400xf32>
    %c0_9 = arith.constant 0 : index
    %c0_10 = arith.constant 0 : index
    %14 = vector.load %arg6[%c0_9, %c0_10] : memref<64x1xf32, #tpu.memory_space<vmem>>, vector<64x1xf32>
    %15 = vector.broadcast %14 : vector<64x1xf32> to vector<64x400xf32>
    %16 = arith.addf %13, %15 : vector<64x400xf32>
    %cst_11 = arith.constant 0.000000e+00 : f32
    %17 = vector.broadcast %cst_11 : f32 to vector<64x400xf32>
    %18 = arith.maximumf %16, %17 : vector<64x400xf32>
    %c0_12 = arith.constant 0 : index
    %c0_13 = arith.constant 0 : index
    %19 = vector.load %arg7[%c0_12, %c0_13] : memref<80x64xf32, #tpu.memory_space<vmem>>, vector<80x64xf32>
    %20 = arith.truncf %19 : vector<80x64xf32> to vector<80x64xbf16>
    %21 = arith.truncf %18 : vector<64x400xf32> to vector<64x400xbf16>
    %cst_14 = arith.constant dense<0.000000e+00> : vector<80x400xf32>
    %22 = tpu.matmul %20, %21, %cst_14 {dimension_numbers = #tpu.dot_dimension_numbers<[1], [0], [0], [1], [0, 0, 1, 1], [], []>} : vector<80x64xbf16>, vector<64x400xbf16>, vector<80x400xf32> -> vector<80x400xf32>
    %c0_15 = arith.constant 0 : index
    %c0_16 = arith.constant 0 : index
    %23 = vector.load %arg8[%c0_15, %c0_16] : memref<80x1xf32, #tpu.memory_space<vmem>>, vector<80x1xf32>
    %24 = vector.broadcast %23 : vector<80x1xf32> to vector<80x400xf32>
    %25 = arith.addf %22, %24 : vector<80x400xf32>
    %cst_17 = arith.constant 0.000000e+00 : f32
    %26 = vector.broadcast %cst_17 : f32 to vector<80x400xf32>
    %27 = arith.maximumf %25, %26 : vector<80x400xf32>
    %28 = vector.extract_strided_slice %27 {offsets = [0, 0], sizes = [16, 400], strides = [1, 1]} : vector<80x400xf32> to vector<16x400xf32>
    %29 = vector.extract_strided_slice %27 {offsets = [16, 0], sizes = [64, 400], strides = [1, 1]} : vector<80x400xf32> to vector<64x400xf32>
    %c0_18 = arith.constant 0 : index
    %c0_19 = arith.constant 0 : index
    %30 = vector.load %arg2[%c0_18, %c0_19] : memref<16x4xf32, #tpu.memory_space<vmem>>, vector<16x4xf32>
    %c0_20 = arith.constant 0 : index
    %c0_21 = arith.constant 0 : index
    %31 = vector.load %arg9[%c0_20, %c0_21] : memref<4x32xf32, #tpu.memory_space<vmem>>, vector<4x32xf32>
    %32 = arith.truncf %30 : vector<16x4xf32> to vector<16x4xbf16>
    %33 = arith.truncf %31 : vector<4x32xf32> to vector<4x32xbf16>
    %cst_22 = arith.constant dense<0.000000e+00> : vector<16x32xf32>
    %34 = tpu.matmul %32, %33, %cst_22 {dimension_numbers = #tpu.dot_dimension_numbers<[1], [0], [0], [1], [0, 0, 1, 1], [], []>} : vector<16x4xbf16>, vector<4x32xbf16>, vector<16x32xf32> -> vector<16x32xf32>
    %c0_23 = arith.constant 0 : index
    %c0_24 = arith.constant 0 : index
    %35 = vector.load %arg10[%c0_23, %c0_24] : memref<1x32xf32, #tpu.memory_space<vmem>>, vector<1x32xf32>
    %36 = vector.broadcast %35 : vector<1x32xf32> to vector<16x32xf32>
    %37 = arith.addf %34, %36 : vector<16x32xf32>
    %cst_25 = arith.constant 0.000000e+00 : f32
    %38 = vector.broadcast %cst_25 : f32 to vector<16x32xf32>
    %39 = arith.maximumf %37, %38 : vector<16x32xf32>
    %c0_26 = arith.constant 0 : index
    %c0_27 = arith.constant 0 : index
    %40 = vector.load %arg11[%c0_26, %c0_27] : memref<32x64xf32, #tpu.memory_space<vmem>>, vector<32x64xf32>
    %41 = arith.truncf %39 : vector<16x32xf32> to vector<16x32xbf16>
    %42 = arith.truncf %40 : vector<32x64xf32> to vector<32x64xbf16>
    %cst_28 = arith.constant dense<0.000000e+00> : vector<16x64xf32>
    %43 = tpu.matmul %41, %42, %cst_28 {dimension_numbers = #tpu.dot_dimension_numbers<[1], [0], [0], [1], [0, 0, 1, 1], [], []>} : vector<16x32xbf16>, vector<32x64xbf16>, vector<16x64xf32> -> vector<16x64xf32>
    %c0_29 = arith.constant 0 : index
    %c0_30 = arith.constant 0 : index
    %44 = vector.load %arg12[%c0_29, %c0_30] : memref<1x64xf32, #tpu.memory_space<vmem>>, vector<1x64xf32>
    %45 = vector.broadcast %44 : vector<1x64xf32> to vector<16x64xf32>
    %46 = arith.addf %43, %45 : vector<16x64xf32>
    %cst_31 = arith.constant 0.000000e+00 : f32
    %47 = vector.broadcast %cst_31 : f32 to vector<16x64xf32>
    %48 = arith.maximumf %46, %47 : vector<16x64xf32>
    %c0_32 = arith.constant 0 : index
    %c0_33 = arith.constant 0 : index
    %49 = vector.load %arg13[%c0_32, %c0_33] : memref<64x16xf32, #tpu.memory_space<vmem>>, vector<64x16xf32>
    %50 = arith.truncf %48 : vector<16x64xf32> to vector<16x64xbf16>
    %51 = arith.truncf %49 : vector<64x16xf32> to vector<64x16xbf16>
    %cst_34 = arith.constant dense<0.000000e+00> : vector<16x16xf32>
    %52 = tpu.matmul %50, %51, %cst_34 {dimension_numbers = #tpu.dot_dimension_numbers<[1], [0], [0], [1], [0, 0, 1, 1], [], []>} : vector<16x64xbf16>, vector<64x16xbf16>, vector<16x16xf32> -> vector<16x16xf32>
    %c0_35 = arith.constant 0 : index
    %c0_36 = arith.constant 0 : index
    %53 = vector.load %arg14[%c0_35, %c0_36] : memref<1x16xf32, #tpu.memory_space<vmem>>, vector<1x16xf32>
    %54 = vector.broadcast %53 : vector<1x16xf32> to vector<16x16xf32>
    %55 = arith.addf %52, %54 : vector<16x16xf32>
    %cst_37 = arith.constant 0.000000e+00 : f32
    %56 = vector.broadcast %cst_37 : f32 to vector<16x16xf32>
    %57 = arith.maximumf %55, %56 : vector<16x16xf32>
    %58 = arith.truncf %57 : vector<16x16xf32> to vector<16x16xbf16>
    %59 = arith.truncf %28 : vector<16x400xf32> to vector<16x400xbf16>
    %cst_38 = arith.constant dense<0.000000e+00> : vector<16x400xf32>
    %60 = tpu.matmul %58, %59, %cst_38 {dimension_numbers = #tpu.dot_dimension_numbers<[1], [0], [0], [1], [0, 0, 1, 1], [], []>} : vector<16x16xbf16>, vector<16x400xbf16>, vector<16x400xf32> -> vector<16x400xf32>
    %61 = tpu.iota {dimensions = array<i32: 1>} : vector<16x400xi32>
    %62 = tpu.iota {dimensions = array<i32: 0>} : vector<16x1xi32>
    %c25_i32 = arith.constant 25 : i32
    %63 = vector.broadcast %c25_i32 : i32 to vector<16x1xi32>
    %64 = arith.muli %62, %63 : vector<16x1xi32>
    %65 = vector.broadcast %64 : vector<16x1xi32> to vector<16x400xi32>
    %66 = arith.cmpi sge, %61, %65 : vector<16x400xi32>
    %c25_i32_39 = arith.constant 25 : i32
    %67 = vector.broadcast %c25_i32_39 : i32 to vector<16x1xi32>
    %68 = arith.addi %64, %67 : vector<16x1xi32>
    %69 = vector.broadcast %68 : vector<16x1xi32> to vector<16x400xi32>
    %70 = arith.cmpi slt, %61, %69 : vector<16x400xi32>
    %71 = arith.andi %66, %70 : vector<16x400xi1>
    %cst_40 = arith.constant -1.000000e+30 : f32
    %72 = vector.broadcast %cst_40 : f32 to vector<16x400xf32>
    %73 = arith.select %71, %60, %72 : vector<16x400xi1>, vector<16x400xf32>
    %cst_41 = arith.constant dense<0xFF800000> : vector<16xf32>
    %74 = vector.multi_reduction <maximumf>, %73, %cst_41 [1] : vector<16x400xf32> to vector<16xf32>
    %75 = vector.shape_cast %74 : vector<16xf32> to vector<16x1xf32>
    %76 = vector.broadcast %75 : vector<16x1xf32> to vector<16x400xf32>
    %77 = arith.subf %73, %76 : vector<16x400xf32>
    %78 = math.exp %77 : vector<16x400xf32>
    %cst_42 = arith.constant dense<0.000000e+00> : vector<16xf32>
    %79 = vector.multi_reduction <add>, %78, %cst_42 [1] : vector<16x400xf32> to vector<16xf32>
    %80 = vector.shape_cast %79 : vector<16xf32> to vector<16x1xf32>
    %81 = tpu.reciprocal %80 {approx = true} : vector<16x1xf32> -> vector<16x1xf32>
    %82 = vector.broadcast %81 : vector<16x1xf32> to vector<16x400xf32>
    %83 = arith.mulf %78, %82 : vector<16x400xf32>
    %84 = arith.truncf %83 : vector<16x400xf32> to vector<16x400xbf16>
    %85 = arith.truncf %29 : vector<64x400xf32> to vector<64x400xbf16>
    %cst_43 = arith.constant dense<0.000000e+00> : vector<16x64xf32>
    %86 = tpu.matmul %84, %85, %cst_43 {dimension_numbers = #tpu.dot_dimension_numbers<[1], [1], [0], [0], [0, 0, 1, 0], [], []>} : vector<16x400xbf16>, vector<64x400xbf16>, vector<16x64xf32> -> vector<16x64xf32>
    %87 = arith.addf %48, %86 : vector<16x64xf32>
    %c0_44 = arith.constant 0 : index
    %c0_45 = arith.constant 0 : index
    %88 = vector.load %arg15[%c0_44, %c0_45] : memref<16x64xf32, #tpu.memory_space<vmem>>, vector<16x64xf32>
    tpu.vector_store %arg15[%c0_44, %c0_45], %87 {strides = array<i32>} : memref<16x64xf32, #tpu.memory_space<vmem>>, vector<16x64xf32>,
    return
  }
  func.func @transform_0(%arg0: i32) -> (i32, i32) {
    %c0_i32 = arith.constant 0 : i32
    %c0_i32_0 = arith.constant 0 : i32
    return %c0_i32, %arg0 : i32, i32
  }
  func.func @transform_1(%arg0: i32) -> (i32, i32) {
    %c0_i32 = arith.constant 0 : i32
    %c0_i32_0 = arith.constant 0 : i32
    return %arg0, %c0_i32 : i32, i32
  }
  func.func @transform_2(%arg0: i32) -> (i32, i32) {
    %c0_i32 = arith.constant 0 : i32
    %c0_i32_0 = arith.constant 0 : i32
    %c0_i32_1 = arith.constant 0 : i32
    return %c0_i32, %c0_i32_0 : i32, i32
  }
  func.func @transform_3(%arg0: i32) -> (i32, i32) {
    %c0_i32 = arith.constant 0 : i32
    %c0_i32_0 = arith.constant 0 : i32
    %c0_i32_1 = arith.constant 0 : i32
    return %c0_i32, %c0_i32_0 : i32, i32
  }
  func.func @transform_4(%arg0: i32) -> (i32, i32) {
    %c0_i32 = arith.constant 0 : i32
    %c0_i32_0 = arith.constant 0 : i32
    %c0_i32_1 = arith.constant 0 : i32
    return %c0_i32, %c0_i32_0 : i32, i32
  }
  func.func @transform_5(%arg0: i32) -> (i32, i32) {
    %c0_i32 = arith.constant 0 : i32
    %c0_i32_0 = arith.constant 0 : i32
    %c0_i32_1 = arith.constant 0 : i32
    return %c0_i32, %c0_i32_0 : i32, i32
  }
  func.func @transform_6(%arg0: i32) -> (i32, i32) {
    %c0_i32 = arith.constant 0 : i32
    %c0_i32_0 = arith.constant 0 : i32
    %c0_i32_1 = arith.constant 0 : i32
    return %c0_i32, %c0_i32_0 : i32, i32
  }
  func.func @transform_7(%arg0: i32) -> (i32, i32) {
    %c0_i32 = arith.constant 0 : i32
    %c0_i32_0 = arith.constant 0 : i32
    %c0_i32_1 = arith.constant 0 : i32
    return %c0_i32, %c0_i32_0 : i32, i32
  }
  func.func @transform_8(%arg0: i32) -> (i32, i32) {
    %c0_i32 = arith.constant 0 : i32
    %c0_i32_0 = arith.constant 0 : i32
    %c0_i32_1 = arith.constant 0 : i32
    return %c0_i32, %c0_i32_0 : i32, i32
  }
  func.func @transform_9(%arg0: i32) -> (i32, i32) {
    %c0_i32 = arith.constant 0 : i32
    %c0_i32_0 = arith.constant 0 : i32
    %c0_i32_1 = arith.constant 0 : i32
    return %c0_i32, %c0_i32_0 : i32, i32
  }
  func.func @transform_10(%arg0: i32) -> (i32, i32) {
    %c0_i32 = arith.constant 0 : i32
    %c0_i32_0 = arith.constant 0 : i32
    %c0_i32_1 = arith.constant 0 : i32
    return %c0_i32, %c0_i32_0 : i32, i32
  }
  func.func @transform_11(%arg0: i32) -> (i32, i32) {
    %c0_i32 = arith.constant 0 : i32
    %c0_i32_0 = arith.constant 0 : i32
    %c0_i32_1 = arith.constant 0 : i32
    return %c0_i32, %c0_i32_0 : i32, i32
  }
  func.func @transform_12(%arg0: i32) -> (i32, i32) {
    %c0_i32 = arith.constant 0 : i32
    %c0_i32_0 = arith.constant 0 : i32
    %c0_i32_1 = arith.constant 0 : i32
    return %c0_i32, %c0_i32_0 : i32, i32
  }
  func.func @transform_13(%arg0: i32) -> (i32, i32) {
    %c0_i32 = arith.constant 0 : i32
    %c0_i32_0 = arith.constant 0 : i32
    %c0_i32_1 = arith.constant 0 : i32
    return %c0_i32, %c0_i32_0 : i32, i32
  }
  func.func @transform_14(%arg0: i32) -> (i32, i32) {
    %c0_i32 = arith.constant 0 : i32
    %c0_i32_0 = arith.constant 0 : i32
    return %arg0, %c0_i32 : i32, i32
  }
}

</mosaic_0001>

<llo_original>
// kernel: pstin_forward.3
$region0: #{pstin_forward.3}
  #allocation0 [shape = 'u32[]', space=smem, size = 0x4, offset = 0x4, fixed_abs, tag = 'smem constant byte address 0x4 - core index']
  #allocation1 [shape = 'u32[144,128]{1,0:T(1,128)}', space=vmem, size = 0x12000, scoped, tag = 'internal scratch']
  #allocation2 [shape = 'f32[64,256]{1,0:T(8,128)}', space=vmem, size = 0x10000, scoped, tag = 'scratch operand']
  #allocation3 [shape = 'f32[64,32]{1,0:T(8,128)}', space=vmem, size = 0x8000, scoped, tag = 'scratch operand']
  #allocation4 [shape = 'f32[64,32]{1,0:T(8,128)}', space=vmem, size = 0x8000, scoped, tag = 'scratch operand']
  #allocation5 [shape = 'f32[64,32]{1,0:T(8,128)}', space=vmem, size = 0x8000, scoped, tag = 'scratch operand']
  #allocation6 [shape = 'f32[64,32]{1,0:T(8,128)}', space=vmem, size = 0x8000, scoped, tag = 'scratch operand']
  #allocation7 [shape = 'f32[1,1]{1,0:T(1,128)S(1)}', space=vmem, size = 0x200, scoped, tag = 'scoped memory for pstin_forward.3']
  %s0 = inlined_call_operand.vmem [shape: f32[64,64], index: 0, kind: input, shape index: {}]
  %s1 = inlined_call_operand.vmem [shape: f32[64,256], index: 1, kind: input, shape index: {}]
  %s2 = inlined_call_operand.vmem [shape: f32[64,256], index: 2, kind: input, shape index: {}]
  %s3 = inlined_call_operand.vmem [shape: f32[1,256], index: 3, kind: input, shape index: {}]
  %s4 = inlined_call_operand.vmem [shape: f32[64,256], index: 4, kind: input, shape index: {}]
  %s5 = inlined_call_operand.vmem [shape: f32[64,256], index: 5, kind: input, shape index: {}]
  %s6 = inlined_call_operand.vmem [shape: f32[1,256], index: 6, kind: input, shape index: {}]
  %s7 = inlined_call_operand.vmem [shape: f32[64,1], index: 7, kind: input, shape index: {}]
  %s8 = inlined_call_operand.<no memory space> [shape: f32[1,1], index: 8, kind: input, shape index: {}]
  %s9 = inlined_call_operand.vmem [shape: f32[64,10], index: 9, kind: input, shape index: {}]
  %s10 = inlined_call_operand.vmem [shape: f32[1,10], index: 10, kind: input, shape index: {}]
  %s11 = inlined_call_operand.vmem [shape: f32[8,10], index: 11, kind: output, shape index: {}]
  %s12 = sld [smem:[#allocation0]]
  $region68: #{pstin_forward.3} parent=0
    _
  %s14 = ssub.s32 1, %s12
  %s15 = scalar_select 0, %s14, %s12
  %v16 = vstv %s8
  %17 = vst [vmem:[#allocation7] sm:$0x1] %v16
  // Predicated region
  $region2: #{pstin_forward.3} parent=0 // pred_check
    _
  $region3: #{pstin_forward.3} parent=0 // pred_check_branch
    %19 = sbr.rel (0) target = $region5
  $region4: #{pstin_forward.3} parent=0 // pred_region
    _
  $region5: #{pstin_forward.3} parent=0 // pred_fallthru
    _
  // Predicated region
  $region6: #{pstin_forward.3} parent=0 // pred_check
    _
  $region7: #{pstin_forward.3} parent=0 // pred_check_branch
    %21 = sbr.rel (0) target = $region9
  $region8: #{pstin_forward.3} parent=0 // pred_region
    _
  $region9: #{pstin_forward.3} parent=0 // pred_fallthru
    _
  // Predicated region
  $region10: #{pstin_forward.3} parent=0 // pred_check
    _
  $region11: #{pstin_forward.3} parent=0 // pred_check_branch
    %23 = sbr.rel (0) target = $region13
  $region12: #{pstin_forward.3} parent=0 // pred_region
    _
  $region13: #{pstin_forward.3} parent=0 // pred_fallthru
    _
  // Predicated region
  $region14: #{pstin_forward.3} parent=0 // pred_check
    _
  $region15: #{pstin_forward.3} parent=0 // pred_check_branch
    %25 = sbr.rel (0) target = $region17
  $region16: #{pstin_forward.3} parent=0 // pred_region
    _
  $region17: #{pstin_forward.3} parent=0 // pred_fallthru
    _
  // Predicated region
  $region18: #{pstin_forward.3} parent=0 // pred_check
    _
  $region19: #{pstin_forward.3} parent=0 // pred_check_branch
    %27 = sbr.rel (0) target = $region21
  $region20: #{pstin_forward.3} parent=0 // pred_region
    _
  $region21: #{pstin_forward.3} parent=0 // pred_fallthru
    _
  // Predicated region
  $region22: #{pstin_forward.3} parent=0 // pred_check
    _
  $region23: #{pstin_forward.3} parent=0 // pred_check_branch
    %29 = sbr.rel (0) target = $region25
  $region24: #{pstin_forward.3} parent=0 // pred_region
    _
  $region25: #{pstin_forward.3} parent=0 // pred_fallthru
    _
  // Predicated region
  $region26: #{pstin_forward.3} parent=0 // pred_check
    _
  $region27: #{pstin_forward.3} parent=0 // pred_check_branch
    %31 = sbr.rel (0) target = $region29
  $region28: #{pstin_forward.3} parent=0 // pred_region
    _
  $region29: #{pstin_forward.3} parent=0 // pred_fallthru
    _
  // Predicated region
  $region30: #{pstin_forward.3} parent=0 // pred_check
    _
  $region31: #{pstin_forward.3} parent=0 // pred_check_branch
    %33 = sbr.rel (0) target = $region33
  $region32: #{pstin_forward.3} parent=0 // pred_region
    _
  $region33: #{pstin_forward.3} parent=0 // pred_fallthru
    _
  // Predicated region
  $region34: #{pstin_forward.3} parent=0 // pred_check
    _
  $region35: #{pstin_forward.3} parent=0 // pred_check_branch
    %35 = sbr.rel (0) target = $region37
  $region36: #{pstin_forward.3} parent=0 // pred_region
    _
  $region37: #{pstin_forward.3} parent=0 // pred_fallthru
    _
  // Predicated region
  $region38: #{pstin_forward.3} parent=0 // pred_check
    _
  $region39: #{pstin_forward.3} parent=0 // pred_check_branch
    %37 = sbr.rel (0) target = $region41
  $region40: #{pstin_forward.3} parent=0 // pred_region
    _
  $region41: #{pstin_forward.3} parent=0 // pred_fallthru
    _
  // Predicated region
  $region42: #{pstin_forward.3} parent=0 // pred_check
    _
  $region43: #{pstin_forward.3} parent=0 // pred_check_branch
    %39 = sbr.rel (0) target = $region45
  $region44: #{pstin_forward.3} parent=0 // pred_region
    _
  $region45: #{pstin_forward.3} parent=0 // pred_fallthru
    _
  %v41 = vld [vmem:[%s0] sm:$0xff]
  %v42 = vld [vmem:[%s0 + $0x8] sm:$0xff]
  %v43 = vld [vmem:[%s0 + $0x10] sm:$0xff]
  %v44 = vld [vmem:[%s0 + $0x18] sm:$0xff]
  %v45 = vld [vmem:[%s0 + $0x20] sm:$0xff]
  %v46 = vld [vmem:[%s0 + $0x28] sm:$0xff]
  %v47 = vld [vmem:[%s0 + $0x30] sm:$0xff]
  %v48 = vld [vmem:[%s0 + $0x38] sm:$0xff]
  %v49 = vld [vmem:[%s1] sm:$0xff]
  %v50 = vld [vmem:[%s1 + $0x8] sm:$0xff]
  %v51 = vld [vmem:[%s1 + $0x10] sm:$0xff]
  %v52 = vld [vmem:[%s1 + $0x18] sm:$0xff]
  %v53 = vld [vmem:[%s1 + $0x20] sm:$0xff]
  %v54 = vld [vmem:[%s1 + $0x28] sm:$0xff]
  %v55 = vld [vmem:[%s1 + $0x30] sm:$0xff]
  %v56 = vld [vmem:[%s1 + $0x38] sm:$0xff]
  %v57 = vld [vmem:[%s1 + $0x40] sm:$0xff]
  %v58 = vld [vmem:[%s1 + $0x48] sm:$0xff]
  %v59 = vld [vmem:[%s1 + $0x50] sm:$0xff]
  %v60 = vld [vmem:[%s1 + $0x58] sm:$0xff]
  %v61 = vld [vmem:[%s1 + $0x60] sm:$0xff]
  %v62 = vld [vmem:[%s1 + $0x68] sm:$0xff]
  %v63 = vld [vmem:[%s1 + $0x70] sm:$0xff]
  %v64 = vld [vmem:[%s1 + $0x78] sm:$0xff]
  %v65 = vpack.c.bf16 %v42, %v41
  %v66 = vpack.c.bf16 %v44, %v43
  %v67 = vpack.c.bf16 %v46, %v45
  %v68 = vpack.c.bf16 %v48, %v47
  %v69 = vpack.c.bf16 %v51, %v49
  %v70 = vpack.c.bf16 %v52, %v50
  %v71 = vpack.c.bf16 %v55, %v53
  %v72 = vpack.c.bf16 %v56, %v54
  %v73 = vpack.c.bf16 %v59, %v57
  %v74 = vpack.c.bf16 %v60, %v58
  %v75 = vpack.c.bf16 %v63, %v61
  %v76 = vpack.c.bf16 %v64, %v62
  %v77 = vld [vmem:[%s3] sm:$0x3]
  %v79 = vlaneseq
  %v80 = vshrl.u32 %v79, 7
  %v81 = vsub.s32 0, %v80
  %v82 = vrot.slane %v77, %v81
  %v83 = vlaneseq
  %v84 = vshrl.u32 %v83, 7
  %v85 = vsub.s32 1, %v84
  %v86 = vrot.slane %v77, %v85
  %vm89 = vcmask 523264
  %v91 = vsel %vm89, %v65, 0
  %v94 = vsel %vm89, %v66, 0
  %v97 = vsel %vm89, %v67, 0
  %v100 = vsel %vm89, %v68, 0
  %102 = vmatprep.subr.bf16.mxu0 0
  %103 = vmatpush1.bf16.msra.mxu0 0
  %104 = vmatprep.subr.bf16.mxu0 0
  %105 = vmatpush1.bf16.msra.mxu0 0
  %106 = vmatprep.subr.bf16.mxu0 0
  %107 = vmatpush1.bf16.msra.mxu0 0
  %108 = vmatprep.subr.bf16.mxu0 0
  %109 = vmatpush1.bf16.msra.mxu0 0
  %110 = vmatprep.subr.bf16.mxu0 %v76
  %111 = vmatpush1.bf16.msra.mxu0 %v75
  %112 = vmatprep.subr.bf16.mxu0 %v74
  %113 = vmatpush1.bf16.msra.mxu0 %v73
  %114 = vmatprep.subr.bf16.mxu0 %v72
  %115 = vmatpush1.bf16.msra.mxu0 %v71
  %116 = vmatprep.subr.bf16.mxu0 %v70
  %117 = vmatpush1.bf16.msra.mxu0 %v69
  %118 = vmatprep.subr.bf16.mxu0 0
  %119 = vmatpush2.bf16.msra.mxu0 0
  %120 = vmatprep.subr.bf16.mxu0 0
  %121 = vmatpush2.bf16.msra.mxu0 0
  %122 = vmatprep.subr.bf16.mxu0 0
  %123 = vmatpush2.bf16.msra.mxu0 0
  %124 = vmatprep.subr.bf16.mxu0 0
  %125 = vmatpush2.bf16.msra.mxu0 0
  %126 = vmatprep.subr.bf16.mxu0 0
  %127 = vmatpush2.bf16.msra.mxu0 0
  %128 = vmatprep.subr.bf16.mxu0 0
  %129 = vmatpush2.bf16.msra.mxu0 0
  %130 = vmatprep.subr.bf16.mxu0 0
  %131 = vmatpush2.bf16.msra.mxu0 0
  %132 = vmatprep.subr.bf16.mxu0 0
  %133 = vmatpush2.bf16.msra.mxu0 0
  %134 = vmatprep.mubr.bf16.mxu0 0
  %135 = vmatmul.mubr.bf16.gmra.mxu0 %v91
  %v136 = vpop.f32.mrf.mxu0
  %v137 = vadd.f32 %v82, %v136
  %v138 = vpop.f32.mrf.mxu0
  %v139 = vadd.f32 %v86, %v138
  %v140 = vpop.f32.mrf.mxu0
  %v141 = vadd.f32 %v82, %v140
  %v142 = vpop.f32.mrf.mxu0
  %v143 = vadd.f32 %v86, %v142
  %144 = vmatprep.mubr.bf16.mxu0 0
  %145 = vmatmul.mubr.bf16.gmra.mxu0 %v94
  %v146 = vpop.f32.mrf.mxu0
  %v147 = vadd.f32 %v82, %v146
  %v148 = vpop.f32.mrf.mxu0
  %v149 = vadd.f32 %v86, %v148
  %v150 = vpop.f32.mrf.mxu0
  %v151 = vadd.f32 %v82, %v150
  %v152 = vpop.f32.mrf.mxu0
  %v153 = vadd.f32 %v86, %v152
  %154 = vmatprep.mubr.bf16.mxu0 0
  %155 = vmatmul.mubr.bf16.gmra.mxu0 %v97
  %v156 = vpop.f32.mrf.mxu0
  %v157 = vadd.f32 %v82, %v156
  %v158 = vpop.f32.mrf.mxu0
  %v159 = vadd.f32 %v86, %v158
  %v160 = vpop.f32.mrf.mxu0
  %v161 = vadd.f32 %v82, %v160
  %v162 = vpop.f32.mrf.mxu0
  %v163 = vadd.f32 %v86, %v162
  %164 = vmatprep.mubr.bf16.mxu0 0
  %165 = vmatmul.mubr.bf16.gmra.mxu0 %v100
  %v166 = vpop.f32.mrf.mxu0
  %v167 = vadd.f32 %v82, %v166
  %v168 = vpop.f32.mrf.mxu0
  %v169 = vadd.f32 %v86, %v168
  %v170 = vpop.f32.mrf.mxu0
  %v171 = vadd.f32 %v82, %v170
  %v172 = vpop.f32.mrf.mxu0
  %v173 = vadd.f32 %v86, %v172
  %174 = vdwg.mxu0
  %175 = vst [vmem:[#allocation2] sm:$0xff] %v137
  %176 = vst [vmem:[#allocation2 + $0x8] sm:$0xff] %v139
  %177 = vst [vmem:[#allocation2 + $0x10] sm:$0xff] %v141
  %178 = vst [vmem:[#allocation2 + $0x18] sm:$0xff] %v143
  %179 = vst [vmem:[#allocation2 + $0x20] sm:$0xff] %v147
  %180 = vst [vmem:[#allocation2 + $0x28] sm:$0xff] %v149
  %181 = vst [vmem:[#allocation2 + $0x30] sm:$0xff] %v151
  %182 = vst [vmem:[#allocation2 + $0x38] sm:$0xff] %v153
  %183 = vst [vmem:[#allocation2 + $0x40] sm:$0xff] %v157
  %184 = vst [vmem:[#allocation2 + $0x48] sm:$0xff] %v159
  %185 = vst [vmem:[#allocation2 + $0x50] sm:$0xff] %v161
  %186 = vst [vmem:[#allocation2 + $0x58] sm:$0xff] %v163
  %187 = vst [vmem:[#allocation2 + $0x60] sm:$0xff] %v167
  %188 = vst [vmem:[#allocation2 + $0x68] sm:$0xff] %v169
  %189 = vst [vmem:[#allocation2 + $0x70] sm:$0xff] %v171
  %190 = vst [vmem:[#allocation2 + $0x78] sm:$0xff] %v173
  %v191 = vld [vmem:[%s2] sm:$0xff]
  %v192 = vld [vmem:[%s2 + $0x8] sm:$0xff]
  %v193 = vld [vmem:[%s2 + $0x10] sm:$0xff]
  %v194 = vld [vmem:[%s2 + $0x18] sm:$0xff]
  %v195 = vld [vmem:[%s2 + $0x20] sm:$0xff]
  %v196 = vld [vmem:[%s2 + $0x28] sm:$0xff]
  %v197 = vld [vmem:[%s2 + $0x30] sm:$0xff]
  %v198 = vld [vmem:[%s2 + $0x38] sm:$0xff]
  %v199 = vld [vmem:[%s2 + $0x40] sm:$0xff]
  %v200 = vld [vmem:[%s2 + $0x48] sm:$0xff]
  %v201 = vld [vmem:[%s2 + $0x50] sm:$0xff]
  %v202 = vld [vmem:[%s2 + $0x58] sm:$0xff]
  %v203 = vld [vmem:[%s2 + $0x60] sm:$0xff]
  %v204 = vld [vmem:[%s2 + $0x68] sm:$0xff]
  %v205 = vld [vmem:[%s2 + $0x70] sm:$0xff]
  %v206 = vld [vmem:[%s2 + $0x78] sm:$0xff]
  %v207 = vpack.c.bf16 %v193, %v191
  %v208 = vpack.c.bf16 %v194, %v192
  %v209 = vpack.c.bf16 %v197, %v195
  %v210 = vpack.c.bf16 %v198, %v196
  %v211 = vpack.c.bf16 %v201, %v199
  %v212 = vpack.c.bf16 %v202, %v200
  %v213 = vpack.c.bf16 %v205, %v203
  %v214 = vpack.c.bf16 %v206, %v204
  loop: start=0, step=1, limit=8
  $region46: #{pstin_forward.3} parent=0 // loop_pre_header
    _
  $region47: #{pstin_forward.3} parent=0 // loop_header
    %s216 = sphi 0, %s220
    %p217 = scmp.ge.s32.totalorder %s216, 8
    %v221 = vphi 0.0, %v338
    %v222 = vphi 0.0, %v321
    %v223 = vphi 0.0, %v344
    %v224 = vphi 0.0, %v332
  $region48: #{pstin_forward.3} parent=0 // loop_header_branch
    %219 = sbr.rel (%p217) target = $region52
  $region49: #{pstin_forward.3} parent=0 // loop_body
    %s225 = ssub.s32 7, %s216
    %s226 = smul.u32 %s216, 8
    %s227 = smul.u32 %s225, 8
    %229 = vrot.lane.b32.xlu0 %v221, 64
    %v230 = vpop.permute.xlu0 %229
    %233 = vrot.lane.b32.xlu0 %v223, 96
    %v234 = vpop.permute.xlu0 %233
    %vm236 = vcmask 261120
    %v237 = vsel %vm236, %v230, %v234
    %v238 = vpack.c.bf16 %v237, %v237
    %v240 = vsel %vm89, %v238, 0
    %242 = vmatprep.subr.bf16.mxu0 0
    %243 = vmatpush1.bf16.msra.mxu0 0
    %244 = vmatprep.subr.bf16.mxu0 0
    %245 = vmatpush1.bf16.msra.mxu0 0
    %246 = vmatprep.subr.bf16.mxu0 0
    %247 = vmatpush1.bf16.msra.mxu0 0
    %248 = vmatprep.subr.bf16.mxu0 0
    %249 = vmatpush1.bf16.msra.mxu0 0
    %250 = vmatprep.subr.bf16.mxu0 %v214
    %251 = vmatpush1.bf16.msra.mxu0 %v213
    %252 = vmatprep.subr.bf16.mxu0 %v212
    %253 = vmatpush1.bf16.msra.mxu0 %v211
    %254 = vmatprep.subr.bf16.mxu0 %v210
    %255 = vmatpush1.bf16.msra.mxu0 %v209
    %256 = vmatprep.subr.bf16.mxu0 %v208
    %257 = vmatpush1.bf16.msra.mxu0 %v207
    %258 = vmatprep.subr.bf16.mxu0 0
    %259 = vmatpush2.bf16.msra.mxu0 0
    %260 = vmatprep.subr.bf16.mxu0 0
    %261 = vmatpush2.bf16.msra.mxu0 0
    %262 = vmatprep.subr.bf16.mxu0 0
    %263 = vmatpush2.bf16.msra.mxu0 0
    %264 = vmatprep.subr.bf16.mxu0 0
    %265 = vmatpush2.bf16.msra.mxu0 0
    %266 = vmatprep.subr.bf16.mxu0 0
    %267 = vmatpush2.bf16.msra.mxu0 0
    %268 = vmatprep.subr.bf16.mxu0 0
    %269 = vmatpush2.bf16.msra.mxu0 0
    %270 = vmatprep.subr.bf16.mxu0 0
    %271 = vmatpush2.bf16.msra.mxu0 0
    %272 = vmatprep.subr.bf16.mxu0 0
    %273 = vmatpush2.bf16.msra.mxu0 0
    %274 = vmatprep.mubr.bf16.mxu0 0
    %275 = vmatmul.mubr.bf16.gmra.mxu0 %v240
    %v276 = vpop.f32.mrf.mxu0
    %v277 = vadd.f32 0.0, %v276
    %v278 = vpop.f32.mrf.mxu0
    %v279 = vadd.f32 0.0, %v278
    %v280 = vpop.f32.mrf.mxu0
    %v281 = vpop.f32.mrf.mxu0
    %282 = vdwg.mxu0
    %s283 = sshra.s32 %s226, 3
    %s284 = sand.u32 %s226, 7
    %s285 = smul.u32 %s283, 2
    %s286 = smul.addr %s285, 8
    %s287 = scalar_lea.vmem [#allocation2], %s286
    %v288 = vld [vmem:[%s287] sm:$0xff]
    %s289 = sshra.s32 %s227, 3
    %s290 = sand.u32 %s227, 7
    %s291 = smul.u32 %s289, 2
    %s292 = smul.addr %s291, 8
    %s293 = scalar_lea.vmem [#allocation2], %s292
    %v294 = vld [vmem:[%s293 + $0x8] sm:$0xff]
    %v295 = vadd.f32 %v277, %v288
    %v296 = vadd.f32 %v279, %v294
    %v297 = vxor.u32 %v295, 2147483648
    %v298 = vmul.f32 %v297, 1.442695
    %v299 = vpow.pop %v298
    %v300 = vadd.f32 %v299, 1.0
    %v301 = vrcp.pop %v300
    %v302 = vmul.f32 1.0, %v301
    %v303 = vxor.u32 %v296, 2147483648
    %v304 = vmul.f32 %v303, 1.442695
    %v305 = vpow.pop %v304
    %v306 = vadd.f32 %v305, 1.0
    %v307 = vrcp.pop %v306
    %v308 = vmul.f32 1.0, %v307
    %v309 = vtanh.pop %v295
    %v310 = vtanh.pop %v296
    %v311 = vmul.f32 %v302, %v222
    %313 = vrot.lane.b32.xlu0 %v309, 32
    %v314 = vpop.permute.xlu0 %313
    %v316 = vmul.f32 %v302, %v314
    %318 = vrot.lane.b32.xlu0 %v316, 32
    %v319 = vpop.permute.xlu0 %318
    %v321 = vadd.f32 %v311, %v319
    %v322 = vmul.f32 %v308, %v224
    %324 = vrot.lane.b32.xlu0 %v310, 32
    %v325 = vpop.permute.xlu0 %324
    %v327 = vmul.f32 %v308, %v325
    %329 = vrot.lane.b32.xlu0 %v327, 32
    %v330 = vpop.permute.xlu0 %329
    %v332 = vadd.f32 %v322, %v330
    %v333 = vtanh.pop %v321
    %335 = vrot.lane.b32.xlu0 %v333, 32
    %v336 = vpop.permute.xlu0 %335
    %v338 = vmul.f32 %v302, %v336
    %v339 = vtanh.pop %v332
    %341 = vrot.lane.b32.xlu0 %v339, 32
    %v342 = vpop.permute.xlu0 %341
    %v344 = vmul.f32 %v308, %v342
    %346 = vrot.lane.b32.xlu0 %v338, 64
    %v347 = vpop.permute.xlu0 %346
    %s349 = scalar_lea.vmem [#allocation3], %s226
    %350 = vst.msk [vmem:[%s349] sm:$0xff] %vm236, %v347
    %352 = vrot.lane.b32.xlu0 %v344, 64
    %v353 = vpop.permute.xlu0 %352
    %s355 = scalar_lea.vmem [#allocation4], %s227
    %356 = vst.msk [vmem:[%s355] sm:$0xff] %vm236, %v353
  $region50: #{pstin_forward.3} parent=0 // loop_footer
    %s220 = sadd.s32 1, %s216
  $region51: #{pstin_forward.3} parent=0 // loop_footer_branch
    %215 = sbr.rel target = $region47
  $region52: #{pstin_forward.3} parent=0 // loop_exit
    _
  %v357 = vld [vmem:[#allocation3] sm:$0xff]
  %v358 = vld [vmem:[#allocation3 + $0x8] sm:$0xff]
  %v359 = vld [vmem:[#allocation3 + $0x10] sm:$0xff]
  %v360 = vld [vmem:[#allocation3 + $0x18] sm:$0xff]
  %v361 = vld [vmem:[#allocation3 + $0x20] sm:$0xff]
  %v362 = vld [vmem:[#allocation3 + $0x28] sm:$0xff]
  %v363 = vld [vmem:[#allocation3 + $0x30] sm:$0xff]
  %v364 = vld [vmem:[#allocation3 + $0x38] sm:$0xff]
  %v365 = vld [vmem:[#allocation4] sm:$0xff]
  %v366 = vld [vmem:[#allocation4 + $0x8] sm:$0xff]
  %v367 = vld [vmem:[#allocation4 + $0x10] sm:$0xff]
  %v368 = vld [vmem:[#allocation4 + $0x18] sm:$0xff]
  %v369 = vld [vmem:[#allocation4 + $0x20] sm:$0xff]
  %v370 = vld [vmem:[#allocation4 + $0x28] sm:$0xff]
  %v371 = vld [vmem:[#allocation4 + $0x30] sm:$0xff]
  %v372 = vld [vmem:[#allocation4 + $0x38] sm:$0xff]
  %381 = vrot.lane.b32.xlu0 %v365, 32
  %v382 = vpop.permute.xlu0 %381
  %383 = vrot.lane.b32.xlu0 %v366, 32
  %v384 = vpop.permute.xlu0 %383
  %385 = vrot.lane.b32.xlu0 %v367, 32
  %v386 = vpop.permute.xlu0 %385
  %387 = vrot.lane.b32.xlu0 %v368, 32
  %v388 = vpop.permute.xlu0 %387
  %389 = vrot.lane.b32.xlu0 %v369, 32
  %v390 = vpop.permute.xlu0 %389
  %391 = vrot.lane.b32.xlu0 %v370, 32
  %v392 = vpop.permute.xlu0 %391
  %393 = vrot.lane.b32.xlu0 %v371, 32
  %v394 = vpop.permute.xlu0 %393
  %395 = vrot.lane.b32.xlu0 %v372, 32
  %v396 = vpop.permute.xlu0 %395
  %vm405 = vcmask 261120
  %v406 = vsel %vm405, %v357, %v382
  %v407 = vsel %vm405, %v358, %v384
  %v408 = vsel %vm405, %v359, %v386
  %v409 = vsel %vm405, %v360, %v388
  %v410 = vsel %vm405, %v361, %v390
  %v411 = vsel %vm405, %v362, %v392
  %v412 = vsel %vm405, %v363, %v394
  %v413 = vsel %vm405, %v364, %v396
  %v414 = vld [vmem:[%s4] sm:$0xff]
  %v415 = vld [vmem:[%s4 + $0x8] sm:$0xff]
  %v416 = vld [vmem:[%s4 + $0x10] sm:$0xff]
  %v417 = vld [vmem:[%s4 + $0x18] sm:$0xff]
  %v418 = vld [vmem:[%s4 + $0x20] sm:$0xff]
  %v419 = vld [vmem:[%s4 + $0x28] sm:$0xff]
  %v420 = vld [vmem:[%s4 + $0x30] sm:$0xff]
  %v421 = vld [vmem:[%s4 + $0x38] sm:$0xff]
  %v422 = vld [vmem:[%s4 + $0x40] sm:$0xff]
  %v423 = vld [vmem:[%s4 + $0x48] sm:$0xff]
  %v424 = vld [vmem:[%s4 + $0x50] sm:$0xff]
  %v425 = vld [vmem:[%s4 + $0x58] sm:$0xff]
  %v426 = vld [vmem:[%s4 + $0x60] sm:$0xff]
  %v427 = vld [vmem:[%s4 + $0x68] sm:$0xff]
  %v428 = vld [vmem:[%s4 + $0x70] sm:$0xff]
  %v429 = vld [vmem:[%s4 + $0x78] sm:$0xff]
  %v430 = vpack.c.bf16 %v407, %v406
  %v431 = vpack.c.bf16 %v409, %v408
  %v432 = vpack.c.bf16 %v411, %v410
  %v433 = vpack.c.bf16 %v413, %v412
  %v434 = vpack.c.bf16 %v416, %v414
  %v435 = vpack.c.bf16 %v417, %v415
  %v436 = vpack.c.bf16 %v420, %v418
  %v437 = vpack.c.bf16 %v421, %v419
  %v438 = vpack.c.bf16 %v424, %v422
  %v439 = vpack.c.bf16 %v425, %v423
  %v440 = vpack.c.bf16 %v428, %v426
  %v441 = vpack.c.bf16 %v429, %v427
  %v442 = vld [vmem:[%s6] sm:$0x3]
  %v444 = vlaneseq
  %v445 = vshrl.u32 %v444, 7
  %v446 = vsub.s32 0, %v445
  %v447 = vrot.slane %v442, %v446
  %v448 = vlaneseq
  %v449 = vshrl.u32 %v448, 7
  %v450 = vsub.s32 1, %v449
  %v451 = vrot.slane %v442, %v450
  %v455 = vsel %vm89, %v430, 0
  %v458 = vsel %vm89, %v431, 0
  %v461 = vsel %vm89, %v432, 0
  %v464 = vsel %vm89, %v433, 0
  %466 = vmatprep.subr.bf16.mxu0 0
  %467 = vmatpush1.bf16.msra.mxu0 0
  %468 = vmatprep.subr.bf16.mxu0 0
  %469 = vmatpush1.bf16.msra.mxu0 0
  %470 = vmatprep.subr.bf16.mxu0 0
  %471 = vmatpush1.bf16.msra.mxu0 0
  %472 = vmatprep.subr.bf16.mxu0 0
  %473 = vmatpush1.bf16.msra.mxu0 0
  %474 = vmatprep.subr.bf16.mxu0 %v441
  %475 = vmatpush1.bf16.msra.mxu0 %v440
  %476 = vmatprep.subr.bf16.mxu0 %v439
  %477 = vmatpush1.bf16.msra.mxu0 %v438
  %478 = vmatprep.subr.bf16.mxu0 %v437
  %479 = vmatpush1.bf16.msra.mxu0 %v436
  %480 = vmatprep.subr.bf16.mxu0 %v435
  %481 = vmatpush1.bf16.msra.mxu0 %v434
  %482 = vmatprep.subr.bf16.mxu0 0
  %483 = vmatpush2.bf16.msra.mxu0 0
  %484 = vmatprep.subr.bf16.mxu0 0
  %485 = vmatpush2.bf16.msra.mxu0 0
  %486 = vmatprep.subr.bf16.mxu0 0
  %487 = vmatpush2.bf16.msra.mxu0 0
  %488 = vmatprep.subr.bf16.mxu0 0
  %489 = vmatpush2.bf16.msra.mxu0 0
  %490 = vmatprep.subr.bf16.mxu0 0
  %491 = vmatpush2.bf16.msra.mxu0 0
  %492 = vmatprep.subr.bf16.mxu0 0
  %493 = vmatpush2.bf16.msra.mxu0 0
  %494 = vmatprep.subr.bf16.mxu0 0
  %495 = vmatpush2.bf16.msra.mxu0 0
  %496 = vmatprep.subr.bf16.mxu0 0
  %497 = vmatpush2.bf16.msra.mxu0 0
  %498 = vmatprep.mubr.bf16.mxu0 0
  %499 = vmatmul.mubr.bf16.gmra.mxu0 %v455
  %v500 = vpop.f32.mrf.mxu0
  %v501 = vadd.f32 %v447, %v500
  %v502 = vpop.f32.mrf.mxu0
  %v503 = vadd.f32 %v451, %v502
  %v504 = vpop.f32.mrf.mxu0
  %v505 = vadd.f32 %v447, %v504
  %v506 = vpop.f32.mrf.mxu0
  %v507 = vadd.f32 %v451, %v506
  %508 = vmatprep.mubr.bf16.mxu0 0
  %509 = vmatmul.mubr.bf16.gmra.mxu0 %v458
  %v510 = vpop.f32.mrf.mxu0
  %v511 = vadd.f32 %v447, %v510
  %v512 = vpop.f32.mrf.mxu0
  %v513 = vadd.f32 %v451, %v512
  %v514 = vpop.f32.mrf.mxu0
  %v515 = vadd.f32 %v447, %v514
  %v516 = vpop.f32.mrf.mxu0
  %v517 = vadd.f32 %v451, %v516
  %518 = vmatprep.mubr.bf16.mxu0 0
  %519 = vmatmul.mubr.bf16.gmra.mxu0 %v461
  %v520 = vpop.f32.mrf.mxu0
  %v521 = vadd.f32 %v447, %v520
  %v522 = vpop.f32.mrf.mxu0
  %v523 = vadd.f32 %v451, %v522
  %v524 = vpop.f32.mrf.mxu0
  %v525 = vadd.f32 %v447, %v524
  %v526 = vpop.f32.mrf.mxu0
  %v527 = vadd.f32 %v451, %v526
  %528 = vmatprep.mubr.bf16.mxu0 0
  %529 = vmatmul.mubr.bf16.gmra.mxu0 %v464
  %v530 = vpop.f32.mrf.mxu0
  %v531 = vadd.f32 %v447, %v530
  %v532 = vpop.f32.mrf.mxu0
  %v533 = vadd.f32 %v451, %v532
  %v534 = vpop.f32.mrf.mxu0
  %v535 = vadd.f32 %v447, %v534
  %v536 = vpop.f32.mrf.mxu0
  %v537 = vadd.f32 %v451, %v536
  %538 = vdwg.mxu0
  %539 = vst [vmem:[#allocation2] sm:$0xff] %v501
  %540 = vst [vmem:[#allocation2 + $0x8] sm:$0xff] %v503
  %541 = vst [vmem:[#allocation2 + $0x10] sm:$0xff] %v505
  %542 = vst [vmem:[#allocation2 + $0x18] sm:$0xff] %v507
  %543 = vst [vmem:[#allocation2 + $0x20] sm:$0xff] %v511
  %544 = vst [vmem:[#allocation2 + $0x28] sm:$0xff] %v513
  %545 = vst [vmem:[#allocation2 + $0x30] sm:$0xff] %v515
  %546 = vst [vmem:[#allocation2 + $0x38] sm:$0xff] %v517
  %547 = vst [vmem:[#allocation2 + $0x40] sm:$0xff] %v521
  %548 = vst [vmem:[#allocation2 + $0x48] sm:$0xff] %v523
  %549 = vst [vmem:[#allocation2 + $0x50] sm:$0xff] %v525
  %550 = vst [vmem:[#allocation2 + $0x58] sm:$0xff] %v527
  %551 = vst [vmem:[#allocation2 + $0x60] sm:$0xff] %v531
  %552 = vst [vmem:[#allocation2 + $0x68] sm:$0xff] %v533
  %553 = vst [vmem:[#allocation2 + $0x70] sm:$0xff] %v535
  %554 = vst [vmem:[#allocation2 + $0x78] sm:$0xff] %v537
  %v555 = vld [vmem:[%s5] sm:$0xff]
  %v556 = vld [vmem:[%s5 + $0x8] sm:$0xff]
  %v557 = vld [vmem:[%s5 + $0x10] sm:$0xff]
  %v558 = vld [vmem:[%s5 + $0x18] sm:$0xff]
  %v559 = vld [vmem:[%s5 + $0x20] sm:$0xff]
  %v560 = vld [vmem:[%s5 + $0x28] sm:$0xff]
  %v561 = vld [vmem:[%s5 + $0x30] sm:$0xff]
  %v562 = vld [vmem:[%s5 + $0x38] sm:$0xff]
  %v563 = vld [vmem:[%s5 + $0x40] sm:$0xff]
  %v564 = vld [vmem:[%s5 + $0x48] sm:$0xff]
  %v565 = vld [vmem:[%s5 + $0x50] sm:$0xff]
  %v566 = vld [vmem:[%s5 + $0x58] sm:$0xff]
  %v567 = vld [vmem:[%s5 + $0x60] sm:$0xff]
  %v568 = vld [vmem:[%s5 + $0x68] sm:$0xff]
  %v569 = vld [vmem:[%s5 + $0x70] sm:$0xff]
  %v570 = vld [vmem:[%s5 + $0x78] sm:$0xff]
  %v571 = vpack.c.bf16 %v557, %v555
  %v572 = vpack.c.bf16 %v558, %v556
  %v573 = vpack.c.bf16 %v561, %v559
  %v574 = vpack.c.bf16 %v562, %v560
  %v575 = vpack.c.bf16 %v565, %v563
  %v576 = vpack.c.bf16 %v566, %v564
  %v577 = vpack.c.bf16 %v569, %v567
  %v578 = vpack.c.bf16 %v570, %v568
  loop: start=0, step=1, limit=8
  $region53: #{pstin_forward.3} parent=0 // loop_pre_header
    _
  $region54: #{pstin_forward.3} parent=0 // loop_header
    %s580 = sphi 0, %s584
    %p581 = scmp.ge.s32.totalorder %s580, 8
    %v585 = vphi 0.0, %v701
    %v586 = vphi 0.0, %v684
    %v587 = vphi 0.0, %v707
    %v588 = vphi 0.0, %v695
  $region55: #{pstin_forward.3} parent=0 // loop_header_branch
    %583 = sbr.rel (%p581) target = $region59
  $region56: #{pstin_forward.3} parent=0 // loop_body
    %s589 = ssub.s32 7, %s580
    %s590 = smul.u32 %s580, 8
    %s591 = smul.u32 %s589, 8
    %593 = vrot.lane.b32.xlu0 %v585, 64
    %v594 = vpop.permute.xlu0 %593
    %597 = vrot.lane.b32.xlu0 %v587, 96
    %v598 = vpop.permute.xlu0 %597
    %v600 = vsel %vm405, %v594, %v598
    %v601 = vpack.c.bf16 %v600, %v600
    %v603 = vsel %vm89, %v601, 0
    %605 = vmatprep.subr.bf16.mxu0 0
    %606 = vmatpush1.bf16.msra.mxu0 0
    %607 = vmatprep.subr.bf16.mxu0 0
    %608 = vmatpush1.bf16.msra.mxu0 0
    %609 = vmatprep.subr.bf16.mxu0 0
    %610 = vmatpush1.bf16.msra.mxu0 0
    %611 = vmatprep.subr.bf16.mxu0 0
    %612 = vmatpush1.bf16.msra.mxu0 0
    %613 = vmatprep.subr.bf16.mxu0 %v578
    %614 = vmatpush1.bf16.msra.mxu0 %v577
    %615 = vmatprep.subr.bf16.mxu0 %v576
    %616 = vmatpush1.bf16.msra.mxu0 %v575
    %617 = vmatprep.subr.bf16.mxu0 %v574
    %618 = vmatpush1.bf16.msra.mxu0 %v573
    %619 = vmatprep.subr.bf16.mxu0 %v572
    %620 = vmatpush1.bf16.msra.mxu0 %v571
    %621 = vmatprep.subr.bf16.mxu0 0
    %622 = vmatpush2.bf16.msra.mxu0 0
    %623 = vmatprep.subr.bf16.mxu0 0
    %624 = vmatpush2.bf16.msra.mxu0 0
    %625 = vmatprep.subr.bf16.mxu0 0
    %626 = vmatpush2.bf16.msra.mxu0 0
    %627 = vmatprep.subr.bf16.mxu0 0
    %628 = vmatpush2.bf16.msra.mxu0 0
    %629 = vmatprep.subr.bf16.mxu0 0
    %630 = vmatpush2.bf16.msra.mxu0 0
    %631 = vmatprep.subr.bf16.mxu0 0
    %632 = vmatpush2.bf16.msra.mxu0 0
    %633 = vmatprep.subr.bf16.mxu0 0
    %634 = vmatpush2.bf16.msra.mxu0 0
    %635 = vmatprep.subr.bf16.mxu0 0
    %636 = vmatpush2.bf16.msra.mxu0 0
    %637 = vmatprep.mubr.bf16.mxu0 0
    %638 = vmatmul.mubr.bf16.gmra.mxu0 %v603
    %v639 = vpop.f32.mrf.mxu0
    %v640 = vadd.f32 0.0, %v639
    %v641 = vpop.f32.mrf.mxu0
    %v642 = vadd.f32 0.0, %v641
    %v643 = vpop.f32.mrf.mxu0
    %v644 = vpop.f32.mrf.mxu0
    %645 = vdwg.mxu0
    %s646 = sshra.s32 %s590, 3
    %s647 = sand.u32 %s590, 7
    %s648 = smul.u32 %s646, 2
    %s649 = smul.addr %s648, 8
    %s650 = scalar_lea.vmem [#allocation2], %s649
    %v651 = vld [vmem:[%s650] sm:$0xff]
    %s652 = sshra.s32 %s591, 3
    %s653 = sand.u32 %s591, 7
    %s654 = smul.u32 %s652, 2
    %s655 = smul.addr %s654, 8
    %s656 = scalar_lea.vmem [#allocation2], %s655
    %v657 = vld [vmem:[%s656 + $0x8] sm:$0xff]
    %v658 = vadd.f32 %v640, %v651
    %v659 = vadd.f32 %v642, %v657
    %v660 = vxor.u32 %v658, 2147483648
    %v661 = vmul.f32 %v660, 1.442695
    %v662 = vpow.pop %v661
    %v663 = vadd.f32 %v662, 1.0
    %v664 = vrcp.pop %v663
    %v665 = vmul.f32 1.0, %v664
    %v666 = vxor.u32 %v659, 2147483648
    %v667 = vmul.f32 %v666, 1.442695
    %v668 = vpow.pop %v667
    %v669 = vadd.f32 %v668, 1.0
    %v670 = vrcp.pop %v669
    %v671 = vmul.f32 1.0, %v670
    %v672 = vtanh.pop %v658
    %v673 = vtanh.pop %v659
    %v674 = vmul.f32 %v665, %v586
    %676 = vrot.lane.b32.xlu0 %v672, 32
    %v677 = vpop.permute.xlu0 %676
    %v679 = vmul.f32 %v665, %v677
    %681 = vrot.lane.b32.xlu0 %v679, 32
    %v682 = vpop.permute.xlu0 %681
    %v684 = vadd.f32 %v674, %v682
    %v685 = vmul.f32 %v671, %v588
    %687 = vrot.lane.b32.xlu0 %v673, 32
    %v688 = vpop.permute.xlu0 %687
    %v690 = vmul.f32 %v671, %v688
    %692 = vrot.lane.b32.xlu0 %v690, 32
    %v693 = vpop.permute.xlu0 %692
    %v695 = vadd.f32 %v685, %v693
    %v696 = vtanh.pop %v684
    %698 = vrot.lane.b32.xlu0 %v696, 32
    %v699 = vpop.permute.xlu0 %698
    %v701 = vmul.f32 %v665, %v699
    %v702 = vtanh.pop %v695
    %704 = vrot.lane.b32.xlu0 %v702, 32
    %v705 = vpop.permute.xlu0 %704
    %v707 = vmul.f32 %v671, %v705
    %709 = vrot.lane.b32.xlu0 %v701, 64
    %v710 = vpop.permute.xlu0 %709
    %s712 = scalar_lea.vmem [#allocation5], %s590
    %713 = vst.msk [vmem:[%s712] sm:$0xff] %vm405, %v710
    %715 = vrot.lane.b32.xlu0 %v707, 64
    %v716 = vpop.permute.xlu0 %715
    %s718 = scalar_lea.vmem [#allocation6], %s591
    %719 = vst.msk [vmem:[%s718] sm:$0xff] %vm405, %v716
  $region57: #{pstin_forward.3} parent=0 // loop_footer
    %s584 = sadd.s32 1, %s580
  $region58: #{pstin_forward.3} parent=0 // loop_footer_branch
    %579 = sbr.rel target = $region54
  $region59: #{pstin_forward.3} parent=0 // loop_exit
    _
  %v720 = vld [vmem:[#allocation5] sm:$0xff]
  %v721 = vld [vmem:[#allocation5 + $0x8] sm:$0xff]
  %v722 = vld [vmem:[#allocation5 + $0x10] sm:$0xff]
  %v723 = vld [vmem:[#allocation5 + $0x18] sm:$0xff]
  %v724 = vld [vmem:[#allocation5 + $0x20] sm:$0xff]
  %v725 = vld [vmem:[#allocation5 + $0x28] sm:$0xff]
  %v726 = vld [vmem:[#allocation5 + $0x30] sm:$0xff]
  %v727 = vld [vmem:[#allocation5 + $0x38] sm:$0xff]
  %v728 = vld [vmem:[#allocation6] sm:$0xff]
  %v729 = vld [vmem:[#allocation6 + $0x8] sm:$0xff]
  %v730 = vld [vmem:[#allocation6 + $0x10] sm:$0xff]
  %v731 = vld [vmem:[#allocation6 + $0x18] sm:$0xff]
  %v732 = vld [vmem:[#allocation6 + $0x20] sm:$0xff]
  %v733 = vld [vmem:[#allocation6 + $0x28] sm:$0xff]
  %v734 = vld [vmem:[#allocation6 + $0x30] sm:$0xff]
  %v735 = vld [vmem:[#allocation6 + $0x38] sm:$0xff]
  %744 = vrot.lane.b32.xlu0 %v728, 32
  %v745 = vpop.permute.xlu0 %744
  %746 = vrot.lane.b32.xlu0 %v729, 32
  %v747 = vpop.permute.xlu0 %746
  %748 = vrot.lane.b32.xlu0 %v730, 32
  %v749 = vpop.permute.xlu0 %748
  %750 = vrot.lane.b32.xlu0 %v731, 32
  %v751 = vpop.permute.xlu0 %750
  %752 = vrot.lane.b32.xlu0 %v732, 32
  %v753 = vpop.permute.xlu0 %752
  %754 = vrot.lane.b32.xlu0 %v733, 32
  %v755 = vpop.permute.xlu0 %754
  %756 = vrot.lane.b32.xlu0 %v734, 32
  %v757 = vpop.permute.xlu0 %756
  %758 = vrot.lane.b32.xlu0 %v735, 32
  %v759 = vpop.permute.xlu0 %758
  %v768 = vsel %vm405, %v720, %v745
  %v769 = vsel %vm405, %v721, %v747
  %v770 = vsel %vm405, %v722, %v749
  %v771 = vsel %vm405, %v723, %v751
  %v772 = vsel %vm405, %v724, %v753
  %v773 = vsel %vm405, %v725, %v755
  %v774 = vsel %vm405, %v726, %v757
  %v775 = vsel %vm405, %v727, %v759
  %v776 = vld [vmem:[%s7] sm:$0xff]
  %v777 = vld [vmem:[%s7 + $0x8] sm:$0xff]
  %v778 = vld [vmem:[%s7 + $0x10] sm:$0xff]
  %v779 = vld [vmem:[%s7 + $0x18] sm:$0xff]
  %v780 = vld [vmem:[%s7 + $0x20] sm:$0xff]
  %v781 = vld [vmem:[%s7 + $0x28] sm:$0xff]
  %v782 = vld [vmem:[%s7 + $0x30] sm:$0xff]
  %v783 = vld [vmem:[%s7 + $0x38] sm:$0xff]
  %v784 = vpack.c.bf16 %v769, %v768
  %v785 = vpack.c.bf16 %v771, %v770
  %v786 = vpack.c.bf16 %v773, %v772
  %v787 = vpack.c.bf16 %v775, %v774
  %v788 = vpack.c.bf16 %v777, %v776
  %v789 = vpack.c.bf16 %v779, %v778
  %v790 = vpack.c.bf16 %v781, %v780
  %v791 = vpack.c.bf16 %v783, %v782
  %v792 = vld [vmem:[#allocation7] sm:$0x1]
  %v794 = vlaneseq
  %v795 = vshrl.u32 %v794, 7
  %v796 = vsub.s32 0, %v795
  %v797 = vrot.slane %v792, %v796
  %v800 = vsel %vm89, %v784, 0
  %v803 = vsel %vm89, %v785, 0
  %v806 = vsel %vm89, %v786, 0
  %v809 = vsel %vm89, %v787, 0
  %811 = vmatprep.subr.bf16.mxu0 0
  %812 = vmatpush1.bf16.msra.mxu0 0
  %813 = vmatprep.subr.bf16.mxu0 0
  %814 = vmatpush1.bf16.msra.mxu0 0
  %815 = vmatprep.subr.bf16.mxu0 0
  %816 = vmatpush1.bf16.msra.mxu0 0
  %817 = vmatprep.subr.bf16.mxu0 0
  %818 = vmatpush1.bf16.msra.mxu0 0
  %819 = vmatprep.subr.bf16.mxu0 0
  %820 = vmatpush1.bf16.msra.mxu0 %v791
  %821 = vmatprep.subr.bf16.mxu0 0
  %822 = vmatpush1.bf16.msra.mxu0 %v790
  %823 = vmatprep.subr.bf16.mxu0 0
  %824 = vmatpush1.bf16.msra.mxu0 %v789
  %825 = vmatprep.subr.bf16.mxu0 0
  %826 = vmatpush1.bf16.msra.mxu0 %v788
  %827 = vmatprep.subr.bf16.mxu0 0
  %828 = vmatpush2.bf16.msra.mxu0 0
  %829 = vmatprep.subr.bf16.mxu0 0
  %830 = vmatpush2.bf16.msra.mxu0 0
  %831 = vmatprep.subr.bf16.mxu0 0
  %832 = vmatpush2.bf16.msra.mxu0 0
  %833 = vmatprep.subr.bf16.mxu0 0
  %834 = vmatpush2.bf16.msra.mxu0 0
  %835 = vmatprep.subr.bf16.mxu0 0
  %836 = vmatpush2.bf16.msra.mxu0 0
  %837 = vmatprep.subr.bf16.mxu0 0
  %838 = vmatpush2.bf16.msra.mxu0 0
  %839 = vmatprep.subr.bf16.mxu0 0
  %840 = vmatpush2.bf16.msra.mxu0 0
  %841 = vmatprep.subr.bf16.mxu0 0
  %842 = vmatpush2.bf16.msra.mxu0 0
  %843 = vmatprep.mubr.bf16.mxu0 0
  %844 = vmatmul.mubr.bf16.gmra.mxu0 %v800
  %v845 = vpop.f32.mrf.mxu0
  %v846 = vadd.f32 %v797, %v845
  %v847 = vpop.f32.mrf.mxu0
  %v848 = vpop.f32.mrf.mxu0
  %v849 = vadd.f32 %v797, %v848
  %v850 = vpop.f32.mrf.mxu0
  %851 = vmatprep.mubr.bf16.mxu0 0
  %852 = vmatmul.mubr.bf16.gmra.mxu0 %v803
  %v853 = vpop.f32.mrf.mxu0
  %v854 = vadd.f32 %v797, %v853
  %v855 = vpop.f32.mrf.mxu0
  %v856 = vpop.f32.mrf.mxu0
  %v857 = vadd.f32 %v797, %v856
  %v858 = vpop.f32.mrf.mxu0
  %859 = vmatprep.mubr.bf16.mxu0 0
  %860 = vmatmul.mubr.bf16.gmra.mxu0 %v806
  %v861 = vpop.f32.mrf.mxu0
  %v862 = vadd.f32 %v797, %v861
  %v863 = vpop.f32.mrf.mxu0
  %v864 = vpop.f32.mrf.mxu0
  %v865 = vadd.f32 %v797, %v864
  %v866 = vpop.f32.mrf.mxu0
  %867 = vmatprep.mubr.bf16.mxu0 0
  %868 = vmatmul.mubr.bf16.gmra.mxu0 %v809
  %v869 = vpop.f32.mrf.mxu0
  %v870 = vadd.f32 %v797, %v869
  %v871 = vpop.f32.mrf.mxu0
  %v872 = vpop.f32.mrf.mxu0
  %v873 = vadd.f32 %v797, %v872
  %v874 = vpop.f32.mrf.mxu0
  %875 = vdwg.mxu0
  %v876 = vmax.f32 %v846, 0.0
  %v877 = vmax.f32 %v849, 0.0
  %v878 = vmax.f32 %v854, 0.0
  %v879 = vmax.f32 %v857, 0.0
  %v880 = vmax.f32 %v862, 0.0
  %v881 = vmax.f32 %v865, 0.0
  %v882 = vmax.f32 %v870, 0.0
  %v883 = vmax.f32 %v873, 0.0
  %vm884 = vcmask 7168
  %v885 = vsel %vm884, %v876, -inf
  %v886 = vsel %vm884, %v877, -inf
  %v887 = vsel %vm884, %v878, -inf
  %v888 = vsel %vm884, %v879, -inf
  %v889 = vsel %vm884, %v880, -inf
  %v890 = vmax.f32 %v885, %v889
  %v891 = vsel %vm884, %v881, -inf
  %v892 = vmax.f32 %v886, %v891
  %v893 = vsel %vm884, %v882, -inf
  %v894 = vmax.f32 %v887, %v893
  %v895 = vsel %vm884, %v883, -inf
  %v896 = vmax.f32 %v888, %v895
  %v897 = vmax.f32 %v890, %v892
  %v898 = vmax.f32 %v894, %v896
  %v899 = vmax.f32 %v897, %v898
  %v900 = vsub.f32 %v876, %v899
  %v901 = vsub.f32 %v877, %v899
  %v902 = vsub.f32 %v878, %v899
  %v903 = vsub.f32 %v879, %v899
  %v904 = vsub.f32 %v880, %v899
  %v905 = vsub.f32 %v881, %v899
  %v906 = vsub.f32 %v882, %v899
  %v907 = vsub.f32 %v883, %v899
  %v908 = vmul.f32 %v900, 1.442695
  %v909 = vpow.pop %v908
  %v910 = vmul.f32 %v901, 1.442695
  %v911 = vpow.pop %v910
  %v912 = vmul.f32 %v902, 1.442695
  %v913 = vpow.pop %v912
  %v914 = vmul.f32 %v903, 1.442695
  %v915 = vpow.pop %v914
  %v916 = vmul.f32 %v904, 1.442695
  %v917 = vpow.pop %v916
  %v918 = vmul.f32 %v905, 1.442695
  %v919 = vpow.pop %v918
  %v920 = vmul.f32 %v906, 1.442695
  %v921 = vpow.pop %v920
  %v922 = vmul.f32 %v907, 1.442695
  %v923 = vpow.pop %v922
  %v924 = vsel %vm884, %v909, 0.0
  %v925 = vsel %vm884, %v911, 0.0
  %v926 = vadd.f32 %v924, %v925
  %v927 = vsel %vm884, %v913, 0.0
  %v928 = vadd.f32 %v926, %v927
  %v929 = vsel %vm884, %v915, 0.0
  %v930 = vadd.f32 %v928, %v929
  %v931 = vsel %vm884, %v917, 0.0
  %v932 = vadd.f32 %v930, %v931
  %v933 = vsel %vm884, %v919, 0.0
  %v934 = vadd.f32 %v932, %v933
  %v935 = vsel %vm884, %v921, 0.0
  %v936 = vadd.f32 %v934, %v935
  %v937 = vsel %vm884, %v923, 0.0
  %v938 = vadd.f32 %v936, %v937
  %v939 = vrcp.pop %v938
  %v940 = vmul.f32 %v909, %v939
  %v941 = vmul.f32 %v911, %v939
  %v942 = vmul.f32 %v913, %v939
  %v943 = vmul.f32 %v915, %v939
  %v944 = vmul.f32 %v917, %v939
  %v945 = vmul.f32 %v919, %v939
  %v946 = vmul.f32 %v921, %v939
  %v947 = vmul.f32 %v923, %v939
  %949 = vset.pattern.permute.xlu0 0
  %950 = vperm.xlu0 %949, %v940
  %v951 = vpop.permute.xlu0 %950
  %954 = vset.pattern.permute.xlu0 0
  %955 = vperm.xlu0 %954, %v941
  %v956 = vpop.permute.xlu0 %955
  %959 = vset.pattern.permute.xlu0 0
  %960 = vperm.xlu0 %959, %v942
  %v961 = vpop.permute.xlu0 %960
  %964 = vset.pattern.permute.xlu0 0
  %965 = vperm.xlu0 %964, %v943
  %v966 = vpop.permute.xlu0 %965
  %969 = vset.pattern.permute.xlu0 0
  %970 = vperm.xlu0 %969, %v944
  %v971 = vpop.permute.xlu0 %970
  %974 = vset.pattern.permute.xlu0 0
  %975 = vperm.xlu0 %974, %v945
  %v976 = vpop.permute.xlu0 %975
  %979 = vset.pattern.permute.xlu0 0
  %980 = vperm.xlu0 %979, %v946
  %v981 = vpop.permute.xlu0 %980
  %984 = vset.pattern.permute.xlu0 0
  %985 = vperm.xlu0 %984, %v947
  %v986 = vpop.permute.xlu0 %985
  %v988 = vmul.f32 %v951, %v768
  %v989 = vmul.f32 %v956, %v769
  %v990 = vmul.f32 %v961, %v770
  %v991 = vmul.f32 %v966, %v771
  %v992 = vmul.f32 %v971, %v772
  %v993 = vmul.f32 %v976, %v773
  %v994 = vmul.f32 %v981, %v774
  %v995 = vmul.f32 %v986, %v775
  %v996 = vsel %vm89, %v988, 0.0
  %v997 = vsel %vm89, %v989, 0.0
  %v998 = vadd.f32 %v996, %v997
  %v999 = vsel %vm89, %v990, 0.0
  %v1000 = vadd.f32 %v998, %v999
  %v1001 = vsel %vm89, %v991, 0.0
  %v1002 = vadd.f32 %v1000, %v1001
  %v1003 = vsel %vm89, %v992, 0.0
  %v1004 = vadd.f32 %v1002, %v1003
  %v1005 = vsel %vm89, %v993, 0.0
  %v1006 = vadd.f32 %v1004, %v1005
  %v1007 = vsel %vm89, %v994, 0.0
  %v1008 = vadd.f32 %v1006, %v1007
  %v1009 = vsel %vm89, %v995, 0.0
  %v1010 = vadd.f32 %v1008, %v1009
  %v1011 = vld [vmem:[%s9] sm:$0xff]
  %v1012 = vld [vmem:[%s9 + $0x8] sm:$0xff]
  %v1013 = vld [vmem:[%s9 + $0x10] sm:$0xff]
  %v1014 = vld [vmem:[%s9 + $0x18] sm:$0xff]
  %v1015 = vld [vmem:[%s9 + $0x20] sm:$0xff]
  %v1016 = vld [vmem:[%s9 + $0x28] sm:$0xff]
  %v1017 = vld [vmem:[%s9 + $0x30] sm:$0xff]
  %v1018 = vld [vmem:[%s9 + $0x38] sm:$0xff]
  %v1019 = vpack.c.bf16 %v1010, %v1010
  %v1020 = vpack.c.bf16 %v1012, %v1011
  %v1021 = vpack.c.bf16 %v1014, %v1013
  %v1022 = vpack.c.bf16 %v1016, %v1015
  %v1023 = vpack.c.bf16 %v1018, %v1017
  %v1024 = vld [vmem:[%s10] sm:$0x1]
  %v1026 = vlaneseq
  %v1027 = vshrl.u32 %v1026, 7
  %v1028 = vsub.s32 0, %v1027
  %v1029 = vrot.slane %v1024, %v1028
  %v1032 = vsel %vm89, %v1019, 0
  %1034 = vmatprep.subr.bf16.mxu0 0
  %1035 = vmatpush1.bf16.msra.mxu0 0
  %1036 = vmatprep.subr.bf16.mxu0 0
  %1037 = vmatpush1.bf16.msra.mxu0 0
  %1038 = vmatprep.subr.bf16.mxu0 0
  %1039 = vmatpush1.bf16.msra.mxu0 0
  %1040 = vmatprep.subr.bf16.mxu0 0
  %1041 = vmatpush1.bf16.msra.mxu0 0
  %1042 = vmatprep.subr.bf16.mxu0 0
  %1043 = vmatpush1.bf16.msra.mxu0 %v1023
  %1044 = vmatprep.subr.bf16.mxu0 0
  %1045 = vmatpush1.bf16.msra.mxu0 %v1022
  %1046 = vmatprep.subr.bf16.mxu0 0
  %1047 = vmatpush1.bf16.msra.mxu0 %v1021
  %1048 = vmatprep.subr.bf16.mxu0 0
  %1049 = vmatpush1.bf16.msra.mxu0 %v1020
  %1050 = vmatprep.subr.bf16.mxu0 0
  %1051 = vmatpush2.bf16.msra.mxu0 0
  %1052 = vmatprep.subr.bf16.mxu0 0
  %1053 = vmatpush2.bf16.msra.mxu0 0
  %1054 = vmatprep.subr.bf16.mxu0 0
  %1055 = vmatpush2.bf16.msra.mxu0 0
  %1056 = vmatprep.subr.bf16.mxu0 0
  %1057 = vmatpush2.bf16.msra.mxu0 0
  %1058 = vmatprep.subr.bf16.mxu0 0
  %1059 = vmatpush2.bf16.msra.mxu0 0
  %1060 = vmatprep.subr.bf16.mxu0 0
  %1061 = vmatpush2.bf16.msra.mxu0 0
  %1062 = vmatprep.subr.bf16.mxu0 0
  %1063 = vmatpush2.bf16.msra.mxu0 0
  %1064 = vmatprep.subr.bf16.mxu0 0
  %1065 = vmatpush2.bf16.msra.mxu0 0
  %1066 = vmatprep.mubr.bf16.mxu0 0
  %1067 = vmatmul.mubr.bf16.gmra.mxu0 %v1032
  %v1068 = vpop.f32.mrf.mxu0
  %v1069 = vadd.f32 %v1029, %v1068
  %v1070 = vpop.f32.mrf.mxu0
  %v1071 = vpop.f32.mrf.mxu0
  %v1072 = vpop.f32.mrf.mxu0
  %1073 = vdwg.mxu0
  %vm1074 = vcmask 80896
  %1075 = vst.msk [vmem:[%s11] sm:$0xff] %vm1074, %v1069
  // Predicated region
  $region60: #{pstin_forward.3} parent=0 // pred_check
    _
  $region61: #{pstin_forward.3} parent=0 // pred_check_branch
    %1077 = sbr.rel (0) target = $region63
  $region62: #{pstin_forward.3} parent=0 // pred_region
    _
  $region63: #{pstin_forward.3} parent=0 // pred_fallthru
    _
  // Predicated region
  $region64: #{pstin_forward.3} parent=0 // pred_check
    _
  $region65: #{pstin_forward.3} parent=0 // pred_check_branch
    %1079 = sbr.rel (0) target = $region67
  $region66: #{pstin_forward.3} parent=0 // pred_region
    _
  $region67: #{pstin_forward.3} parent=0 // pred_fallthru
    _

// kernel: pstin_forward.2
$region0: #{pstin_forward.2}
  #allocation0 [shape = 'u32[]', space=smem, size = 0x4, offset = 0x4, fixed_abs, tag = 'smem constant byte address 0x4 - core index']
  #allocation1 [shape = 'u32[144,128]{1,0:T(1,128)}', space=vmem, size = 0x12000, scoped, tag = 'internal scratch']
  %s0 = inlined_call_operand.vmem [shape: f32[4,400], index: 0, kind: input, shape index: {}]
  %s1 = inlined_call_operand.vmem [shape: f32[16,4], index: 1, kind: input, shape index: {}]
  %s2 = inlined_call_operand.vmem [shape: f32[32,4], index: 2, kind: input, shape index: {}]
  %s3 = inlined_call_operand.vmem [shape: f32[32,1], index: 3, kind: input, shape index: {}]
  %s4 = inlined_call_operand.vmem [shape: f32[64,32], index: 4, kind: input, shape index: {}]
  %s5 = inlined_call_operand.vmem [shape: f32[64,1], index: 5, kind: input, shape index: {}]
  %s6 = inlined_call_operand.vmem [shape: f32[80,64], index: 6, kind: input, shape index: {}]
  %s7 = inlined_call_operand.vmem [shape: f32[80,1], index: 7, kind: input, shape index: {}]
  %s8 = inlined_call_operand.vmem [shape: f32[4,32], index: 8, kind: input, shape index: {}]
  %s9 = inlined_call_operand.vmem [shape: f32[1,32], index: 9, kind: input, shape index: {}]
  %s10 = inlined_call_operand.vmem [shape: f32[32,64], index: 10, kind: input, shape index: {}]
  %s11 = inlined_call_operand.vmem [shape: f32[1,64], index: 11, kind: input, shape index: {}]
  %s12 = inlined_call_operand.vmem [shape: f32[64,16], index: 12, kind: input, shape index: {}]
  %s13 = inlined_call_operand.vmem [shape: f32[1,16], index: 13, kind: input, shape index: {}]
  %s14 = inlined_call_operand.vmem [shape: f32[16,64], index: 14, kind: output, shape index: {}]
  %s15 = sld [smem:[#allocation0]]
  $region66: #{pstin_forward.2} parent=0
    _
  %s17 = ssub.s32 1, %s15
  %s18 = scalar_select 0, %s17, %s15
  // Predicated region
  $region2: #{pstin_forward.2} parent=0 // pred_check
    _
  $region3: #{pstin_forward.2} parent=0 // pred_check_branch
    %20 = sbr.rel (0) target = $region5
  $region4: #{pstin_forward.2} parent=0 // pred_region
    _
  $region5: #{pstin_forward.2} parent=0 // pred_fallthru
    _
  // Predicated region
  $region6: #{pstin_forward.2} parent=0 // pred_check
    _
  $region7: #{pstin_forward.2} parent=0 // pred_check_branch
    %22 = sbr.rel (0) target = $region9
  $region8: #{pstin_forward.2} parent=0 // pred_region
    _
  $region9: #{pstin_forward.2} parent=0 // pred_fallthru
    _
  // Predicated region
  $region10: #{pstin_forward.2} parent=0 // pred_check
    _
  $region11: #{pstin_forward.2} parent=0 // pred_check_branch
    %24 = sbr.rel (0) target = $region13
  $region12: #{pstin_forward.2} parent=0 // pred_region
    _
  $region13: #{pstin_forward.2} parent=0 // pred_fallthru
    _
  // Predicated region
  $region14: #{pstin_forward.2} parent=0 // pred_check
    _
  $region15: #{pstin_forward.2} parent=0 // pred_check_branch
    %26 = sbr.rel (0) target = $region17
  $region16: #{pstin_forward.2} parent=0 // pred_region
    _
  $region17: #{pstin_forward.2} parent=0 // pred_fallthru
    _
  // Predicated region
  $region18: #{pstin_forward.2} parent=0 // pred_check
    _
  $region19: #{pstin_forward.2} parent=0 // pred_check_branch
    %28 = sbr.rel (0) target = $region21
  $region20: #{pstin_forward.2} parent=0 // pred_region
    _
  $region21: #{pstin_forward.2} parent=0 // pred_fallthru
    _
  // Predicated region
  $region22: #{pstin_forward.2} parent=0 // pred_check
    _
  $region23: #{pstin_forward.2} parent=0 // pred_check_branch
    %30 = sbr.rel (0) target = $region25
  $region24: #{pstin_forward.2} parent=0 // pred_region
    _
  $region25: #{pstin_forward.2} parent=0 // pred_fallthru
    _
  // Predicated region
  $region26: #{pstin_forward.2} parent=0 // pred_check
    _
  $region27: #{pstin_forward.2} parent=0 // pred_check_branch
    %32 = sbr.rel (0) target = $region29
  $region28: #{pstin_forward.2} parent=0 // pred_region
    _
  $region29: #{pstin_forward.2} parent=0 // pred_fallthru
    _
  // Predicated region
  $region30: #{pstin_forward.2} parent=0 // pred_check
    _
  $region31: #{pstin_forward.2} parent=0 // pred_check_branch
    %34 = sbr.rel (0) target = $region33
  $region32: #{pstin_forward.2} parent=0 // pred_region
    _
  $region33: #{pstin_forward.2} parent=0 // pred_fallthru
    _
  // Predicated region
  $region34: #{pstin_forward.2} parent=0 // pred_check
    _
  $region35: #{pstin_forward.2} parent=0 // pred_check_branch
    %36 = sbr.rel (0) target = $region37
  $region36: #{pstin_forward.2} parent=0 // pred_region
    _
  $region37: #{pstin_forward.2} parent=0 // pred_fallthru
    _
  // Predicated region
  $region38: #{pstin_forward.2} parent=0 // pred_check
    _
  $region39: #{pstin_forward.2} parent=0 // pred_check_branch
    %38 = sbr.rel (0) target = $region41
  $region40: #{pstin_forward.2} parent=0 // pred_region
    _
  $region41: #{pstin_forward.2} parent=0 // pred_fallthru
    _
  // Predicated region
  $region42: #{pstin_forward.2} parent=0 // pred_check
    _
  $region43: #{pstin_forward.2} parent=0 // pred_check_branch
    %40 = sbr.rel (0) target = $region45
  $region44: #{pstin_forward.2} parent=0 // pred_region
    _
  $region45: #{pstin_forward.2} parent=0 // pred_fallthru
    _
  // Predicated region
  $region46: #{pstin_forward.2} parent=0 // pred_check
    _
  $region47: #{pstin_forward.2} parent=0 // pred_check_branch
    %42 = sbr.rel (0) target = $region49
  $region48: #{pstin_forward.2} parent=0 // pred_region
    _
  $region49: #{pstin_forward.2} parent=0 // pred_fallthru
    _
  // Predicated region
  $region50: #{pstin_forward.2} parent=0 // pred_check
    _
  $region51: #{pstin_forward.2} parent=0 // pred_check_branch
    %44 = sbr.rel (0) target = $region53
  $region52: #{pstin_forward.2} parent=0 // pred_region
    _
  $region53: #{pstin_forward.2} parent=0 // pred_fallthru
    _
  // Predicated region
  $region54: #{pstin_forward.2} parent=0 // pred_check
    _
  $region55: #{pstin_forward.2} parent=0 // pred_check_branch
    %46 = sbr.rel (0) target = $region57
  $region56: #{pstin_forward.2} parent=0 // pred_region
    _
  $region57: #{pstin_forward.2} parent=0 // pred_fallthru
    _
  %v48 = vld [vmem:[%s0] sm:$0xff]
  %v49 = vld [vmem:[%s0 + $0x8] sm:$0xff]
  %v50 = vld [vmem:[%s2] sm:$0xff]
  %v51 = vld [vmem:[%s2 + $0x8] sm:$0xff]
  %v52 = vld [vmem:[%s2 + $0x10] sm:$0xff]
  %v53 = vld [vmem:[%s2 + $0x18] sm:$0xff]
  %v54 = vpack.c.bf16 %v51, %v50
  %v55 = vpack.c.bf16 %v53, %v52
  %v58 = vcombine.high %v48, %v48
  %v59 = vcombine.high %v49, %v49
  %v62 = vpack.c.bf16 %v48, %v48
  %v63 = vpack.c.bf16 %v58, %v58
  %v64 = vpack.c.bf16 %v49, %v49
  %v65 = vpack.c.bf16 %v59, %v59
  %v66 = vld [vmem:[%s3] sm:$0xff]
  %v67 = vld [vmem:[%s3 + $0x8] sm:$0xff]
  %v68 = vld [vmem:[%s3 + $0x10] sm:$0xff]
  %v69 = vld [vmem:[%s3 + $0x18] sm:$0xff]
  %71 = vset.pattern.permute.xlu0 0
  %72 = vperm.xlu0 %71, %v66
  %v73 = vpop.permute.xlu0 %72
  %76 = vset.pattern.permute.xlu0 0
  %77 = vperm.xlu0 %76, %v67
  %v78 = vpop.permute.xlu0 %77
  %81 = vset.pattern.permute.xlu0 0
  %82 = vperm.xlu0 %81, %v68
  %v83 = vpop.permute.xlu0 %82
  %86 = vset.pattern.permute.xlu0 0
  %87 = vperm.xlu0 %86, %v69
  %v88 = vpop.permute.xlu0 %87
  %vm90 = vcmask 31744
  %v92 = vsel %vm90, %v54, 0
  %v95 = vsel %vm90, %v55, 0
  %vm97 = vcmask 1041408
  %v99 = vsel %vm97, %v62, 0
  %v102 = vsel %vm97, %v63, 0
  %v105 = vsel %vm97, %v64, 0
  %v108 = vsel %vm97, %v65, 0
  %110 = vmatprep.subr.bf16.mxu0 0
  %111 = vmatpush1.bf16.msra.mxu0 0
  %112 = vmatprep.subr.bf16.mxu0 0
  %113 = vmatpush1.bf16.msra.mxu0 0
  %114 = vmatprep.subr.bf16.mxu0 0
  %115 = vmatpush1.bf16.msra.mxu0 0
  %116 = vmatprep.subr.bf16.mxu0 0
  %117 = vmatpush1.bf16.msra.mxu0 0
  %118 = vmatprep.subr.bf16.mxu0 0
  %119 = vmatpush1.bf16.msra.mxu0 0
  %120 = vmatprep.subr.bf16.mxu0 0
  %121 = vmatpush1.bf16.msra.mxu0 0
  %122 = vmatprep.subr.bf16.mxu0 0
  %123 = vmatpush1.bf16.msra.mxu0 0
  %124 = vmatprep.subr.bf16.mxu0 %v102
  %125 = vmatpush1.bf16.msra.mxu0 %v99
  %126 = vmatprep.subr.bf16.mxu0 0
  %127 = vmatpush2.bf16.msra.mxu0 0
  %128 = vmatprep.subr.bf16.mxu0 0
  %129 = vmatpush2.bf16.msra.mxu0 0
  %130 = vmatprep.subr.bf16.mxu0 0
  %131 = vmatpush2.bf16.msra.mxu0 0
  %132 = vmatprep.subr.bf16.mxu0 0
  %133 = vmatpush2.bf16.msra.mxu0 0
  %134 = vmatprep.subr.bf16.mxu0 0
  %135 = vmatpush2.bf16.msra.mxu0 0
  %136 = vmatprep.subr.bf16.mxu0 0
  %137 = vmatpush2.bf16.msra.mxu0 0
  %138 = vmatprep.subr.bf16.mxu0 0
  %139 = vmatpush2.bf16.msra.mxu0 0
  %140 = vmatprep.subr.bf16.mxu0 0
  %141 = vmatpush2.bf16.msra.mxu0 0
  %142 = vmatprep.mubr.bf16.mxu0 0
  %143 = vmatmul.mubr.bf16.gmra.mxu0 %v92
  %v144 = vpop.f32.mrf.mxu0
  %v145 = vadd.f32 %v73, %v144
  %v146 = vpop.f32.mrf.mxu0
  %v147 = vadd.f32 %v73, %v146
  %v148 = vpop.f32.mrf.mxu0
  %v149 = vadd.f32 %v78, %v148
  %v150 = vpop.f32.mrf.mxu0
  %v151 = vadd.f32 %v78, %v150
  %152 = vmatprep.mubr.bf16.mxu0 0
  %153 = vmatmul.mubr.bf16.gmra.mxu0 %v95
  %v154 = vpop.f32.mrf.mxu0
  %v155 = vadd.f32 %v83, %v154
  %v156 = vpop.f32.mrf.mxu0
  %v157 = vadd.f32 %v83, %v156
  %v158 = vpop.f32.mrf.mxu0
  %v159 = vadd.f32 %v88, %v158
  %v160 = vpop.f32.mrf.mxu0
  %v161 = vadd.f32 %v88, %v160
  %162 = vdwg.mxu0
  %163 = vmatprep.subr.bf16.mxu0 0
  %164 = vmatpush1.bf16.msra.mxu0 0
  %165 = vmatprep.subr.bf16.mxu0 0
  %166 = vmatpush1.bf16.msra.mxu0 0
  %167 = vmatprep.subr.bf16.mxu0 0
  %168 = vmatpush1.bf16.msra.mxu0 0
  %169 = vmatprep.subr.bf16.mxu0 0
  %170 = vmatpush1.bf16.msra.mxu0 0
  %171 = vmatprep.subr.bf16.mxu0 0
  %172 = vmatpush1.bf16.msra.mxu0 0
  %173 = vmatprep.subr.bf16.mxu0 0
  %174 = vmatpush1.bf16.msra.mxu0 0
  %175 = vmatprep.subr.bf16.mxu0 0
  %176 = vmatpush1.bf16.msra.mxu0 0
  %177 = vmatprep.subr.bf16.mxu0 %v108
  %178 = vmatpush1.bf16.msra.mxu0 %v105
  %179 = vmatprep.subr.bf16.mxu0 0
  %180 = vmatpush2.bf16.msra.mxu0 0
  %181 = vmatprep.subr.bf16.mxu0 0
  %182 = vmatpush2.bf16.msra.mxu0 0
  %183 = vmatprep.subr.bf16.mxu0 0
  %184 = vmatpush2.bf16.msra.mxu0 0
  %185 = vmatprep.subr.bf16.mxu0 0
  %186 = vmatpush2.bf16.msra.mxu0 0
  %187 = vmatprep.subr.bf16.mxu0 0
  %188 = vmatpush2.bf16.msra.mxu0 0
  %189 = vmatprep.subr.bf16.mxu0 0
  %190 = vmatpush2.bf16.msra.mxu0 0
  %191 = vmatprep.subr.bf16.mxu0 0
  %192 = vmatpush2.bf16.msra.mxu0 0
  %193 = vmatprep.subr.bf16.mxu0 0
  %194 = vmatpush2.bf16.msra.mxu0 0
  %195 = vmatprep.mubr.bf16.mxu0 0
  %196 = vmatmul.mubr.bf16.gmra.mxu0 %v92
  %v197 = vpop.f32.mrf.mxu0
  %v198 = vadd.f32 %v73, %v197
  %v199 = vpop.f32.mrf.mxu0
  %v200 = vadd.f32 %v73, %v199
  %v201 = vpop.f32.mrf.mxu0
  %v202 = vadd.f32 %v78, %v201
  %v203 = vpop.f32.mrf.mxu0
  %v204 = vadd.f32 %v78, %v203
  %205 = vmatprep.mubr.bf16.mxu0 0
  %206 = vmatmul.mubr.bf16.gmra.mxu0 %v95
  %v207 = vpop.f32.mrf.mxu0
  %v208 = vadd.f32 %v83, %v207
  %v209 = vpop.f32.mrf.mxu0
  %v210 = vadd.f32 %v83, %v209
  %v211 = vpop.f32.mrf.mxu0
  %v212 = vadd.f32 %v88, %v211
  %v213 = vpop.f32.mrf.mxu0
  %v214 = vadd.f32 %v88, %v213
  %215 = vdwg.mxu0
  %v216 = vmax.f32 %v145, 0.0
  %v217 = vmax.f32 %v147, 0.0
  %v218 = vmax.f32 %v198, 0.0
  %v219 = vmax.f32 %v200, 0.0
  %v220 = vmax.f32 %v149, 0.0
  %v221 = vmax.f32 %v151, 0.0
  %v222 = vmax.f32 %v202, 0.0
  %v223 = vmax.f32 %v204, 0.0
  %v224 = vmax.f32 %v155, 0.0
  %v225 = vmax.f32 %v157, 0.0
  %v226 = vmax.f32 %v208, 0.0
  %v227 = vmax.f32 %v210, 0.0
  %v228 = vmax.f32 %v159, 0.0
  %v229 = vmax.f32 %v161, 0.0
  %v230 = vmax.f32 %v212, 0.0
  %v231 = vmax.f32 %v214, 0.0
  %v232 = vld [vmem:[%s4] sm:$0xff]
  %v233 = vld [vmem:[%s4 + $0x8] sm:$0xff]
  %v234 = vld [vmem:[%s4 + $0x10] sm:$0xff]
  %v235 = vld [vmem:[%s4 + $0x18] sm:$0xff]
  %v236 = vld [vmem:[%s4 + $0x20] sm:$0xff]
  %v237 = vld [vmem:[%s4 + $0x28] sm:$0xff]
  %v238 = vld [vmem:[%s4 + $0x30] sm:$0xff]
  %v239 = vld [vmem:[%s4 + $0x38] sm:$0xff]
  %v240 = vpack.c.bf16 %v233, %v232
  %v241 = vpack.c.bf16 %v235, %v234
  %v242 = vpack.c.bf16 %v237, %v236
  %v243 = vpack.c.bf16 %v239, %v238
  %v244 = vpack.c.bf16 %v220, %v216
  %v245 = vpack.c.bf16 %v221, %v217
  %v246 = vpack.c.bf16 %v222, %v218
  %v247 = vpack.c.bf16 %v223, %v219
  %v248 = vpack.c.bf16 %v228, %v224
  %v249 = vpack.c.bf16 %v229, %v225
  %v250 = vpack.c.bf16 %v230, %v226
  %v251 = vpack.c.bf16 %v231, %v227
  %v252 = vld [vmem:[%s5] sm:$0xff]
  %v253 = vld [vmem:[%s5 + $0x8] sm:$0xff]
  %v254 = vld [vmem:[%s5 + $0x10] sm:$0xff]
  %v255 = vld [vmem:[%s5 + $0x18] sm:$0xff]
  %v256 = vld [vmem:[%s5 + $0x20] sm:$0xff]
  %v257 = vld [vmem:[%s5 + $0x28] sm:$0xff]
  %v258 = vld [vmem:[%s5 + $0x30] sm:$0xff]
  %v259 = vld [vmem:[%s5 + $0x38] sm:$0xff]
  %261 = vset.pattern.permute.xlu0 0
  %262 = vperm.xlu0 %261, %v252
  %v263 = vpop.permute.xlu0 %262
  %266 = vset.pattern.permute.xlu0 0
  %267 = vperm.xlu0 %266, %v253
  %v268 = vpop.permute.xlu0 %267
  %271 = vset.pattern.permute.xlu0 0
  %272 = vperm.xlu0 %271, %v254
  %v273 = vpop.permute.xlu0 %272
  %276 = vset.pattern.permute.xlu0 0
  %277 = vperm.xlu0 %276, %v255
  %v278 = vpop.permute.xlu0 %277
  %281 = vset.pattern.permute.xlu0 0
  %282 = vperm.xlu0 %281, %v256
  %v283 = vpop.permute.xlu0 %282
  %286 = vset.pattern.permute.xlu0 0
  %287 = vperm.xlu0 %286, %v257
  %v288 = vpop.permute.xlu0 %287
  %291 = vset.pattern.permute.xlu0 0
  %292 = vperm.xlu0 %291, %v258
  %v293 = vpop.permute.xlu0 %292
  %296 = vset.pattern.permute.xlu0 0
  %297 = vperm.xlu0 %296, %v259
  %v298 = vpop.permute.xlu0 %297
  %vm300 = vcmask 261120
  %v302 = vsel %vm300, %v240, 0
  %v305 = vsel %vm300, %v241, 0
  %v308 = vsel %vm300, %v242, 0
  %v311 = vsel %vm300, %v243, 0
  %313 = vmatprep.subr.bf16.mxu0 0
  %314 = vmatpush1.bf16.msra.mxu0 0
  %315 = vmatprep.subr.bf16.mxu0 0
  %316 = vmatpush1.bf16.msra.mxu0 0
  %317 = vmatprep.subr.bf16.mxu0 0
  %318 = vmatpush1.bf16.msra.mxu0 0
  %319 = vmatprep.subr.bf16.mxu0 0
  %320 = vmatpush1.bf16.msra.mxu0 0
  %321 = vmatprep.subr.bf16.mxu0 0
  %322 = vmatpush1.bf16.msra.mxu0 0
  %323 = vmatprep.subr.bf16.mxu0 0
  %324 = vmatpush1.bf16.msra.mxu0 0
  %325 = vmatprep.subr.bf16.mxu0 %v249
  %326 = vmatpush1.bf16.msra.mxu0 %v248
  %327 = vmatprep.subr.bf16.mxu0 %v245
  %328 = vmatpush1.bf16.msra.mxu0 %v244
  %329 = vmatprep.subr.bf16.mxu0 0
  %330 = vmatpush2.bf16.msra.mxu0 0
  %331 = vmatprep.subr.bf16.mxu0 0
  %332 = vmatpush2.bf16.msra.mxu0 0
  %333 = vmatprep.subr.bf16.mxu0 0
  %334 = vmatpush2.bf16.msra.mxu0 0
  %335 = vmatprep.subr.bf16.mxu0 0
  %336 = vmatpush2.bf16.msra.mxu0 0
  %337 = vmatprep.subr.bf16.mxu0 0
  %338 = vmatpush2.bf16.msra.mxu0 0
  %339 = vmatprep.subr.bf16.mxu0 0
  %340 = vmatpush2.bf16.msra.mxu0 0
  %341 = vmatprep.subr.bf16.mxu0 0
  %342 = vmatpush2.bf16.msra.mxu0 0
  %343 = vmatprep.subr.bf16.mxu0 0
  %344 = vmatpush2.bf16.msra.mxu0 0
  %345 = vmatprep.mubr.bf16.mxu0 0
  %346 = vmatmul.mubr.bf16.gmra.mxu0 %v302
  %v347 = vpop.f32.mrf.mxu0
  %v348 = vadd.f32 %v263, %v347
  %v349 = vpop.f32.mrf.mxu0
  %v350 = vadd.f32 %v263, %v349
  %v351 = vpop.f32.mrf.mxu0
  %v352 = vadd.f32 %v268, %v351
  %v353 = vpop.f32.mrf.mxu0
  %v354 = vadd.f32 %v268, %v353
  %355 = vmatprep.mubr.bf16.mxu0 0
  %356 = vmatmul.mubr.bf16.gmra.mxu0 %v305
  %v357 = vpop.f32.mrf.mxu0
  %v358 = vadd.f32 %v273, %v357
  %v359 = vpop.f32.mrf.mxu0
  %v360 = vadd.f32 %v273, %v359
  %v361 = vpop.f32.mrf.mxu0
  %v362 = vadd.f32 %v278, %v361
  %v363 = vpop.f32.mrf.mxu0
  %v364 = vadd.f32 %v278, %v363
  %365 = vmatprep.mubr.bf16.mxu0 0
  %366 = vmatmul.mubr.bf16.gmra.mxu0 %v308
  %v367 = vpop.f32.mrf.mxu0
  %v368 = vadd.f32 %v283, %v367
  %v369 = vpop.f32.mrf.mxu0
  %v370 = vadd.f32 %v283, %v369
  %v371 = vpop.f32.mrf.mxu0
  %v372 = vadd.f32 %v288, %v371
  %v373 = vpop.f32.mrf.mxu0
  %v374 = vadd.f32 %v288, %v373
  %375 = vmatprep.mubr.bf16.mxu0 0
  %376 = vmatmul.mubr.bf16.gmra.mxu0 %v311
  %v377 = vpop.f32.mrf.mxu0
  %v378 = vadd.f32 %v293, %v377
  %v379 = vpop.f32.mrf.mxu0
  %v380 = vadd.f32 %v293, %v379
  %v381 = vpop.f32.mrf.mxu0
  %v382 = vadd.f32 %v298, %v381
  %v383 = vpop.f32.mrf.mxu0
  %v384 = vadd.f32 %v298, %v383
  %385 = vdwg.mxu0
  %386 = vmatprep.subr.bf16.mxu0 0
  %387 = vmatpush1.bf16.msra.mxu0 0
  %388 = vmatprep.subr.bf16.mxu0 0
  %389 = vmatpush1.bf16.msra.mxu0 0
  %390 = vmatprep.subr.bf16.mxu0 0
  %391 = vmatpush1.bf16.msra.mxu0 0
  %392 = vmatprep.subr.bf16.mxu0 0
  %393 = vmatpush1.bf16.msra.mxu0 0
  %394 = vmatprep.subr.bf16.mxu0 0
  %395 = vmatpush1.bf16.msra.mxu0 0
  %396 = vmatprep.subr.bf16.mxu0 0
  %397 = vmatpush1.bf16.msra.mxu0 0
  %398 = vmatprep.subr.bf16.mxu0 %v251
  %399 = vmatpush1.bf16.msra.mxu0 %v250
  %400 = vmatprep.subr.bf16.mxu0 %v247
  %401 = vmatpush1.bf16.msra.mxu0 %v246
  %402 = vmatprep.subr.bf16.mxu0 0
  %403 = vmatpush2.bf16.msra.mxu0 0
  %404 = vmatprep.subr.bf16.mxu0 0
  %405 = vmatpush2.bf16.msra.mxu0 0
  %406 = vmatprep.subr.bf16.mxu0 0
  %407 = vmatpush2.bf16.msra.mxu0 0
  %408 = vmatprep.subr.bf16.mxu0 0
  %409 = vmatpush2.bf16.msra.mxu0 0
  %410 = vmatprep.subr.bf16.mxu0 0
  %411 = vmatpush2.bf16.msra.mxu0 0
  %412 = vmatprep.subr.bf16.mxu0 0
  %413 = vmatpush2.bf16.msra.mxu0 0
  %414 = vmatprep.subr.bf16.mxu0 0
  %415 = vmatpush2.bf16.msra.mxu0 0
  %416 = vmatprep.subr.bf16.mxu0 0
  %417 = vmatpush2.bf16.msra.mxu0 0
  %418 = vmatprep.mubr.bf16.mxu0 0
  %419 = vmatmul.mubr.bf16.gmra.mxu0 %v302
  %v420 = vpop.f32.mrf.mxu0
  %v421 = vadd.f32 %v263, %v420
  %v422 = vpop.f32.mrf.mxu0
  %v423 = vadd.f32 %v263, %v422
  %v424 = vpop.f32.mrf.mxu0
  %v425 = vadd.f32 %v268, %v424
  %v426 = vpop.f32.mrf.mxu0
  %v427 = vadd.f32 %v268, %v426
  %428 = vmatprep.mubr.bf16.mxu0 0
  %429 = vmatmul.mubr.bf16.gmra.mxu0 %v305
  %v430 = vpop.f32.mrf.mxu0
  %v431 = vadd.f32 %v273, %v430
  %v432 = vpop.f32.mrf.mxu0
  %v433 = vadd.f32 %v273, %v432
  %v434 = vpop.f32.mrf.mxu0
  %v435 = vadd.f32 %v278, %v434
  %v436 = vpop.f32.mrf.mxu0
  %v437 = vadd.f32 %v278, %v436
  %438 = vmatprep.mubr.bf16.mxu0 0
  %439 = vmatmul.mubr.bf16.gmra.mxu0 %v308
  %v440 = vpop.f32.mrf.mxu0
  %v441 = vadd.f32 %v283, %v440
  %v442 = vpop.f32.mrf.mxu0
  %v443 = vadd.f32 %v283, %v442
  %v444 = vpop.f32.mrf.mxu0
  %v445 = vadd.f32 %v288, %v444
  %v446 = vpop.f32.mrf.mxu0
  %v447 = vadd.f32 %v288, %v446
  %448 = vmatprep.mubr.bf16.mxu0 0
  %449 = vmatmul.mubr.bf16.gmra.mxu0 %v311
  %v450 = vpop.f32.mrf.mxu0
  %v451 = vadd.f32 %v293, %v450
  %v452 = vpop.f32.mrf.mxu0
  %v453 = vadd.f32 %v293, %v452
  %v454 = vpop.f32.mrf.mxu0
  %v455 = vadd.f32 %v298, %v454
  %v456 = vpop.f32.mrf.mxu0
  %v457 = vadd.f32 %v298, %v456
  %458 = vdwg.mxu0
  %v459 = vmax.f32 %v348, 0.0
  %v460 = vmax.f32 %v350, 0.0
  %v461 = vmax.f32 %v421, 0.0
  %v462 = vmax.f32 %v423, 0.0
  %v463 = vmax.f32 %v352, 0.0
  %v464 = vmax.f32 %v354, 0.0
  %v465 = vmax.f32 %v425, 0.0
  %v466 = vmax.f32 %v427, 0.0
  %v467 = vmax.f32 %v358, 0.0
  %v468 = vmax.f32 %v360, 0.0
  %v469 = vmax.f32 %v431, 0.0
  %v470 = vmax.f32 %v433, 0.0
  %v471 = vmax.f32 %v362, 0.0
  %v472 = vmax.f32 %v364, 0.0
  %v473 = vmax.f32 %v435, 0.0
  %v474 = vmax.f32 %v437, 0.0
  %v475 = vmax.f32 %v368, 0.0
  %v476 = vmax.f32 %v370, 0.0
  %v477 = vmax.f32 %v441, 0.0
  %v478 = vmax.f32 %v443, 0.0
  %v479 = vmax.f32 %v372, 0.0
  %v480 = vmax.f32 %v374, 0.0
  %v481 = vmax.f32 %v445, 0.0
  %v482 = vmax.f32 %v447, 0.0
  %v483 = vmax.f32 %v378, 0.0
  %v484 = vmax.f32 %v380, 0.0
  %v485 = vmax.f32 %v451, 0.0
  %v486 = vmax.f32 %v453, 0.0
  %v487 = vmax.f32 %v382, 0.0
  %v488 = vmax.f32 %v384, 0.0
  %v489 = vmax.f32 %v455, 0.0
  %v490 = vmax.f32 %v457, 0.0
  %v491 = vld [vmem:[%s6] sm:$0xff]
  %v492 = vld [vmem:[%s6 + $0x8] sm:$0xff]
  %v493 = vld [vmem:[%s6 + $0x10] sm:$0xff]
  %v494 = vld [vmem:[%s6 + $0x18] sm:$0xff]
  %v495 = vld [vmem:[%s6 + $0x20] sm:$0xff]
  %v496 = vld [vmem:[%s6 + $0x28] sm:$0xff]
  %v497 = vld [vmem:[%s6 + $0x30] sm:$0xff]
  %v498 = vld [vmem:[%s6 + $0x38] sm:$0xff]
  %v499 = vld [vmem:[%s6 + $0x40] sm:$0xff]
  %v500 = vld [vmem:[%s6 + $0x48] sm:$0xff]
  %v501 = vpack.c.bf16 %v492, %v491
  %v502 = vpack.c.bf16 %v494, %v493
  %v503 = vpack.c.bf16 %v496, %v495
  %v504 = vpack.c.bf16 %v498, %v497
  %v505 = vpack.c.bf16 %v500, %v499
  %v506 = vpack.c.bf16 %v463, %v459
  %v507 = vpack.c.bf16 %v464, %v460
  %v508 = vpack.c.bf16 %v465, %v461
  %v509 = vpack.c.bf16 %v466, %v462
  %v510 = vpack.c.bf16 %v471, %v467
  %v511 = vpack.c.bf16 %v472, %v468
  %v512 = vpack.c.bf16 %v473, %v469
  %v513 = vpack.c.bf16 %v474, %v470
  %v514 = vpack.c.bf16 %v479, %v475
  %v515 = vpack.c.bf16 %v480, %v476
  %v516 = vpack.c.bf16 %v481, %v477
  %v517 = vpack.c.bf16 %v482, %v478
  %v518 = vpack.c.bf16 %v487, %v483
  %v519 = vpack.c.bf16 %v488, %v484
  %v520 = vpack.c.bf16 %v489, %v485
  %v521 = vpack.c.bf16 %v490, %v486
  %v522 = vld [vmem:[%s7] sm:$0xff]
  %v523 = vld [vmem:[%s7 + $0x8] sm:$0xff]
  %v524 = vld [vmem:[%s7 + $0x10] sm:$0xff]
  %v525 = vld [vmem:[%s7 + $0x18] sm:$0xff]
  %v526 = vld [vmem:[%s7 + $0x20] sm:$0xff]
  %v527 = vld [vmem:[%s7 + $0x28] sm:$0xff]
  %v528 = vld [vmem:[%s7 + $0x30] sm:$0xff]
  %v529 = vld [vmem:[%s7 + $0x38] sm:$0xff]
  %v530 = vld [vmem:[%s7 + $0x40] sm:$0xff]
  %v531 = vld [vmem:[%s7 + $0x48] sm:$0xff]
  %533 = vset.pattern.permute.xlu0 0
  %534 = vperm.xlu0 %533, %v522
  %v535 = vpop.permute.xlu0 %534
  %538 = vset.pattern.permute.xlu0 0
  %539 = vperm.xlu0 %538, %v523
  %v540 = vpop.permute.xlu0 %539
  %543 = vset.pattern.permute.xlu0 0
  %544 = vperm.xlu0 %543, %v524
  %v545 = vpop.permute.xlu0 %544
  %548 = vset.pattern.permute.xlu0 0
  %549 = vperm.xlu0 %548, %v525
  %v550 = vpop.permute.xlu0 %549
  %553 = vset.pattern.permute.xlu0 0
  %554 = vperm.xlu0 %553, %v526
  %v555 = vpop.permute.xlu0 %554
  %558 = vset.pattern.permute.xlu0 0
  %559 = vperm.xlu0 %558, %v527
  %v560 = vpop.permute.xlu0 %559
  %563 = vset.pattern.permute.xlu0 0
  %564 = vperm.xlu0 %563, %v528
  %v565 = vpop.permute.xlu0 %564
  %568 = vset.pattern.permute.xlu0 0
  %569 = vperm.xlu0 %568, %v529
  %v570 = vpop.permute.xlu0 %569
  %573 = vset.pattern.permute.xlu0 0
  %574 = vperm.xlu0 %573, %v530
  %v575 = vpop.permute.xlu0 %574
  %578 = vset.pattern.permute.xlu0 0
  %579 = vperm.xlu0 %578, %v531
  %v580 = vpop.permute.xlu0 %579
  %vm582 = vcmask 523264
  %v584 = vsel %vm582, %v501, 0
  %v587 = vsel %vm582, %v502, 0
  %v590 = vsel %vm582, %v503, 0
  %v593 = vsel %vm582, %v504, 0
  %v596 = vsel %vm582, %v505, 0
  %598 = vmatprep.subr.bf16.mxu0 0
  %599 = vmatpush1.bf16.msra.mxu0 0
  %600 = vmatprep.subr.bf16.mxu0 0
  %601 = vmatpush1.bf16.msra.mxu0 0
  %602 = vmatprep.subr.bf16.mxu0 0
  %603 = vmatpush1.bf16.msra.mxu0 0
  %604 = vmatprep.subr.bf16.mxu0 0
  %605 = vmatpush1.bf16.msra.mxu0 0
  %606 = vmatprep.subr.bf16.mxu0 %v519
  %607 = vmatpush1.bf16.msra.mxu0 %v518
  %608 = vmatprep.subr.bf16.mxu0 %v515
  %609 = vmatpush1.bf16.msra.mxu0 %v514
  %610 = vmatprep.subr.bf16.mxu0 %v511
  %611 = vmatpush1.bf16.msra.mxu0 %v510
  %612 = vmatprep.subr.bf16.mxu0 %v507
  %613 = vmatpush1.bf16.msra.mxu0 %v506
  %614 = vmatprep.subr.bf16.mxu0 0
  %615 = vmatpush2.bf16.msra.mxu0 0
  %616 = vmatprep.subr.bf16.mxu0 0
  %617 = vmatpush2.bf16.msra.mxu0 0
  %618 = vmatprep.subr.bf16.mxu0 0
  %619 = vmatpush2.bf16.msra.mxu0 0
  %620 = vmatprep.subr.bf16.mxu0 0
  %621 = vmatpush2.bf16.msra.mxu0 0
  %622 = vmatprep.subr.bf16.mxu0 0
  %623 = vmatpush2.bf16.msra.mxu0 0
  %624 = vmatprep.subr.bf16.mxu0 0
  %625 = vmatpush2.bf16.msra.mxu0 0
  %626 = vmatprep.subr.bf16.mxu0 0
  %627 = vmatpush2.bf16.msra.mxu0 0
  %628 = vmatprep.subr.bf16.mxu0 0
  %629 = vmatpush2.bf16.msra.mxu0 0
  %630 = vmatprep.mubr.bf16.mxu0 0
  %631 = vmatmul.mubr.bf16.gmra.mxu0 %v584
  %v632 = vpop.f32.mrf.mxu0
  %v633 = vadd.f32 %v535, %v632
  %v634 = vpop.f32.mrf.mxu0
  %v635 = vadd.f32 %v535, %v634
  %v636 = vpop.f32.mrf.mxu0
  %v637 = vadd.f32 %v540, %v636
  %v638 = vpop.f32.mrf.mxu0
  %v639 = vadd.f32 %v540, %v638
  %640 = vmatprep.mubr.bf16.mxu0 0
  %641 = vmatmul.mubr.bf16.gmra.mxu0 %v587
  %v642 = vpop.f32.mrf.mxu0
  %v643 = vadd.f32 %v545, %v642
  %v644 = vpop.f32.mrf.mxu0
  %v645 = vadd.f32 %v545, %v644
  %v646 = vpop.f32.mrf.mxu0
  %v647 = vadd.f32 %v550, %v646
  %v648 = vpop.f32.mrf.mxu0
  %v649 = vadd.f32 %v550, %v648
  %650 = vmatprep.mubr.bf16.mxu0 0
  %651 = vmatmul.mubr.bf16.gmra.mxu0 %v590
  %v652 = vpop.f32.mrf.mxu0
  %v653 = vadd.f32 %v555, %v652
  %v654 = vpop.f32.mrf.mxu0
  %v655 = vadd.f32 %v555, %v654
  %v656 = vpop.f32.mrf.mxu0
  %v657 = vadd.f32 %v560, %v656
  %v658 = vpop.f32.mrf.mxu0
  %v659 = vadd.f32 %v560, %v658
  %660 = vmatprep.mubr.bf16.mxu0 0
  %661 = vmatmul.mubr.bf16.gmra.mxu0 %v593
  %v662 = vpop.f32.mrf.mxu0
  %v663 = vadd.f32 %v565, %v662
  %v664 = vpop.f32.mrf.mxu0
  %v665 = vadd.f32 %v565, %v664
  %v666 = vpop.f32.mrf.mxu0
  %v667 = vadd.f32 %v570, %v666
  %v668 = vpop.f32.mrf.mxu0
  %v669 = vadd.f32 %v570, %v668
  %670 = vmatprep.mubr.bf16.mxu0 0
  %671 = vmatmul.mubr.bf16.gmra.mxu0 %v596
  %v672 = vpop.f32.mrf.mxu0
  %v673 = vadd.f32 %v575, %v672
  %v674 = vpop.f32.mrf.mxu0
  %v675 = vadd.f32 %v575, %v674
  %v676 = vpop.f32.mrf.mxu0
  %v677 = vadd.f32 %v580, %v676
  %v678 = vpop.f32.mrf.mxu0
  %v679 = vadd.f32 %v580, %v678
  %680 = vdwg.mxu0
  %681 = vmatprep.subr.bf16.mxu0 0
  %682 = vmatpush1.bf16.msra.mxu0 0
  %683 = vmatprep.subr.bf16.mxu0 0
  %684 = vmatpush1.bf16.msra.mxu0 0
  %685 = vmatprep.subr.bf16.mxu0 0
  %686 = vmatpush1.bf16.msra.mxu0 0
  %687 = vmatprep.subr.bf16.mxu0 0
  %688 = vmatpush1.bf16.msra.mxu0 0
  %689 = vmatprep.subr.bf16.mxu0 %v521
  %690 = vmatpush1.bf16.msra.mxu0 %v520
  %691 = vmatprep.subr.bf16.mxu0 %v517
  %692 = vmatpush1.bf16.msra.mxu0 %v516
  %693 = vmatprep.subr.bf16.mxu0 %v513
  %694 = vmatpush1.bf16.msra.mxu0 %v512
  %695 = vmatprep.subr.bf16.mxu0 %v509
  %696 = vmatpush1.bf16.msra.mxu0 %v508
  %697 = vmatprep.subr.bf16.mxu0 0
  %698 = vmatpush2.bf16.msra.mxu0 0
  %699 = vmatprep.subr.bf16.mxu0 0
  %700 = vmatpush2.bf16.msra.mxu0 0
  %701 = vmatprep.subr.bf16.mxu0 0
  %702 = vmatpush2.bf16.msra.mxu0 0
  %703 = vmatprep.subr.bf16.mxu0 0
  %704 = vmatpush2.bf16.msra.mxu0 0
  %705 = vmatprep.subr.bf16.mxu0 0
  %706 = vmatpush2.bf16.msra.mxu0 0
  %707 = vmatprep.subr.bf16.mxu0 0
  %708 = vmatpush2.bf16.msra.mxu0 0
  %709 = vmatprep.subr.bf16.mxu0 0
  %710 = vmatpush2.bf16.msra.mxu0 0
  %711 = vmatprep.subr.bf16.mxu0 0
  %712 = vmatpush2.bf16.msra.mxu0 0
  %713 = vmatprep.mubr.bf16.mxu0 0
  %714 = vmatmul.mubr.bf16.gmra.mxu0 %v584
  %v715 = vpop.f32.mrf.mxu0
  %v716 = vadd.f32 %v535, %v715
  %v717 = vpop.f32.mrf.mxu0
  %v718 = vadd.f32 %v535, %v717
  %v719 = vpop.f32.mrf.mxu0
  %v720 = vadd.f32 %v540, %v719
  %v721 = vpop.f32.mrf.mxu0
  %v722 = vadd.f32 %v540, %v721
  %723 = vmatprep.mubr.bf16.mxu0 0
  %724 = vmatmul.mubr.bf16.gmra.mxu0 %v587
  %v725 = vpop.f32.mrf.mxu0
  %v726 = vadd.f32 %v545, %v725
  %v727 = vpop.f32.mrf.mxu0
  %v728 = vadd.f32 %v545, %v727
  %v729 = vpop.f32.mrf.mxu0
  %v730 = vadd.f32 %v550, %v729
  %v731 = vpop.f32.mrf.mxu0
  %v732 = vadd.f32 %v550, %v731
  %733 = vmatprep.mubr.bf16.mxu0 0
  %734 = vmatmul.mubr.bf16.gmra.mxu0 %v590
  %v735 = vpop.f32.mrf.mxu0
  %v736 = vadd.f32 %v555, %v735
  %v737 = vpop.f32.mrf.mxu0
  %v738 = vadd.f32 %v555, %v737
  %v739 = vpop.f32.mrf.mxu0
  %v740 = vadd.f32 %v560, %v739
  %v741 = vpop.f32.mrf.mxu0
  %v742 = vadd.f32 %v560, %v741
  %743 = vmatprep.mubr.bf16.mxu0 0
  %744 = vmatmul.mubr.bf16.gmra.mxu0 %v593
  %v745 = vpop.f32.mrf.mxu0
  %v746 = vadd.f32 %v565, %v745
  %v747 = vpop.f32.mrf.mxu0
  %v748 = vadd.f32 %v565, %v747
  %v749 = vpop.f32.mrf.mxu0
  %v750 = vadd.f32 %v570, %v749
  %v751 = vpop.f32.mrf.mxu0
  %v752 = vadd.f32 %v570, %v751
  %753 = vmatprep.mubr.bf16.mxu0 0
  %754 = vmatmul.mubr.bf16.gmra.mxu0 %v596
  %v755 = vpop.f32.mrf.mxu0
  %v756 = vadd.f32 %v575, %v755
  %v757 = vpop.f32.mrf.mxu0
  %v758 = vadd.f32 %v575, %v757
  %v759 = vpop.f32.mrf.mxu0
  %v760 = vadd.f32 %v580, %v759
  %v761 = vpop.f32.mrf.mxu0
  %v762 = vadd.f32 %v580, %v761
  %763 = vdwg.mxu0
  %v764 = vmax.f32 %v633, 0.0
  %v765 = vmax.f32 %v635, 0.0
  %v766 = vmax.f32 %v716, 0.0
  %v767 = vmax.f32 %v718, 0.0
  %v768 = vmax.f32 %v637, 0.0
  %v769 = vmax.f32 %v639, 0.0
  %v770 = vmax.f32 %v720, 0.0
  %v771 = vmax.f32 %v722, 0.0
  %v772 = vmax.f32 %v643, 0.0
  %v773 = vmax.f32 %v645, 0.0
  %v774 = vmax.f32 %v726, 0.0
  %v775 = vmax.f32 %v728, 0.0
  %v776 = vmax.f32 %v647, 0.0
  %v777 = vmax.f32 %v649, 0.0
  %v778 = vmax.f32 %v730, 0.0
  %v779 = vmax.f32 %v732, 0.0
  %v780 = vmax.f32 %v653, 0.0
  %v781 = vmax.f32 %v655, 0.0
  %v782 = vmax.f32 %v736, 0.0
  %v783 = vmax.f32 %v738, 0.0
  %v784 = vmax.f32 %v657, 0.0
  %v785 = vmax.f32 %v659, 0.0
  %v786 = vmax.f32 %v740, 0.0
  %v787 = vmax.f32 %v742, 0.0
  %v788 = vmax.f32 %v663, 0.0
  %v789 = vmax.f32 %v665, 0.0
  %v790 = vmax.f32 %v746, 0.0
  %v791 = vmax.f32 %v748, 0.0
  %v792 = vmax.f32 %v667, 0.0
  %v793 = vmax.f32 %v669, 0.0
  %v794 = vmax.f32 %v750, 0.0
  %v795 = vmax.f32 %v752, 0.0
  %v796 = vmax.f32 %v673, 0.0
  %v797 = vmax.f32 %v675, 0.0
  %v798 = vmax.f32 %v756, 0.0
  %v799 = vmax.f32 %v758, 0.0
  %v800 = vmax.f32 %v677, 0.0
  %v801 = vmax.f32 %v679, 0.0
  %v802 = vmax.f32 %v760, 0.0
  %v803 = vmax.f32 %v762, 0.0
  %v804 = vld [vmem:[%s1] sm:$0xff]
  %v805 = vld [vmem:[%s1 + $0x8] sm:$0xff]
  %v806 = vld [vmem:[%s8] sm:$0xf]
  %v807 = vpack.c.bf16 %v805, %v804
  %v808 = vpack.c.bf16 %v806, %v806
  %v809 = vld [vmem:[%s9] sm:$0x1]
  %v811 = vlaneseq
  %v812 = vshrl.u32 %v811, 7
  %v813 = vsub.s32 0, %v812
  %v814 = vrot.slane %v809, %v813
  %v817 = vsel %vm90, %v807, 0
  %v820 = vsel %vm97, %v808, 0
  %822 = vmatprep.subr.bf16.mxu0 0
  %823 = vmatpush1.bf16.msra.mxu0 0
  %824 = vmatprep.subr.bf16.mxu0 0
  %825 = vmatpush1.bf16.msra.mxu0 0
  %826 = vmatprep.subr.bf16.mxu0 0
  %827 = vmatpush1.bf16.msra.mxu0 0
  %828 = vmatprep.subr.bf16.mxu0 0
  %829 = vmatpush1.bf16.msra.mxu0 0
  %830 = vmatprep.subr.bf16.mxu0 0
  %831 = vmatpush1.bf16.msra.mxu0 0
  %832 = vmatprep.subr.bf16.mxu0 0
  %833 = vmatpush1.bf16.msra.mxu0 0
  %834 = vmatprep.subr.bf16.mxu0 0
  %835 = vmatpush1.bf16.msra.mxu0 0
  %836 = vmatprep.subr.bf16.mxu0 0
  %837 = vmatpush1.bf16.msra.mxu0 %v820
  %838 = vmatprep.subr.bf16.mxu0 0
  %839 = vmatpush2.bf16.msra.mxu0 0
  %840 = vmatprep.subr.bf16.mxu0 0
  %841 = vmatpush2.bf16.msra.mxu0 0
  %842 = vmatprep.subr.bf16.mxu0 0
  %843 = vmatpush2.bf16.msra.mxu0 0
  %844 = vmatprep.subr.bf16.mxu0 0
  %845 = vmatpush2.bf16.msra.mxu0 0
  %846 = vmatprep.subr.bf16.mxu0 0
  %847 = vmatpush2.bf16.msra.mxu0 0
  %848 = vmatprep.subr.bf16.mxu0 0
  %849 = vmatpush2.bf16.msra.mxu0 0
  %850 = vmatprep.subr.bf16.mxu0 0
  %851 = vmatpush2.bf16.msra.mxu0 0
  %852 = vmatprep.subr.bf16.mxu0 0
  %853 = vmatpush2.bf16.msra.mxu0 0
  %854 = vmatprep.mubr.bf16.mxu0 0
  %855 = vmatmul.mubr.bf16.gmra.mxu0 %v817
  %v856 = vpop.f32.mrf.mxu0
  %v857 = vadd.f32 %v814, %v856
  %v858 = vpop.f32.mrf.mxu0
  %v859 = vpop.f32.mrf.mxu0
  %v860 = vadd.f32 %v814, %v859
  %v861 = vpop.f32.mrf.mxu0
  %862 = vdwg.mxu0
  %v863 = vmax.f32 %v857, 0.0
  %v864 = vmax.f32 %v860, 0.0
  %v865 = vld [vmem:[%s10] sm:$0xff]
  %v866 = vld [vmem:[%s10 + $0x8] sm:$0xff]
  %v867 = vld [vmem:[%s10 + $0x10] sm:$0xff]
  %v868 = vld [vmem:[%s10 + $0x18] sm:$0xff]
  %v869 = vpack.c.bf16 %v864, %v863
  %v870 = vpack.c.bf16 %v866, %v865
  %v871 = vpack.c.bf16 %v868, %v867
  %v872 = vld [vmem:[%s11] sm:$0x1]
  %v874 = vlaneseq
  %v875 = vshrl.u32 %v874, 7
  %v876 = vsub.s32 0, %v875
  %v877 = vrot.slane %v872, %v876
  %v880 = vsel %vm300, %v869, 0
  %882 = vmatprep.subr.bf16.mxu0 0
  %883 = vmatpush1.bf16.msra.mxu0 0
  %884 = vmatprep.subr.bf16.mxu0 0
  %885 = vmatpush1.bf16.msra.mxu0 0
  %886 = vmatprep.subr.bf16.mxu0 0
  %887 = vmatpush1.bf16.msra.mxu0 0
  %888 = vmatprep.subr.bf16.mxu0 0
  %889 = vmatpush1.bf16.msra.mxu0 0
  %890 = vmatprep.subr.bf16.mxu0 0
  %891 = vmatpush1.bf16.msra.mxu0 0
  %892 = vmatprep.subr.bf16.mxu0 0
  %893 = vmatpush1.bf16.msra.mxu0 0
  %894 = vmatprep.subr.bf16.mxu0 0
  %895 = vmatpush1.bf16.msra.mxu0 %v871
  %896 = vmatprep.subr.bf16.mxu0 0
  %897 = vmatpush1.bf16.msra.mxu0 %v870
  %898 = vmatprep.subr.bf16.mxu0 0
  %899 = vmatpush2.bf16.msra.mxu0 0
  %900 = vmatprep.subr.bf16.mxu0 0
  %901 = vmatpush2.bf16.msra.mxu0 0
  %902 = vmatprep.subr.bf16.mxu0 0
  %903 = vmatpush2.bf16.msra.mxu0 0
  %904 = vmatprep.subr.bf16.mxu0 0
  %905 = vmatpush2.bf16.msra.mxu0 0
  %906 = vmatprep.subr.bf16.mxu0 0
  %907 = vmatpush2.bf16.msra.mxu0 0
  %908 = vmatprep.subr.bf16.mxu0 0
  %909 = vmatpush2.bf16.msra.mxu0 0
  %910 = vmatprep.subr.bf16.mxu0 0
  %911 = vmatpush2.bf16.msra.mxu0 0
  %912 = vmatprep.subr.bf16.mxu0 0
  %913 = vmatpush2.bf16.msra.mxu0 0
  %914 = vmatprep.mubr.bf16.mxu0 0
  %915 = vmatmul.mubr.bf16.gmra.mxu0 %v880
  %v916 = vpop.f32.mrf.mxu0
  %v917 = vadd.f32 %v877, %v916
  %v918 = vpop.f32.mrf.mxu0
  %v919 = vpop.f32.mrf.mxu0
  %v920 = vadd.f32 %v877, %v919
  %v921 = vpop.f32.mrf.mxu0
  %922 = vdwg.mxu0
  %v923 = vmax.f32 %v917, 0.0
  %v924 = vmax.f32 %v920, 0.0
  %v925 = vld [vmem:[%s12] sm:$0xff]
  %v926 = vld [vmem:[%s12 + $0x8] sm:$0xff]
  %v927 = vld [vmem:[%s12 + $0x10] sm:$0xff]
  %v928 = vld [vmem:[%s12 + $0x18] sm:$0xff]
  %v929 = vld [vmem:[%s12 + $0x20] sm:$0xff]
  %v930 = vld [vmem:[%s12 + $0x28] sm:$0xff]
  %v931 = vld [vmem:[%s12 + $0x30] sm:$0xff]
  %v932 = vld [vmem:[%s12 + $0x38] sm:$0xff]
  %v933 = vpack.c.bf16 %v924, %v923
  %v934 = vpack.c.bf16 %v926, %v925
  %v935 = vpack.c.bf16 %v928, %v927
  %v936 = vpack.c.bf16 %v930, %v929
  %v937 = vpack.c.bf16 %v932, %v931
  %v938 = vld [vmem:[%s13] sm:$0x1]
  %v940 = vlaneseq
  %v941 = vshrl.u32 %v940, 7
  %v942 = vsub.s32 0, %v941
  %v943 = vrot.slane %v938, %v942
  %v946 = vsel %vm582, %v933, 0
  %948 = vmatprep.subr.bf16.mxu0 0
  %949 = vmatpush1.bf16.msra.mxu0 0
  %950 = vmatprep.subr.bf16.mxu0 0
  %951 = vmatpush1.bf16.msra.mxu0 0
  %952 = vmatprep.subr.bf16.mxu0 0
  %953 = vmatpush1.bf16.msra.mxu0 0
  %954 = vmatprep.subr.bf16.mxu0 0
  %955 = vmatpush1.bf16.msra.mxu0 0
  %956 = vmatprep.subr.bf16.mxu0 0
  %957 = vmatpush1.bf16.msra.mxu0 %v937
  %958 = vmatprep.subr.bf16.mxu0 0
  %959 = vmatpush1.bf16.msra.mxu0 %v936
  %960 = vmatprep.subr.bf16.mxu0 0
  %961 = vmatpush1.bf16.msra.mxu0 %v935
  %962 = vmatprep.subr.bf16.mxu0 0
  %963 = vmatpush1.bf16.msra.mxu0 %v934
  %964 = vmatprep.subr.bf16.mxu0 0
  %965 = vmatpush2.bf16.msra.mxu0 0
  %966 = vmatprep.subr.bf16.mxu0 0
  %967 = vmatpush2.bf16.msra.mxu0 0
  %968 = vmatprep.subr.bf16.mxu0 0
  %969 = vmatpush2.bf16.msra.mxu0 0
  %970 = vmatprep.subr.bf16.mxu0 0
  %971 = vmatpush2.bf16.msra.mxu0 0
  %972 = vmatprep.subr.bf16.mxu0 0
  %973 = vmatpush2.bf16.msra.mxu0 0
  %974 = vmatprep.subr.bf16.mxu0 0
  %975 = vmatpush2.bf16.msra.mxu0 0
  %976 = vmatprep.subr.bf16.mxu0 0
  %977 = vmatpush2.bf16.msra.mxu0 0
  %978 = vmatprep.subr.bf16.mxu0 0
  %979 = vmatpush2.bf16.msra.mxu0 0
  %980 = vmatprep.mubr.bf16.mxu0 0
  %981 = vmatmul.mubr.bf16.gmra.mxu0 %v946
  %v982 = vpop.f32.mrf.mxu0
  %v983 = vadd.f32 %v943, %v982
  %v984 = vpop.f32.mrf.mxu0
  %v985 = vpop.f32.mrf.mxu0
  %v986 = vadd.f32 %v943, %v985
  %v987 = vpop.f32.mrf.mxu0
  %988 = vdwg.mxu0
  %v989 = vmax.f32 %v983, 0.0
  %v990 = vmax.f32 %v986, 0.0
  %v991 = vpack.c.bf16 %v990, %v989
  %v992 = vpack.c.bf16 %v768, %v764
  %v993 = vpack.c.bf16 %v769, %v765
  %v994 = vpack.c.bf16 %v770, %v766
  %v995 = vpack.c.bf16 %v771, %v767
  %vm996 = vcmask 130048
  %v998 = vsel %vm996, %v991, 0
  %1000 = vmatprep.subr.bf16.mxu0 0
  %1001 = vmatpush1.bf16.msra.mxu0 0
  %1002 = vmatprep.subr.bf16.mxu0 0
  %1003 = vmatpush1.bf16.msra.mxu0 0
  %1004 = vmatprep.subr.bf16.mxu0 0
  %1005 = vmatpush1.bf16.msra.mxu0 0
  %1006 = vmatprep.subr.bf16.mxu0 0
  %1007 = vmatpush1.bf16.msra.mxu0 0
  %1008 = vmatprep.subr.bf16.mxu0 0
  %1009 = vmatpush1.bf16.msra.mxu0 0
  %1010 = vmatprep.subr.bf16.mxu0 0
  %1011 = vmatpush1.bf16.msra.mxu0 0
  %1012 = vmatprep.subr.bf16.mxu0 0
  %1013 = vmatpush1.bf16.msra.mxu0 0
  %1014 = vmatprep.subr.bf16.mxu0 %v993
  %1015 = vmatpush1.bf16.msra.mxu0 %v992
  %1016 = vmatprep.subr.bf16.mxu0 0
  %1017 = vmatpush2.bf16.msra.mxu0 0
  %1018 = vmatprep.subr.bf16.mxu0 0
  %1019 = vmatpush2.bf16.msra.mxu0 0
  %1020 = vmatprep.subr.bf16.mxu0 0
  %1021 = vmatpush2.bf16.msra.mxu0 0
  %1022 = vmatprep.subr.bf16.mxu0 0
  %1023 = vmatpush2.bf16.msra.mxu0 0
  %1024 = vmatprep.subr.bf16.mxu0 0
  %1025 = vmatpush2.bf16.msra.mxu0 0
  %1026 = vmatprep.subr.bf16.mxu0 0
  %1027 = vmatpush2.bf16.msra.mxu0 0
  %1028 = vmatprep.subr.bf16.mxu0 0
  %1029 = vmatpush2.bf16.msra.mxu0 0
  %1030 = vmatprep.subr.bf16.mxu0 0
  %1031 = vmatpush2.bf16.msra.mxu0 0
  %1032 = vmatprep.mubr.bf16.mxu0 0
  %1033 = vmatmul.mubr.bf16.gmra.mxu0 %v998
  %v1034 = vpop.f32.mrf.mxu0
  %v1035 = vadd.f32 0.0, %v1034
  %v1036 = vpop.f32.mrf.mxu0
  %v1037 = vadd.f32 0.0, %v1036
  %v1038 = vpop.f32.mrf.mxu0
  %v1039 = vadd.f32 0.0, %v1038
  %v1040 = vpop.f32.mrf.mxu0
  %v1041 = vadd.f32 0.0, %v1040
  %1042 = vdwg.mxu0
  %1043 = vmatprep.subr.bf16.mxu0 0
  %1044 = vmatpush1.bf16.msra.mxu0 0
  %1045 = vmatprep.subr.bf16.mxu0 0
  %1046 = vmatpush1.bf16.msra.mxu0 0
  %1047 = vmatprep.subr.bf16.mxu0 0
  %1048 = vmatpush1.bf16.msra.mxu0 0
  %1049 = vmatprep.subr.bf16.mxu0 0
  %1050 = vmatpush1.bf16.msra.mxu0 0
  %1051 = vmatprep.subr.bf16.mxu0 0
  %1052 = vmatpush1.bf16.msra.mxu0 0
  %1053 = vmatprep.subr.bf16.mxu0 0
  %1054 = vmatpush1.bf16.msra.mxu0 0
  %1055 = vmatprep.subr.bf16.mxu0 0
  %1056 = vmatpush1.bf16.msra.mxu0 0
  %1057 = vmatprep.subr.bf16.mxu0 %v995
  %1058 = vmatpush1.bf16.msra.mxu0 %v994
  %1059 = vmatprep.subr.bf16.mxu0 0
  %1060 = vmatpush2.bf16.msra.mxu0 0
  %1061 = vmatprep.subr.bf16.mxu0 0
  %1062 = vmatpush2.bf16.msra.mxu0 0
  %1063 = vmatprep.subr.bf16.mxu0 0
  %1064 = vmatpush2.bf16.msra.mxu0 0
  %1065 = vmatprep.subr.bf16.mxu0 0
  %1066 = vmatpush2.bf16.msra.mxu0 0
  %1067 = vmatprep.subr.bf16.mxu0 0
  %1068 = vmatpush2.bf16.msra.mxu0 0
  %1069 = vmatprep.subr.bf16.mxu0 0
  %1070 = vmatpush2.bf16.msra.mxu0 0
  %1071 = vmatprep.subr.bf16.mxu0 0
  %1072 = vmatpush2.bf16.msra.mxu0 0
  %1073 = vmatprep.subr.bf16.mxu0 0
  %1074 = vmatpush2.bf16.msra.mxu0 0
  %1075 = vmatprep.mubr.bf16.mxu0 0
  %1076 = vmatmul.mubr.bf16.gmra.mxu0 %v998
  %v1077 = vpop.f32.mrf.mxu0
  %v1078 = vadd.f32 0.0, %v1077
  %v1079 = vpop.f32.mrf.mxu0
  %v1080 = vadd.f32 0.0, %v1079
  %v1081 = vpop.f32.mrf.mxu0
  %v1082 = vadd.f32 0.0, %v1081
  %v1083 = vpop.f32.mrf.mxu0
  %v1084 = vadd.f32 0.0, %v1083
  %1085 = vdwg.mxu0
  %v1086 = vlaneseq
  %v1087 = vand.u32 %v1086, 127
  %v1088 = vadd.s32 %v1087, 128
  %v1089 = vadd.s32 %v1087, 256
  %v1090 = vadd.s32 %v1087, 384
  %v1091 = vlaneseq
  %v1092 = vshrl.u32 %v1091, 7
  %v1093 = vadd.s32 %v1092, 8
  %v1094 = vmul.u32 %v1092, 25
  %v1095 = vmul.u32 %v1093, 25
  %vm1096 = vcmp.ge.s32.totalorder %v1087, %v1094
  %vm1097 = vcmp.ge.s32.totalorder %v1088, %v1094
  %vm1098 = vcmp.ge.s32.totalorder %v1089, %v1094
  %vm1099 = vcmp.ge.s32.totalorder %v1090, %v1094
  %vm1100 = vcmp.ge.s32.totalorder %v1087, %v1095
  %vm1101 = vcmp.ge.s32.totalorder %v1088, %v1095
  %vm1102 = vcmp.ge.s32.totalorder %v1089, %v1095
  %vm1103 = vcmp.ge.s32.totalorder %v1090, %v1095
  %v1104 = vadd.s32 %v1094, 25
  %v1105 = vadd.s32 %v1095, 25
  %vm1106 = vcmp.lt.s32.totalorder %v1087, %v1104
  %vm1107 = vcmp.lt.s32.totalorder %v1088, %v1104
  %vm1108 = vcmp.lt.s32.totalorder %v1089, %v1104
  %vm1109 = vcmp.lt.s32.totalorder %v1090, %v1104
  %vm1110 = vcmp.lt.s32.totalorder %v1087, %v1105
  %vm1111 = vcmp.lt.s32.totalorder %v1088, %v1105
  %vm1112 = vcmp.lt.s32.totalorder %v1089, %v1105
  %vm1113 = vcmp.lt.s32.totalorder %v1090, %v1105
  %vm1114 = vmand %vm1096, %vm1106
  %vm1115 = vmand %vm1097, %vm1107
  %vm1116 = vmand %vm1098, %vm1108
  %vm1117 = vmand %vm1099, %vm1109
  %vm1118 = vmand %vm1100, %vm1110
  %vm1119 = vmand %vm1101, %vm1111
  %vm1120 = vmand %vm1102, %vm1112
  %vm1121 = vmand %vm1103, %vm1113
  %v1122 = vsel %vm1114, %v1035, -1e+30
  %v1123 = vsel %vm1115, %v1037, -1e+30
  %v1124 = vsel %vm1116, %v1078, -1e+30
  %v1125 = vsel %vm1117, %v1080, -1e+30
  %v1126 = vsel %vm1118, %v1039, -1e+30
  %v1127 = vsel %vm1119, %v1041, -1e+30
  %v1128 = vsel %vm1120, %v1082, -1e+30
  %v1129 = vsel %vm1121, %v1084, -1e+30
  %v1130 = vmax.f32 %v1122, %v1124
  %v1131 = vsel %vm996, %v1125, -inf
  %v1132 = vmax.f32 %v1123, %v1131
  %v1133 = vmax.f32 %v1130, %v1132
  %1134 = vmax.xlane.f32.xlu0 %v1133
  %v1135 = vpop.xlane.xlu0 %1134
  %v1136 = vmax.f32 %v1126, %v1128
  %v1137 = vsel %vm996, %v1129, -inf
  %v1138 = vmax.f32 %v1127, %v1137
  %v1139 = vmax.f32 %v1136, %v1138
  %1140 = vmax.xlane.f32.xlu0 %v1139
  %v1141 = vpop.xlane.xlu0 %1140
  %v1142 = vsub.f32 %v1122, %v1135
  %v1143 = vsub.f32 %v1123, %v1135
  %v1144 = vsub.f32 %v1124, %v1135
  %v1145 = vsub.f32 %v1125, %v1135
  %v1146 = vsub.f32 %v1126, %v1141
  %v1147 = vsub.f32 %v1127, %v1141
  %v1148 = vsub.f32 %v1128, %v1141
  %v1149 = vsub.f32 %v1129, %v1141
  %v1150 = vmul.f32 %v1142, 1.442695
  %v1151 = vpow.pop %v1150
  %v1152 = vmul.f32 %v1143, 1.442695
  %v1153 = vpow.pop %v1152
  %v1154 = vmul.f32 %v1144, 1.442695
  %v1155 = vpow.pop %v1154
  %v1156 = vmul.f32 %v1145, 1.442695
  %v1157 = vpow.pop %v1156
  %v1158 = vmul.f32 %v1146, 1.442695
  %v1159 = vpow.pop %v1158
  %v1160 = vmul.f32 %v1147, 1.442695
  %v1161 = vpow.pop %v1160
  %v1162 = vmul.f32 %v1148, 1.442695
  %v1163 = vpow.pop %v1162
  %v1164 = vmul.f32 %v1149, 1.442695
  %v1165 = vpow.pop %v1164
  %v1166 = vadd.f32 %v1151, %v1153
  %v1167 = vadd.f32 %v1166, %v1155
  %v1168 = vsel %vm996, %v1157, 0.0
  %v1169 = vadd.f32 %v1167, %v1168
  %1170 = vadd.xlane.f32.xlu0 %v1169
  %v1171 = vpop.xlane.xlu0 %1170
  %v1172 = vadd.f32 %v1159, %v1161
  %v1173 = vadd.f32 %v1172, %v1163
  %v1174 = vsel %vm996, %v1165, 0.0
  %v1175 = vadd.f32 %v1173, %v1174
  %1176 = vadd.xlane.f32.xlu0 %v1175
  %v1177 = vpop.xlane.xlu0 %1176
  %v1178 = vrcp.pop %v1171
  %v1179 = vrcp.pop %v1177
  %v1180 = vmul.f32 %v1151, %v1178
  %v1181 = vmul.f32 %v1153, %v1178
  %v1182 = vmul.f32 %v1155, %v1178
  %v1183 = vmul.f32 %v1157, %v1178
  %v1184 = vmul.f32 %v1159, %v1179
  %v1185 = vmul.f32 %v1161, %v1179
  %v1186 = vmul.f32 %v1163, %v1179
  %v1187 = vmul.f32 %v1165, %v1179
  %v1188 = vpack.c.bf16 %v1184, %v1180
  %v1189 = vpack.c.bf16 %v1185, %v1181
  %v1190 = vpack.c.bf16 %v1186, %v1182
  %v1191 = vpack.c.bf16 %v1187, %v1183
  %v1192 = vpack.c.bf16 %v776, %v772
  %v1193 = vpack.c.bf16 %v777, %v773
  %v1194 = vpack.c.bf16 %v778, %v774
  %v1195 = vpack.c.bf16 %v779, %v775
  %v1196 = vpack.c.bf16 %v784, %v780
  %v1197 = vpack.c.bf16 %v785, %v781
  %v1198 = vpack.c.bf16 %v786, %v782
  %v1199 = vpack.c.bf16 %v787, %v783
  %v1200 = vpack.c.bf16 %v792, %v788
  %v1201 = vpack.c.bf16 %v793, %v789
  %v1202 = vpack.c.bf16 %v794, %v790
  %v1203 = vpack.c.bf16 %v795, %v791
  %v1204 = vpack.c.bf16 %v800, %v796
  %v1205 = vpack.c.bf16 %v801, %v797
  %v1206 = vpack.c.bf16 %v802, %v798
  %v1207 = vpack.c.bf16 %v803, %v799
  %v1209 = vsel %vm996, %v1191, 0
  %v1212 = vsel %vm996, %v1195, 0
  %v1215 = vsel %vm996, %v1199, 0
  %v1218 = vsel %vm996, %v1203, 0
  %v1221 = vsel %vm996, %v1207, 0
  %1223 = vmatprep.subr.bf16.mxu0 0
  %1224 = vmatpush1.bf16.xpose.msra.mxu0 0
  %1225 = vmatprep.subr.bf16.mxu0 0
  %1226 = vmatpush1.bf16.xpose.msra.mxu0 0
  %1227 = vmatprep.subr.bf16.mxu0 0
  %1228 = vmatpush1.bf16.xpose.msra.mxu0 0
  %1229 = vmatprep.subr.bf16.mxu0 0
  %1230 = vmatpush1.bf16.xpose.msra.mxu0 0
  %1231 = vmatprep.subr.bf16.mxu0 %v1205
  %1232 = vmatpush1.bf16.xpose.msra.mxu0 %v1204
  %1233 = vmatprep.subr.bf16.mxu0 %v1201
  %1234 = vmatpush1.bf16.xpose.msra.mxu0 %v1200
  %1235 = vmatprep.subr.bf16.mxu0 %v1197
  %1236 = vmatpush1.bf16.xpose.msra.mxu0 %v1196
  %1237 = vmatprep.subr.bf16.mxu0 %v1193
  %1238 = vmatpush1.bf16.xpose.msra.mxu0 %v1192
  %1239 = vmatprep.subr.bf16.mxu0 0
  %1240 = vmatpush2.bf16.xpose.msra.mxu0 0
  %1241 = vmatprep.subr.bf16.mxu0 0
  %1242 = vmatpush2.bf16.xpose.msra.mxu0 0
  %1243 = vmatprep.subr.bf16.mxu0 0
  %1244 = vmatpush2.bf16.xpose.msra.mxu0 0
  %1245 = vmatprep.subr.bf16.mxu0 0
  %1246 = vmatpush2.bf16.xpose.msra.mxu0 0
  %1247 = vmatprep.subr.bf16.mxu0 0
  %1248 = vmatpush2.bf16.xpose.msra.mxu0 0
  %1249 = vmatprep.subr.bf16.mxu0 0
  %1250 = vmatpush2.bf16.xpose.msra.mxu0 0
  %1251 = vmatprep.subr.bf16.mxu0 0
  %1252 = vmatpush2.bf16.xpose.msra.mxu0 0
  %1253 = vmatprep.subr.bf16.mxu0 0
  %1254 = vmatpush2.bf16.xpose.msra.mxu0 0
  %1255 = vmatprep.mubr.bf16.mxu0 %v1189
  %1256 = vmatmul.mubr.bf16.gmra.mxu0 %v1188
  %v1257 = vpop.f32.mrf.mxu0
  %v1258 = vadd.f32 0.0, %v1257
  %v1259 = vpop.f32.mrf.mxu0
  %v1260 = vpop.f32.mrf.mxu0
  %v1261 = vadd.f32 0.0, %v1260
  %v1262 = vpop.f32.mrf.mxu0
  %1263 = vdwg.mxu0
  %1264 = vmatprep.subr.bf16.mxu0 0
  %1265 = vmatpush1.bf16.xpose.msra.mxu0 0
  %1266 = vmatprep.subr.bf16.mxu0 0
  %1267 = vmatpush1.bf16.xpose.msra.mxu0 0
  %1268 = vmatprep.subr.bf16.mxu0 0
  %1269 = vmatpush1.bf16.xpose.msra.mxu0 0
  %1270 = vmatprep.subr.bf16.mxu0 0
  %1271 = vmatpush1.bf16.xpose.msra.mxu0 0
  %1272 = vmatprep.subr.bf16.mxu0 %v1221
  %1273 = vmatpush1.bf16.xpose.msra.mxu0 %v1206
  %1274 = vmatprep.subr.bf16.mxu0 %v1218
  %1275 = vmatpush1.bf16.xpose.msra.mxu0 %v1202
  %1276 = vmatprep.subr.bf16.mxu0 %v1215
  %1277 = vmatpush1.bf16.xpose.msra.mxu0 %v1198
  %1278 = vmatprep.subr.bf16.mxu0 %v1212
  %1279 = vmatpush1.bf16.xpose.msra.mxu0 %v1194
  %1280 = vmatprep.subr.bf16.mxu0 0
  %1281 = vmatpush2.bf16.xpose.msra.mxu0 0
  %1282 = vmatprep.subr.bf16.mxu0 0
  %1283 = vmatpush2.bf16.xpose.msra.mxu0 0
  %1284 = vmatprep.subr.bf16.mxu0 0
  %1285 = vmatpush2.bf16.xpose.msra.mxu0 0
  %1286 = vmatprep.subr.bf16.mxu0 0
  %1287 = vmatpush2.bf16.xpose.msra.mxu0 0
  %1288 = vmatprep.subr.bf16.mxu0 0
  %1289 = vmatpush2.bf16.xpose.msra.mxu0 0
  %1290 = vmatprep.subr.bf16.mxu0 0
  %1291 = vmatpush2.bf16.xpose.msra.mxu0 0
  %1292 = vmatprep.subr.bf16.mxu0 0
  %1293 = vmatpush2.bf16.xpose.msra.mxu0 0
  %1294 = vmatprep.subr.bf16.mxu0 0
  %1295 = vmatpush2.bf16.xpose.msra.mxu0 0
  %1296 = vmatprep.mubr.bf16.mxu0 %v1209
  %1297 = vmatmul.mubr.bf16.gmra.mxu0 %v1190
  %v1298 = vpop.f32.mrf.mxu0
  %v1299 = vadd.f32 %v1258, %v1298
  %v1300 = vpop.f32.mrf.mxu0
  %v1301 = vpop.f32.mrf.mxu0
  %v1302 = vadd.f32 %v1261, %v1301
  %v1303 = vpop.f32.mrf.mxu0
  %1304 = vdwg.mxu0
  %v1305 = vadd.f32 %v923, %v1299
  %v1306 = vadd.f32 %v924, %v1302
  %1307 = vst.msk [vmem:[%s14] sm:$0xff] %vm582, %v1305
  %1308 = vst.msk [vmem:[%s14 + $0x8] sm:$0xff] %vm582, %v1306
  // Predicated region
  $region58: #{pstin_forward.2} parent=0 // pred_check
    _
  $region59: #{pstin_forward.2} parent=0 // pred_check_branch
    %1310 = sbr.rel (0) target = $region61
  $region60: #{pstin_forward.2} parent=0 // pred_region
    _
  $region61: #{pstin_forward.2} parent=0 // pred_fallthru
    _
  // Predicated region
  $region62: #{pstin_forward.2} parent=0 // pred_check
    _
  $region63: #{pstin_forward.2} parent=0 // pred_check_branch
    %1312 = sbr.rel (0) target = $region65
  $region64: #{pstin_forward.2} parent=0 // pred_region
    _
  $region65: #{pstin_forward.2} parent=0 // pred_fallthru
    _

</llo_original>
